<compile_context>
chip_gen: v7x
topology: tpu7x:2x2x1
jax: 0.10.0
libtpu: 0.0.40
codegen_flags: <defaults>
</compile_context>

<pallas_src>
import math
from functools import partial

import jax
import jax.numpy as jnp
from jax import lax
from jax.experimental import pallas as pl
from jax.experimental.pallas import tpu as pltpu

_NEG_BIG = -1e9                      # bias for padded logit columns -> exp() underflows to 0
_SQRT_2_OVER_PI = math.sqrt(2.0 / math.pi)
_LANE = 128
_SUBLANE_BF16 = 16                   # bf16 packs 16 sublanes per vreg tile


def _round_up(n, m):
    return ((n + m - 1) // m) * m


def _gelu_tanh(x):
    # tanh-approximate GELU: 0.5*x*(1 + tanh(sqrt(2/pi)*(x + 0.044715*x^3))).
    # Uses the EUP tanh slot instead of lax.erf's long f32 VALU polynomial.
    # TODO(synk): deviates from PyTorch's exact erf GELU by up to ~1e-3 per element.
    return 0.5 * x * (1.0 + jnp.tanh(_SQRT_2_OVER_PI * (x + 0.044715 * x * x * x)))


def mlp_kernel(x_ref,
               w1_ref, b1_ref, w2_ref, b2_ref, w3_ref, b3_ref,
               w4_ref, b4_ref, w5_ref, b5_ref,
               out_ref):
    # BN already folded into wN/bN. x and all weights arrive in bf16 (MXU-native);
    # elementwise math (GELU, softmax) stays f32; activations are cast to bf16 only
    # at the dot operands (preferred_element_type=f32 accumulation).
    def layer(h_bf16, w_ref, b_ref):
        y = jnp.dot(h_bf16, w_ref[...],
                    preferred_element_type=jnp.float32) + b_ref[...]
        return _gelu_tanh(y)

    h = layer(x_ref[...], w1_ref, b1_ref)                 # x already bf16
    h = layer(h.astype(jnp.bfloat16), w2_ref, b2_ref)
    h = layer(h.astype(jnp.bfloat16), w3_ref, b3_ref)
    h = layer(h.astype(jnp.bfloat16), w4_ref, b4_ref)

    logits = jnp.dot(h.astype(jnp.bfloat16), w5_ref[...],
                     preferred_element_type=jnp.float32) + b5_ref[...]
    # softmax(dim=-1); padded columns carry a -1e9 bias so they contribute exactly 0.
    m = jnp.max(logits, axis=-1, keepdims=True)
    e = jnp.exp(logits - m)
    out_ref[...] = e * pl.reciprocal(jnp.sum(e, axis=-1, keepdims=True))


# ----------------------------------------------------------------------------- params

def xavier_uniform(key, fan_in, fan_out, dtype=jnp.float32):
    # torch.nn.init.xavier_uniform_ on a (out, in) weight -> returned here as (in, out)
    bound = math.sqrt(6.0 / (fan_in + fan_out))
    return jax.random.uniform(key, (fan_in, fan_out), dtype=dtype,
                              minval=-bound, maxval=bound)


def make_params(key, input_dim, label_cnt, dtype=jnp.float32):
    """Raw module parameters (matching the PyTorch init) + eval-mode BN stats."""
    dims = [input_dim, 128 * 8, 64 * 4, 32 * 4, 32 * 2, label_cnt]
    keys = jax.random.split(key, 5)
    params = {}
    eps = 1e-5
    for i in range(5):
        fan_in, fan_out = dims[i], dims[i + 1]
        params[f"w{i+1}"] = xavier_uniform(keys[i], fan_in, fan_out, dtype)
        params[f"b{i+1}"] = jnp.zeros((1, fan_out), dtype)
    # BatchNorm1d (eval mode): running_mean=0, running_var=1, gamma=1, beta=0
    for i in range(4):
        n = dims[i + 1]
        gamma = jnp.ones((1, n), dtype)
        beta = jnp.zeros((1, n), dtype)
        running_mean = jnp.zeros((1, n), dtype)
        running_var = jnp.ones((1, n), dtype)
        scale = gamma * lax.rsqrt(running_var + eps)
        shift = beta - running_mean * scale
        params[f"s{i+1}"] = scale
        params[f"t{i+1}"] = shift
    return params


def _pad_cols(a, n):
    return jnp.pad(a, ((0, 0), (0, n - a.shape[1]))) if a.shape[1] < n else a


def _pad_rows(a, n):
    return jnp.pad(a, ((0, n - a.shape[0]), (0, 0))) if a.shape[0] < n else a


def prepare_kernel_params(params, input_dim, label_cnt):
    """Fold eval-mode BN into the linears, pad narrow dims to 128 lanes, cast weights
    to bf16 (post-fold). Biases stay f32."""
    d_pad = _round_up(input_dim, _LANE)          # 784 -> 896 (lane-dense contraction)
    n4_pad = _LANE                               # layer-4 out 64 -> 128
    n5_pad = _round_up(label_cnt, _LANE)         # logits -> 128
    kp = {}
    for i in range(1, 5):
        w, b = params[f"w{i}"], params[f"b{i}"]
        s, t = params[f"s{i}"], params[f"t{i}"]  # (1, N) per-feature scale/shift
        w_eff = w * s                            # broadcast over output columns
        b_eff = b * s + t
        if i == 1:
            w_eff = _pad_rows(w_eff, d_pad)      # zero rows match zero-padded x cols
        if i == 4:
            w_eff = _pad_cols(w_eff, n4_pad)
            b_eff = _pad_cols(b_eff, n4_pad)
        kp[f"w{i}"] = w_eff.astype(jnp.bfloat16)
        kp[f"b{i}"] = b_eff.astype(jnp.float32)
    w5 = _pad_cols(_pad_rows(params["w5"], n4_pad), n5_pad)   # in 64->128, out->128
    b5 = params["b5"].astype(jnp.float32)
    if n5_pad > label_cnt:
        b5 = jnp.concatenate(
            [b5, jnp.full((1, n5_pad - label_cnt), _NEG_BIG, jnp.float32)], axis=1)
    kp["w5"] = w5.astype(jnp.bfloat16)
    kp["b5"] = b5
    return kp


# ---------------------------------------------------------------------------- forward

@partial(jax.jit, static_argnames=("label_cnt", "tb"))
def naive_linear_forward(x, kparams, label_cnt, tb=256):
    B, D = x.shape
    d_pad = kparams["w1"].shape[0]               # 128-lane-padded input dim
    n_out = kparams["w5"].shape[1]               # 128-lane-padded logits dim

    # --- batch tiling -------------------------------------------------------------
    # x enters the kernel as bf16, so batch tiles must be 16-sublane aligned.
    b_pad = _round_up(B, _SUBLANE_BF16)
    tb = min(tb, b_pad)
    # Guarantee >= 2 grid steps when the batch allows it, so the "parallel" batch axis
    # actually shards across v7x's 2 TensorCores (grid=(1,) would idle one TC).
    if b_pad // tb < 2:
        half = (b_pad // 2) // _SUBLANE_BF16 * _SUBLANE_BF16
        if half >= 128:                          # never drop below an MXU-native 128 rows
            tb = half
    b_pad = _round_up(b_pad, tb)
    grid = (b_pad // tb,)

    # Pad batch rows and the contraction dim, cast to bf16 in the wrapper (halves the
    # x HBM->VMEM DMA bytes and removes the per-step f32->bf16 convert pass).
    x = jnp.pad(x, ((0, b_pad - B), (0, d_pad - D))).astype(jnp.bfloat16)

    weights = [kparams[k] for k in
               ("w1", "b1", "w2", "b2", "w3", "b3", "w4", "b4", "w5", "b5")]

    def resident_spec(a):
        # Constant index_map -> no re-fetch across batch tiles (weights stay in VMEM).
        # (pl.Buffered(1) single-buffering skipped: bf16 weights total ~2.4 MB, so even
        #  double-buffered they are far inside the 32 MiB scoped limit on v7x.)
        return pl.BlockSpec(a.shape, lambda i: (0, 0))

    out = pl.pallas_call(
        mlp_kernel,
        out_shape=jax.ShapeDtypeStruct((b_pad, n_out), jnp.float32),
        grid=grid,
        in_specs=[pl.BlockSpec((tb, d_pad), lambda i: (i, 0))]
                 + [resident_spec(a) for a in weights],
        out_specs=pl.BlockSpec((tb, n_out), lambda i: (i, 0)),
        compiler_params=pltpu.CompilerParams(
            dimension_semantics=("parallel",),   # shard batch tiles across v7x's 2 TCs
            vmem_limit_bytes=32 << 20,           # fits v7x's 64 MiB physical VMEM
        ),
    )(x, *weights)
    return {"mnist_result": out[:B, :label_cnt]}


if __name__ == "__main__":
    input_dim = 784   # mnist_setting.input_dim_1 (28*28)
    label_cnt = 10    # mnist_setting.label_cnt_1
    batch = 8

    key = jax.random.PRNGKey(0)
    k_x, k_p = jax.random.split(key)
    x = jax.random.normal(k_x, (batch, input_dim), dtype=jnp.float32)

    raw_params = make_params(k_p, input_dim, label_cnt)
    kparams = prepare_kernel_params(raw_params, input_dim, label_cnt)

    out = naive_linear_forward(x, kparams, label_cnt)
    result = jax.block_until_ready(out["mnist_result"])

    assert result.shape == (batch, label_cnt)
    # probabilities sum to 1 along the last axis
    assert bool(jnp.all(jnp.abs(jnp.sum(result, axis=-1) - 1.0) < 1e-4))
    print("KERNEL_OK")
</pallas_src>

<mosaic_0001>
module attributes {stable_mosaic.version = 11 : i64} {
  func.func @mlp_kernel(%arg0: i32, %arg1: memref<16x896xbf16, #tpu.memory_space<vmem>>, %arg2: memref<896x1024xbf16, #tpu.memory_space<vmem>>, %arg3: memref<1x1024xf32, #tpu.memory_space<vmem>>, %arg4: memref<1024x256xbf16, #tpu.memory_space<vmem>>, %arg5: memref<1x256xf32, #tpu.memory_space<vmem>>, %arg6: memref<256x128xbf16, #tpu.memory_space<vmem>>, %arg7: memref<1x128xf32, #tpu.memory_space<vmem>>, %arg8: memref<128x128xbf16, #tpu.memory_space<vmem>>, %arg9: memref<1x128xf32, #tpu.memory_space<vmem>>, %arg10: memref<128x128xbf16, #tpu.memory_space<vmem>>, %arg11: memref<1x128xf32, #tpu.memory_space<vmem>>, %arg12: memref<16x128xf32, #tpu.memory_space<vmem>>) attributes {dimension_semantics = [#tpu.dimension_semantics<parallel>], iteration_bounds = array<i64: 1>, scalar_prefetch = 0 : i64, scratch_operands = 0 : i64, tpu.core_type = #tpu.core_type<tc>, window_params = [{transform_indices = @transform_0, window_bounds = array<i64: 16, 896>}, {pipeline_mode = #tpu.pipeline_mode<synchronous>, transform_indices = @transform_1, window_bounds = array<i64: 896, 1024>}, {pipeline_mode = #tpu.pipeline_mode<synchronous>, transform_indices = @transform_2, window_bounds = array<i64: 1, 1024>}, {pipeline_mode = #tpu.pipeline_mode<synchronous>, transform_indices = @transform_3, window_bounds = array<i64: 1024, 256>}, {pipeline_mode = #tpu.pipeline_mode<synchronous>, transform_indices = @transform_4, window_bounds = array<i64: 1, 256>}, {pipeline_mode = #tpu.pipeline_mode<synchronous>, transform_indices = @transform_5, window_bounds = array<i64: 256, 128>}, {pipeline_mode = #tpu.pipeline_mode<synchronous>, transform_indices = @transform_6, window_bounds = array<i64: 1, 128>}, {pipeline_mode = #tpu.pipeline_mode<synchronous>, transform_indices = @transform_7, window_bounds = array<i64: 128, 128>}, {pipeline_mode = #tpu.pipeline_mode<synchronous>, transform_indices = @transform_8, window_bounds = array<i64: 1, 128>}, {pipeline_mode = #tpu.pipeline_mode<synchronous>, transform_indices = @transform_9, window_bounds = array<i64: 128, 128>}, {pipeline_mode = #tpu.pipeline_mode<synchronous>, transform_indices = @transform_10, window_bounds = array<i64: 1, 128>}, {transform_indices = @transform_11, window_bounds = array<i64: 16, 128>}]} {
    %c0 = arith.constant 0 : index
    %c0_0 = arith.constant 0 : index
    %0 = vector.load %arg1[%c0, %c0_0] : memref<16x896xbf16, #tpu.memory_space<vmem>>, vector<16x896xbf16>
    %c0_1 = arith.constant 0 : index
    %c0_2 = arith.constant 0 : index
    %1 = vector.load %arg2[%c0_1, %c0_2] : memref<896x1024xbf16, #tpu.memory_space<vmem>>, vector<896x1024xbf16>
    %cst = arith.constant dense<0.000000e+00> : vector<16x1024xf32>
    %2 = tpu.matmul %0, %1, %cst {dimension_numbers = #tpu.dot_dimension_numbers<[1], [0], [0], [1], [0, 0, 1, 1], [], []>} : vector<16x896xbf16>, vector<896x1024xbf16>, vector<16x1024xf32> -> vector<16x1024xf32>
    %c0_3 = arith.constant 0 : index
    %c0_4 = arith.constant 0 : index
    %3 = vector.load %arg3[%c0_3, %c0_4] : memref<1x1024xf32, #tpu.memory_space<vmem>>, vector<1x1024xf32>
    %4 = vector.broadcast %3 : vector<1x1024xf32> to vector<16x1024xf32>
    %5 = arith.addf %2, %4 : vector<16x1024xf32>
    %cst_5 = arith.constant 5.000000e-01 : f32
    %6 = vector.broadcast %cst_5 : f32 to vector<16x1024xf32>
    %7 = arith.mulf %6, %5 : vector<16x1024xf32>
    %cst_6 = arith.constant 4.471500e-02 : f32
    %8 = vector.broadcast %cst_6 : f32 to vector<16x1024xf32>
    %9 = arith.mulf %8, %5 : vector<16x1024xf32>
    %10 = arith.mulf %9, %5 : vector<16x1024xf32>
    %11 = arith.mulf %10, %5 : vector<16x1024xf32>
    %12 = arith.addf %5, %11 : vector<16x1024xf32>
    %cst_7 = arith.constant 0.797884583 : f32
    %13 = vector.broadcast %cst_7 : f32 to vector<16x1024xf32>
    %14 = arith.mulf %13, %12 : vector<16x1024xf32>
    %15 = math.tanh %14 : vector<16x1024xf32>
    %cst_8 = arith.constant 1.000000e+00 : f32
    %16 = vector.broadcast %cst_8 : f32 to vector<16x1024xf32>
    %17 = arith.addf %16, %15 : vector<16x1024xf32>
    %18 = arith.mulf %7, %17 : vector<16x1024xf32>
    %19 = arith.truncf %18 : vector<16x1024xf32> to vector<16x1024xbf16>
    %c0_9 = arith.constant 0 : index
    %c0_10 = arith.constant 0 : index
    %20 = vector.load %arg4[%c0_9, %c0_10] : memref<1024x256xbf16, #tpu.memory_space<vmem>>, vector<1024x256xbf16>
    %cst_11 = arith.constant dense<0.000000e+00> : vector<16x256xf32>
    %21 = tpu.matmul %19, %20, %cst_11 {dimension_numbers = #tpu.dot_dimension_numbers<[1], [0], [0], [1], [0, 0, 1, 1], [], []>} : vector<16x1024xbf16>, vector<1024x256xbf16>, vector<16x256xf32> -> vector<16x256xf32>
    %c0_12 = arith.constant 0 : index
    %c0_13 = arith.constant 0 : index
    %22 = vector.load %arg5[%c0_12, %c0_13] : memref<1x256xf32, #tpu.memory_space<vmem>>, vector<1x256xf32>
    %23 = vector.broadcast %22 : vector<1x256xf32> to vector<16x256xf32>
    %24 = arith.addf %21, %23 : vector<16x256xf32>
    %cst_14 = arith.constant 5.000000e-01 : f32
    %25 = vector.broadcast %cst_14 : f32 to vector<16x256xf32>
    %26 = arith.mulf %25, %24 : vector<16x256xf32>
    %cst_15 = arith.constant 4.471500e-02 : f32
    %27 = vector.broadcast %cst_15 : f32 to vector<16x256xf32>
    %28 = arith.mulf %27, %24 : vector<16x256xf32>
    %29 = arith.mulf %28, %24 : vector<16x256xf32>
    %30 = arith.mulf %29, %24 : vector<16x256xf32>
    %31 = arith.addf %24, %30 : vector<16x256xf32>
    %cst_16 = arith.constant 0.797884583 : f32
    %32 = vector.broadcast %cst_16 : f32 to vector<16x256xf32>
    %33 = arith.mulf %32, %31 : vector<16x256xf32>
    %34 = math.tanh %33 : vector<16x256xf32>
    %cst_17 = arith.constant 1.000000e+00 : f32
    %35 = vector.broadcast %cst_17 : f32 to vector<16x256xf32>
    %36 = arith.addf %35, %34 : vector<16x256xf32>
    %37 = arith.mulf %26, %36 : vector<16x256xf32>
    %38 = arith.truncf %37 : vector<16x256xf32> to vector<16x256xbf16>
    %c0_18 = arith.constant 0 : index
    %c0_19 = arith.constant 0 : index
    %39 = vector.load %arg6[%c0_18, %c0_19] : memref<256x128xbf16, #tpu.memory_space<vmem>>, vector<256x128xbf16>
    %cst_20 = arith.constant dense<0.000000e+00> : vector<16x128xf32>
    %40 = tpu.matmul %38, %39, %cst_20 {dimension_numbers = #tpu.dot_dimension_numbers<[1], [0], [0], [1], [0, 0, 1, 1], [], []>} : vector<16x256xbf16>, vector<256x128xbf16>, vector<16x128xf32> -> vector<16x128xf32>
    %c0_21 = arith.constant 0 : index
    %c0_22 = arith.constant 0 : index
    %41 = vector.load %arg7[%c0_21, %c0_22] : memref<1x128xf32, #tpu.memory_space<vmem>>, vector<1x128xf32>
    %42 = vector.broadcast %41 : vector<1x128xf32> to vector<16x128xf32>
    %43 = arith.addf %40, %42 : vector<16x128xf32>
    %cst_23 = arith.constant 5.000000e-01 : f32
    %44 = vector.broadcast %cst_23 : f32 to vector<16x128xf32>
    %45 = arith.mulf %44, %43 : vector<16x128xf32>
    %cst_24 = arith.constant 4.471500e-02 : f32
    %46 = vector.broadcast %cst_24 : f32 to vector<16x128xf32>
    %47 = arith.mulf %46, %43 : vector<16x128xf32>
    %48 = arith.mulf %47, %43 : vector<16x128xf32>
    %49 = arith.mulf %48, %43 : vector<16x128xf32>
    %50 = arith.addf %43, %49 : vector<16x128xf32>
    %cst_25 = arith.constant 0.797884583 : f32
    %51 = vector.broadcast %cst_25 : f32 to vector<16x128xf32>
    %52 = arith.mulf %51, %50 : vector<16x128xf32>
    %53 = math.tanh %52 : vector<16x128xf32>
    %cst_26 = arith.constant 1.000000e+00 : f32
    %54 = vector.broadcast %cst_26 : f32 to vector<16x128xf32>
    %55 = arith.addf %54, %53 : vector<16x128xf32>
    %56 = arith.mulf %45, %55 : vector<16x128xf32>
    %57 = arith.truncf %56 : vector<16x128xf32> to vector<16x128xbf16>
    %c0_27 = arith.constant 0 : index
    %c0_28 = arith.constant 0 : index
    %58 = vector.load %arg8[%c0_27, %c0_28] : memref<128x128xbf16, #tpu.memory_space<vmem>>, vector<128x128xbf16>
    %cst_29 = arith.constant dense<0.000000e+00> : vector<16x128xf32>
    %59 = tpu.matmul %57, %58, %cst_29 {dimension_numbers = #tpu.dot_dimension_numbers<[1], [0], [0], [1], [0, 0, 1, 1], [], []>} : vector<16x128xbf16>, vector<128x128xbf16>, vector<16x128xf32> -> vector<16x128xf32>
    %c0_30 = arith.constant 0 : index
    %c0_31 = arith.constant 0 : index
    %60 = vector.load %arg9[%c0_30, %c0_31] : memref<1x128xf32, #tpu.memory_space<vmem>>, vector<1x128xf32>
    %61 = vector.broadcast %60 : vector<1x128xf32> to vector<16x128xf32>
    %62 = arith.addf %59, %61 : vector<16x128xf32>
    %cst_32 = arith.constant 5.000000e-01 : f32
    %63 = vector.broadcast %cst_32 : f32 to vector<16x128xf32>
    %64 = arith.mulf %63, %62 : vector<16x128xf32>
    %cst_33 = arith.constant 4.471500e-02 : f32
    %65 = vector.broadcast %cst_33 : f32 to vector<16x128xf32>
    %66 = arith.mulf %65, %62 : vector<16x128xf32>
    %67 = arith.mulf %66, %62 : vector<16x128xf32>
    %68 = arith.mulf %67, %62 : vector<16x128xf32>
    %69 = arith.addf %62, %68 : vector<16x128xf32>
    %cst_34 = arith.constant 0.797884583 : f32
    %70 = vector.broadcast %cst_34 : f32 to vector<16x128xf32>
    %71 = arith.mulf %70, %69 : vector<16x128xf32>
    %72 = math.tanh %71 : vector<16x128xf32>
    %cst_35 = arith.constant 1.000000e+00 : f32
    %73 = vector.broadcast %cst_35 : f32 to vector<16x128xf32>
    %74 = arith.addf %73, %72 : vector<16x128xf32>
    %75 = arith.mulf %64, %74 : vector<16x128xf32>
    %76 = arith.truncf %75 : vector<16x128xf32> to vector<16x128xbf16>
    %c0_36 = arith.constant 0 : index
    %c0_37 = arith.constant 0 : index
    %77 = vector.load %arg10[%c0_36, %c0_37] : memref<128x128xbf16, #tpu.memory_space<vmem>>, vector<128x128xbf16>
    %cst_38 = arith.constant dense<0.000000e+00> : vector<16x128xf32>
    %78 = tpu.matmul %76, %77, %cst_38 {dimension_numbers = #tpu.dot_dimension_numbers<[1], [0], [0], [1], [0, 0, 1, 1], [], []>} : vector<16x128xbf16>, vector<128x128xbf16>, vector<16x128xf32> -> vector<16x128xf32>
    %c0_39 = arith.constant 0 : index
    %c0_40 = arith.constant 0 : index
    %79 = vector.load %arg11[%c0_39, %c0_40] : memref<1x128xf32, #tpu.memory_space<vmem>>, vector<1x128xf32>
    %80 = vector.broadcast %79 : vector<1x128xf32> to vector<16x128xf32>
    %81 = arith.addf %78, %80 : vector<16x128xf32>
    %cst_41 = arith.constant dense<0xFF800000> : vector<16xf32>
    %82 = vector.multi_reduction <maximumf>, %81, %cst_41 [1] : vector<16x128xf32> to vector<16xf32>
    %83 = vector.shape_cast %82 : vector<16xf32> to vector<16x1xf32>
    %84 = vector.broadcast %83 : vector<16x1xf32> to vector<16x128xf32>
    %85 = arith.subf %81, %84 : vector<16x128xf32>
    %86 = math.exp %85 : vector<16x128xf32>
    %cst_42 = arith.constant dense<0.000000e+00> : vector<16xf32>
    %87 = vector.multi_reduction <add>, %86, %cst_42 [1] : vector<16x128xf32> to vector<16xf32>
    %88 = vector.shape_cast %87 : vector<16xf32> to vector<16x1xf32>
    %89 = tpu.reciprocal %88 : vector<16x1xf32> -> vector<16x1xf32>
    %90 = vector.broadcast %89 : vector<16x1xf32> to vector<16x128xf32>
    %91 = arith.mulf %86, %90 : vector<16x128xf32>
    %c0_43 = arith.constant 0 : index
    %c0_44 = arith.constant 0 : index
    %92 = vector.load %arg12[%c0_43, %c0_44] : memref<16x128xf32, #tpu.memory_space<vmem>>, vector<16x128xf32>
    tpu.vector_store %arg12[%c0_43, %c0_44], %91 {strides = array<i32>} : memref<16x128xf32, #tpu.memory_space<vmem>>, vector<16x128xf32>,
    return
  }
  func.func @transform_0(%arg0: i32) -> (i32, i32) {
    %c0_i32 = arith.constant 0 : i32
    %c0_i32_0 = arith.constant 0 : i32
    return %arg0, %c0_i32 : i32, i32
  }
  func.func @transform_1(%arg0: i32) -> (i32, i32) {
    %c0_i32 = arith.constant 0 : i32
    %c0_i32_0 = arith.constant 0 : i32
    %c0_i32_1 = arith.constant 0 : i32
    return %c0_i32, %c0_i32_0 : i32, i32
  }
  func.func @transform_2(%arg0: i32) -> (i32, i32) {
    %c0_i32 = arith.constant 0 : i32
    %c0_i32_0 = arith.constant 0 : i32
    %c0_i32_1 = arith.constant 0 : i32
    return %c0_i32, %c0_i32_0 : i32, i32
  }
  func.func @transform_3(%arg0: i32) -> (i32, i32) {
    %c0_i32 = arith.constant 0 : i32
    %c0_i32_0 = arith.constant 0 : i32
    %c0_i32_1 = arith.constant 0 : i32
    return %c0_i32, %c0_i32_0 : i32, i32
  }
  func.func @transform_4(%arg0: i32) -> (i32, i32) {
    %c0_i32 = arith.constant 0 : i32
    %c0_i32_0 = arith.constant 0 : i32
    %c0_i32_1 = arith.constant 0 : i32
    return %c0_i32, %c0_i32_0 : i32, i32
  }
  func.func @transform_5(%arg0: i32) -> (i32, i32) {
    %c0_i32 = arith.constant 0 : i32
    %c0_i32_0 = arith.constant 0 : i32
    %c0_i32_1 = arith.constant 0 : i32
    return %c0_i32, %c0_i32_0 : i32, i32
  }
  func.func @transform_6(%arg0: i32) -> (i32, i32) {
    %c0_i32 = arith.constant 0 : i32
    %c0_i32_0 = arith.constant 0 : i32
    %c0_i32_1 = arith.constant 0 : i32
    return %c0_i32, %c0_i32_0 : i32, i32
  }
  func.func @transform_7(%arg0: i32) -> (i32, i32) {
    %c0_i32 = arith.constant 0 : i32
    %c0_i32_0 = arith.constant 0 : i32
    %c0_i32_1 = arith.constant 0 : i32
    return %c0_i32, %c0_i32_0 : i32, i32
  }
  func.func @transform_8(%arg0: i32) -> (i32, i32) {
    %c0_i32 = arith.constant 0 : i32
    %c0_i32_0 = arith.constant 0 : i32
    %c0_i32_1 = arith.constant 0 : i32
    return %c0_i32, %c0_i32_0 : i32, i32
  }
  func.func @transform_9(%arg0: i32) -> (i32, i32) {
    %c0_i32 = arith.constant 0 : i32
    %c0_i32_0 = arith.constant 0 : i32
    %c0_i32_1 = arith.constant 0 : i32
    return %c0_i32, %c0_i32_0 : i32, i32
  }
  func.func @transform_10(%arg0: i32) -> (i32, i32) {
    %c0_i32 = arith.constant 0 : i32
    %c0_i32_0 = arith.constant 0 : i32
    %c0_i32_1 = arith.constant 0 : i32
    return %c0_i32, %c0_i32_0 : i32, i32
  }
  func.func @transform_11(%arg0: i32) -> (i32, i32) {
    %c0_i32 = arith.constant 0 : i32
    %c0_i32_0 = arith.constant 0 : i32
    return %arg0, %c0_i32 : i32, i32
  }
}

</mosaic_0001>

<llo_original>
// kernel: naive_linear_forward.1
$region0: #{naive_linear_forward.1}
  #allocation0 [shape = 'u32[]', space=smem, size = 0x4, offset = 0x4, fixed_abs, tag = 'smem constant byte address 0x4 - core index']
  #allocation1 [shape = 'u32[144,128]{1,0:T(1,128)}', space=vmem, size = 0x12000, scoped, tag = 'internal scratch']
  %s0 = inlined_call_operand.vmem [shape: bf16[16,896], index: 0, kind: input, shape index: {}]
  %s1 = inlined_call_operand.hbm [shape: bf16[896,1024], index: 1, kind: input, shape index: {}]
  %s2 = inlined_call_operand.hbm [shape: f32[1,1024], index: 2, kind: input, shape index: {}]
  %s3 = inlined_call_operand.hbm [shape: bf16[1024,256], index: 3, kind: input, shape index: {}]
  %s4 = inlined_call_operand.hbm [shape: f32[1,256], index: 4, kind: input, shape index: {}]
  %s5 = inlined_call_operand.hbm [shape: bf16[256,128], index: 5, kind: input, shape index: {}]
  %s6 = inlined_call_operand.hbm [shape: f32[1,128], index: 6, kind: input, shape index: {}]
  %s7 = inlined_call_operand.hbm [shape: bf16[128,128], index: 7, kind: input, shape index: {}]
  %s8 = inlined_call_operand.hbm [shape: f32[1,128], index: 8, kind: input, shape index: {}]
  %s9 = inlined_call_operand.hbm [shape: bf16[128,128], index: 9, kind: input, shape index: {}]
  %s10 = inlined_call_operand.hbm [shape: f32[1,128], index: 10, kind: input, shape index: {}]
  %s11 = inlined_call_operand.vmem [shape: f32[16,128], index: 11, kind: output, shape index: {}]
  %s12 = sld [smem:[#allocation0]]
  $region94: #{naive_linear_forward.1} parent=0
    _
  %s14 = ssub.s32 1, %s12
  %s15 = scalar_select 0, %s14, %s12
  $region1: #{naive_linear_forward.1} parent=0
    #allocation2 [shape = 'u8[1835008]{0}', space=vmem, size = 0x1c0000, scoped, tag = 'input window, operand 1, single buffered']
    #allocation3 [shape = 's32[1]{0}', space=sflag, size = 0x4, scoped, tag = 'scoped memory for naive_linear_forward.1']
    #allocation4 [shape = 'u8[4096]{0}', space=vmem, size = 0x1000, scoped, tag = 'input window, operand 2, single buffered']
    #allocation5 [shape = 's32[1]{0}', space=sflag, size = 0x4, scoped, tag = 'scoped memory for naive_linear_forward.1']
    #allocation6 [shape = 'u8[524288]{0}', space=vmem, size = 0x80000, scoped, tag = 'input window, operand 3, single buffered']
    #allocation7 [shape = 'u8[1024]{0}', space=vmem, size = 0x400, scoped, tag = 'input window, operand 4, single buffered']
    #allocation8 [shape = 's32[1]{0}', space=sflag, size = 0x4, scoped, tag = 'scoped memory for naive_linear_forward.1']
    #allocation9 [shape = 'u8[65536]{0}', space=vmem, size = 0x10000, scoped, tag = 'input window, operand 5, single buffered']
    #allocation10 [shape = 'u8[512]{0}', space=vmem, size = 0x400, scoped, tag = 'input window, operand 6, single buffered']
    #allocation11 [shape = 's32[1]{0}', space=sflag, size = 0x4, scoped, tag = 'scoped memory for naive_linear_forward.1']
    #allocation12 [shape = 'u8[32768]{0}', space=vmem, size = 0x8000, scoped, tag = 'input window, operand 7, single buffered']
    #allocation13 [shape = 'u8[512]{0}', space=vmem, size = 0x400, scoped, tag = 'input window, operand 8, single buffered']
    #allocation14 [shape = 's32[1]{0}', space=sflag, size = 0x4, scoped, tag = 'scoped memory for naive_linear_forward.1']
    #allocation15 [shape = 'u8[32768]{0}', space=vmem, size = 0x8000, scoped, tag = 'input window, operand 9, single buffered']
    #allocation16 [shape = 'u8[512]{0}', space=vmem, size = 0x400, scoped, tag = 'input window, operand 10, single buffered']
    #allocation17 [shape = 's32[1]{0}', space=sflag, size = 0x4, scoped, tag = 'scoped memory for naive_linear_forward.1']
    %16 = vsyncpa [#allocation3], 0
    %17 = vsyncpa [#allocation5], 0
    %18 = vsyncpa [#allocation8], 0
    %19 = vsyncpa [#allocation11], 0
    %20 = vsyncpa [#allocation14], 0
    %21 = vsyncpa [#allocation17], 0
    // Predicated region
    $region2: #{naive_linear_forward.1} parent=1 // pred_check
      _
    $region3: #{naive_linear_forward.1} parent=1 // pred_check_branch
      %23 = sbr.rel (0) target = $region5
    $region4: #{naive_linear_forward.1} parent=1 // pred_region
      _
    $region5: #{naive_linear_forward.1} parent=1 // pred_fallthru
      _
    // Predicated region
    $region6: #{naive_linear_forward.1} parent=1 // pred_check
      _
    $region7: #{naive_linear_forward.1} parent=1 // pred_check_branch
      %25 = sbr.rel (0) target = $region9
    $region8: #{naive_linear_forward.1} parent=1 // pred_region
      %s27 = ssub.s32 57344, 57344
      %28 = vsyncadd [#allocation3], %s27
      %s29 = sshll.u32 [#allocation2], 4
      %s30 = int_to_ptr.vmem [resolvable:$true] %s29
      %35 = dma.hbm_to_vmem [thread:$0]  %s1, 57344, %s30, [#allocation3], 512, 512, 32
    $region9: #{naive_linear_forward.1} parent=1 // pred_fallthru
      _
    // Predicated region
    $region10: #{naive_linear_forward.1} parent=1 // pred_check
      _
    $region11: #{naive_linear_forward.1} parent=1 // pred_check_branch
      %37 = sbr.rel (0) target = $region13
    $region12: #{naive_linear_forward.1} parent=1 // pred_region
      %s39 = ssub.s32 128, 128
      %40 = vsyncadd [#allocation5], %s39
      %s42 = sshll.u32 [#allocation4], 4
      %s43 = int_to_ptr.vmem [resolvable:$true] %s42
      %45 = dma.hbm_to_vmem [thread:$0]  %s2, 128, %s43, [#allocation5]
    $region13: #{naive_linear_forward.1} parent=1 // pred_fallthru
      _
    // Predicated region
    $region14: #{naive_linear_forward.1} parent=1 // pred_check
      _
    $region15: #{naive_linear_forward.1} parent=1 // pred_check_branch
      %47 = sbr.rel (0) target = $region17
    $region16: #{naive_linear_forward.1} parent=1 // pred_region
      %s49 = ssub.s32 16384, 16384
      %50 = vsyncadd [#allocation5], %s49
      %s51 = sshll.u32 [#allocation6], 4
      %s52 = int_to_ptr.vmem [resolvable:$true] %s51
      %57 = dma.hbm_to_vmem [thread:$0]  %s3, 16384, %s52, [#allocation5], 128, 128, 8
    $region17: #{naive_linear_forward.1} parent=1 // pred_fallthru
      _
    // Predicated region
    $region18: #{naive_linear_forward.1} parent=1 // pred_check
      _
    $region19: #{naive_linear_forward.1} parent=1 // pred_check_branch
      %59 = sbr.rel (0) target = $region21
    $region20: #{naive_linear_forward.1} parent=1 // pred_region
      %s61 = ssub.s32 32, 32
      %62 = vsyncadd [#allocation8], %s61
      %s64 = sshll.u32 [#allocation7], 4
      %s65 = int_to_ptr.vmem [resolvable:$true] %s64
      %67 = dma.hbm_to_vmem [thread:$0]  %s4, 32, %s65, [#allocation8]
    $region21: #{naive_linear_forward.1} parent=1 // pred_fallthru
      _
    // Predicated region
    $region22: #{naive_linear_forward.1} parent=1 // pred_check
      _
    $region23: #{naive_linear_forward.1} parent=1 // pred_check_branch
      %69 = sbr.rel (0) target = $region25
    $region24: #{naive_linear_forward.1} parent=1 // pred_region
      %s71 = ssub.s32 2048, 2048
      %72 = vsyncadd [#allocation8], %s71
      %s73 = sshll.u32 [#allocation9], 4
      %s74 = int_to_ptr.vmem [resolvable:$true] %s73
      %79 = dma.hbm_to_vmem [thread:$0]  %s5, 2048, %s74, [#allocation8], 64, 64, 4
    $region25: #{naive_linear_forward.1} parent=1 // pred_fallthru
      _
    // Predicated region
    $region26: #{naive_linear_forward.1} parent=1 // pred_check
      _
    $region27: #{naive_linear_forward.1} parent=1 // pred_check_branch
      %81 = sbr.rel (0) target = $region29
    $region28: #{naive_linear_forward.1} parent=1 // pred_region
      %s83 = ssub.s32 16, 16
      %84 = vsyncadd [#allocation11], %s83
      %s86 = sshll.u32 [#allocation10], 4
      %s87 = int_to_ptr.vmem [resolvable:$true] %s86
      %89 = dma.hbm_to_vmem [thread:$0]  %s6, 16, %s87, [#allocation11]
    $region29: #{naive_linear_forward.1} parent=1 // pred_fallthru
      _
    // Predicated region
    $region30: #{naive_linear_forward.1} parent=1 // pred_check
      _
    $region31: #{naive_linear_forward.1} parent=1 // pred_check_branch
      %91 = sbr.rel (0) target = $region33
    $region32: #{naive_linear_forward.1} parent=1 // pred_region
      %s93 = ssub.s32 1024, 1024
      %94 = vsyncadd [#allocation11], %s93
      %s95 = sshll.u32 [#allocation12], 4
      %s96 = int_to_ptr.vmem [resolvable:$true] %s95
      %101 = dma.hbm_to_vmem [thread:$0]  %s7, 1024, %s96, [#allocation11], 64, 64, 4
    $region33: #{naive_linear_forward.1} parent=1 // pred_fallthru
      _
    // Predicated region
    $region34: #{naive_linear_forward.1} parent=1 // pred_check
      _
    $region35: #{naive_linear_forward.1} parent=1 // pred_check_branch
      %103 = sbr.rel (0) target = $region37
    $region36: #{naive_linear_forward.1} parent=1 // pred_region
      %s105 = ssub.s32 16, 16
      %106 = vsyncadd [#allocation14], %s105
      %s108 = sshll.u32 [#allocation13], 4
      %s109 = int_to_ptr.vmem [resolvable:$true] %s108
      %111 = dma.hbm_to_vmem [thread:$0]  %s8, 16, %s109, [#allocation14]
    $region37: #{naive_linear_forward.1} parent=1 // pred_fallthru
      _
    // Predicated region
    $region38: #{naive_linear_forward.1} parent=1 // pred_check
      _
    $region39: #{naive_linear_forward.1} parent=1 // pred_check_branch
      %113 = sbr.rel (0) target = $region41
    $region40: #{naive_linear_forward.1} parent=1 // pred_region
      %s115 = ssub.s32 1024, 1024
      %116 = vsyncadd [#allocation14], %s115
      %s117 = sshll.u32 [#allocation15], 4
      %s118 = int_to_ptr.vmem [resolvable:$true] %s117
      %123 = dma.hbm_to_vmem [thread:$0]  %s9, 1024, %s118, [#allocation14], 64, 64, 4
    $region41: #{naive_linear_forward.1} parent=1 // pred_fallthru
      _
    // Predicated region
    $region42: #{naive_linear_forward.1} parent=1 // pred_check
      _
    $region43: #{naive_linear_forward.1} parent=1 // pred_check_branch
      %125 = sbr.rel (0) target = $region45
    $region44: #{naive_linear_forward.1} parent=1 // pred_region
      %s127 = ssub.s32 16, 16
      %128 = vsyncadd [#allocation17], %s127
      %s130 = sshll.u32 [#allocation16], 4
      %s131 = int_to_ptr.vmem [resolvable:$true] %s130
      %133 = dma.hbm_to_vmem [thread:$0]  %s10, 16, %s131, [#allocation17]
    $region45: #{naive_linear_forward.1} parent=1 // pred_fallthru
      _
    // Predicated region
    $region46: #{naive_linear_forward.1} parent=1 // pred_check
      _
    $region47: #{naive_linear_forward.1} parent=1 // pred_check_branch
      %135 = sbr.rel (0) target = $region49
    $region48: #{naive_linear_forward.1} parent=1 // pred_region
      %136 = dma.done [#allocation3], 57344
    $region49: #{naive_linear_forward.1} parent=1 // pred_fallthru
      _
    // Predicated region
    $region50: #{naive_linear_forward.1} parent=1 // pred_check
      _
    $region51: #{naive_linear_forward.1} parent=1 // pred_check_branch
      %138 = sbr.rel (0) target = $region53
    $region52: #{naive_linear_forward.1} parent=1 // pred_region
      %139 = dma.done [#allocation5], 128
    $region53: #{naive_linear_forward.1} parent=1 // pred_fallthru
      _
    // Predicated region
    $region54: #{naive_linear_forward.1} parent=1 // pred_check
      _
    $region55: #{naive_linear_forward.1} parent=1 // pred_check_branch
      %141 = sbr.rel (0) target = $region57
    $region56: #{naive_linear_forward.1} parent=1 // pred_region
      %142 = dma.done [#allocation5], 16384
    $region57: #{naive_linear_forward.1} parent=1 // pred_fallthru
      _
    // Predicated region
    $region58: #{naive_linear_forward.1} parent=1 // pred_check
      _
    $region59: #{naive_linear_forward.1} parent=1 // pred_check_branch
      %144 = sbr.rel (0) target = $region61
    $region60: #{naive_linear_forward.1} parent=1 // pred_region
      %145 = dma.done [#allocation8], 32
    $region61: #{naive_linear_forward.1} parent=1 // pred_fallthru
      _
    // Predicated region
    $region62: #{naive_linear_forward.1} parent=1 // pred_check
      _
    $region63: #{naive_linear_forward.1} parent=1 // pred_check_branch
      %147 = sbr.rel (0) target = $region65
    $region64: #{naive_linear_forward.1} parent=1 // pred_region
      %148 = dma.done [#allocation8], 2048
    $region65: #{naive_linear_forward.1} parent=1 // pred_fallthru
      _
    // Predicated region
    $region66: #{naive_linear_forward.1} parent=1 // pred_check
      _
    $region67: #{naive_linear_forward.1} parent=1 // pred_check_branch
      %150 = sbr.rel (0) target = $region69
    $region68: #{naive_linear_forward.1} parent=1 // pred_region
      %151 = dma.done [#allocation11], 16
    $region69: #{naive_linear_forward.1} parent=1 // pred_fallthru
      _
    // Predicated region
    $region70: #{naive_linear_forward.1} parent=1 // pred_check
      _
    $region71: #{naive_linear_forward.1} parent=1 // pred_check_branch
      %153 = sbr.rel (0) target = $region73
    $region72: #{naive_linear_forward.1} parent=1 // pred_region
      %154 = dma.done [#allocation11], 1024
    $region73: #{naive_linear_forward.1} parent=1 // pred_fallthru
      _
    // Predicated region
    $region74: #{naive_linear_forward.1} parent=1 // pred_check
      _
    $region75: #{naive_linear_forward.1} parent=1 // pred_check_branch
      %156 = sbr.rel (0) target = $region77
    $region76: #{naive_linear_forward.1} parent=1 // pred_region
      %157 = dma.done [#allocation14], 16
    $region77: #{naive_linear_forward.1} parent=1 // pred_fallthru
      _
    // Predicated region
    $region78: #{naive_linear_forward.1} parent=1 // pred_check
      _
    $region79: #{naive_linear_forward.1} parent=1 // pred_check_branch
      %159 = sbr.rel (0) target = $region81
    $region80: #{naive_linear_forward.1} parent=1 // pred_region
      %160 = dma.done [#allocation14], 1024
    $region81: #{naive_linear_forward.1} parent=1 // pred_fallthru
      _
    // Predicated region
    $region82: #{naive_linear_forward.1} parent=1 // pred_check
      _
    $region83: #{naive_linear_forward.1} parent=1 // pred_check_branch
      %162 = sbr.rel (0) target = $region85
    $region84: #{naive_linear_forward.1} parent=1 // pred_region
      %163 = dma.done [#allocation17], 16
    $region85: #{naive_linear_forward.1} parent=1 // pred_fallthru
      _
    %v165 = vld [vmem:[%s0] sm:$0xff]
    %v166 = vld [vmem:[%s0 + $0x8] sm:$0xff]
    %v167 = vld [vmem:[%s0 + $0x10] sm:$0xff]
    %v168 = vld [vmem:[%s0 + $0x18] sm:$0xf]
    %v169 = vld [vmem:[%s0 + $0x1c] sm:$0xff]
    %v170 = vld [vmem:[%s0 + $0x24] sm:$0xff]
    %v171 = vld [vmem:[%s0 + $0x2c] sm:$0xff]
    %v172 = vld [vmem:[%s0 + $0x34] sm:$0xf]
    %v173 = vld [vmem:[#allocation2] sm:$0xff]
    %v174 = vld [vmem:[#allocation2 + $0x8] sm:$0xff]
    %v175 = vld [vmem:[#allocation2 + $0x10] sm:$0xff]
    %v176 = vld [vmem:[#allocation2 + $0x18] sm:$0xff]
    %v177 = vld [vmem:[#allocation2 + $0x20] sm:$0xff]
    %v178 = vld [vmem:[#allocation2 + $0x28] sm:$0xff]
    %v179 = vld [vmem:[#allocation2 + $0x30] sm:$0xff]
    %v180 = vld [vmem:[#allocation2 + $0x38] sm:$0xff]
    %v181 = vld [vmem:[#allocation2 + $0x40] sm:$0xff]
    %v182 = vld [vmem:[#allocation2 + $0x48] sm:$0xff]
    %v183 = vld [vmem:[#allocation2 + $0x50] sm:$0xff]
    %v184 = vld [vmem:[#allocation2 + $0x58] sm:$0xff]
    %v185 = vld [vmem:[#allocation2 + $0x60] sm:$0xff]
    %v186 = vld [vmem:[#allocation2 + $0x68] sm:$0xff]
    %v187 = vld [vmem:[#allocation2 + $0x70] sm:$0xff]
    %v188 = vld [vmem:[#allocation2 + $0x78] sm:$0xff]
    %v189 = vld [vmem:[#allocation2 + $0x80] sm:$0xff]
    %v190 = vld [vmem:[#allocation2 + $0x88] sm:$0xff]
    %v191 = vld [vmem:[#allocation2 + $0x90] sm:$0xff]
    %v192 = vld [vmem:[#allocation2 + $0x98] sm:$0xff]
    %v193 = vld [vmem:[#allocation2 + $0xa0] sm:$0xff]
    %v194 = vld [vmem:[#allocation2 + $0xa8] sm:$0xff]
    %v195 = vld [vmem:[#allocation2 + $0xb0] sm:$0xff]
    %v196 = vld [vmem:[#allocation2 + $0xb8] sm:$0xff]
    %v197 = vld [vmem:[#allocation2 + $0xc0] sm:$0xff]
    %v198 = vld [vmem:[#allocation2 + $0xc8] sm:$0xff]
    %v199 = vld [vmem:[#allocation2 + $0xd0] sm:$0xff]
    %v200 = vld [vmem:[#allocation2 + $0xd8] sm:$0xff]
    %v201 = vld [vmem:[#allocation2 + $0xe0] sm:$0xff]
    %v202 = vld [vmem:[#allocation2 + $0xe8] sm:$0xff]
    %v203 = vld [vmem:[#allocation2 + $0xf0] sm:$0xff]
    %v204 = vld [vmem:[#allocation2 + $0xf8] sm:$0xff]
    %v205 = vld [vmem:[#allocation2 + $0x100] sm:$0xff]
    %v206 = vld [vmem:[#allocation2 + $0x108] sm:$0xff]
    %v207 = vld [vmem:[#allocation2 + $0x110] sm:$0xff]
    %v208 = vld [vmem:[#allocation2 + $0x118] sm:$0xff]
    %v209 = vld [vmem:[#allocation2 + $0x120] sm:$0xff]
    %v210 = vld [vmem:[#allocation2 + $0x128] sm:$0xff]
    %v211 = vld [vmem:[#allocation2 + $0x130] sm:$0xff]
    %v212 = vld [vmem:[#allocation2 + $0x138] sm:$0xff]
    %v213 = vld [vmem:[#allocation2 + $0x140] sm:$0xff]
    %v214 = vld [vmem:[#allocation2 + $0x148] sm:$0xff]
    %v215 = vld [vmem:[#allocation2 + $0x150] sm:$0xff]
    %v216 = vld [vmem:[#allocation2 + $0x158] sm:$0xff]
    %v217 = vld [vmem:[#allocation2 + $0x160] sm:$0xff]
    %v218 = vld [vmem:[#allocation2 + $0x168] sm:$0xff]
    %v219 = vld [vmem:[#allocation2 + $0x170] sm:$0xff]
    %v220 = vld [vmem:[#allocation2 + $0x178] sm:$0xff]
    %v221 = vld [vmem:[#allocation2 + $0x180] sm:$0xff]
    %v222 = vld [vmem:[#allocation2 + $0x188] sm:$0xff]
    %v223 = vld [vmem:[#allocation2 + $0x190] sm:$0xff]
    %v224 = vld [vmem:[#allocation2 + $0x198] sm:$0xff]
    %v225 = vld [vmem:[#allocation2 + $0x1a0] sm:$0xff]
    %v226 = vld [vmem:[#allocation2 + $0x1a8] sm:$0xff]
    %v227 = vld [vmem:[#allocation2 + $0x1b0] sm:$0xff]
    %v228 = vld [vmem:[#allocation2 + $0x1b8] sm:$0xff]
    %v229 = vld [vmem:[#allocation2 + $0x1c0] sm:$0xff]
    %v230 = vld [vmem:[#allocation2 + $0x1c8] sm:$0xff]
    %v231 = vld [vmem:[#allocation2 + $0x1d0] sm:$0xff]
    %v232 = vld [vmem:[#allocation2 + $0x1d8] sm:$0xff]
    %v233 = vld [vmem:[#allocation2 + $0x1e0] sm:$0xff]
    %v234 = vld [vmem:[#allocation2 + $0x1e8] sm:$0xff]
    %v235 = vld [vmem:[#allocation2 + $0x1f0] sm:$0xff]
    %v236 = vld [vmem:[#allocation2 + $0x1f8] sm:$0xff]
    %v237 = vld [vmem:[#allocation2 + $0x200] sm:$0xff]
    %v238 = vld [vmem:[#allocation2 + $0x208] sm:$0xff]
    %v239 = vld [vmem:[#allocation2 + $0x210] sm:$0xff]
    %v240 = vld [vmem:[#allocation2 + $0x218] sm:$0xff]
    %v241 = vld [vmem:[#allocation2 + $0x220] sm:$0xff]
    %v242 = vld [vmem:[#allocation2 + $0x228] sm:$0xff]
    %v243 = vld [vmem:[#allocation2 + $0x230] sm:$0xff]
    %v244 = vld [vmem:[#allocation2 + $0x238] sm:$0xff]
    %v245 = vld [vmem:[#allocation2 + $0x240] sm:$0xff]
    %v246 = vld [vmem:[#allocation2 + $0x248] sm:$0xff]
    %v247 = vld [vmem:[#allocation2 + $0x250] sm:$0xff]
    %v248 = vld [vmem:[#allocation2 + $0x258] sm:$0xff]
    %v249 = vld [vmem:[#allocation2 + $0x260] sm:$0xff]
    %v250 = vld [vmem:[#allocation2 + $0x268] sm:$0xff]
    %v251 = vld [vmem:[#allocation2 + $0x270] sm:$0xff]
    %v252 = vld [vmem:[#allocation2 + $0x278] sm:$0xff]
    %v253 = vld [vmem:[#allocation2 + $0x280] sm:$0xff]
    %v254 = vld [vmem:[#allocation2 + $0x288] sm:$0xff]
    %v255 = vld [vmem:[#allocation2 + $0x290] sm:$0xff]
    %v256 = vld [vmem:[#allocation2 + $0x298] sm:$0xff]
    %v257 = vld [vmem:[#allocation2 + $0x2a0] sm:$0xff]
    %v258 = vld [vmem:[#allocation2 + $0x2a8] sm:$0xff]
    %v259 = vld [vmem:[#allocation2 + $0x2b0] sm:$0xff]
    %v260 = vld [vmem:[#allocation2 + $0x2b8] sm:$0xff]
    %v261 = vld [vmem:[#allocation2 + $0x2c0] sm:$0xff]
    %v262 = vld [vmem:[#allocation2 + $0x2c8] sm:$0xff]
    %v263 = vld [vmem:[#allocation2 + $0x2d0] sm:$0xff]
    %v264 = vld [vmem:[#allocation2 + $0x2d8] sm:$0xff]
    %v265 = vld [vmem:[#allocation2 + $0x2e0] sm:$0xff]
    %v266 = vld [vmem:[#allocation2 + $0x2e8] sm:$0xff]
    %v267 = vld [vmem:[#allocation2 + $0x2f0] sm:$0xff]
    %v268 = vld [vmem:[#allocation2 + $0x2f8] sm:$0xff]
    %v269 = vld [vmem:[#allocation2 + $0x300] sm:$0xff]
    %v270 = vld [vmem:[#allocation2 + $0x308] sm:$0xff]
    %v271 = vld [vmem:[#allocation2 + $0x310] sm:$0xff]
    %v272 = vld [vmem:[#allocation2 + $0x318] sm:$0xff]
    %v273 = vld [vmem:[#allocation2 + $0x320] sm:$0xff]
    %v274 = vld [vmem:[#allocation2 + $0x328] sm:$0xff]
    %v275 = vld [vmem:[#allocation2 + $0x330] sm:$0xff]
    %v276 = vld [vmem:[#allocation2 + $0x338] sm:$0xff]
    %v277 = vld [vmem:[#allocation2 + $0x340] sm:$0xff]
    %v278 = vld [vmem:[#allocation2 + $0x348] sm:$0xff]
    %v279 = vld [vmem:[#allocation2 + $0x350] sm:$0xff]
    %v280 = vld [vmem:[#allocation2 + $0x358] sm:$0xff]
    %v281 = vld [vmem:[#allocation2 + $0x360] sm:$0xff]
    %v282 = vld [vmem:[#allocation2 + $0x368] sm:$0xff]
    %v283 = vld [vmem:[#allocation2 + $0x370] sm:$0xff]
    %v284 = vld [vmem:[#allocation2 + $0x378] sm:$0xff]
    %v285 = vld [vmem:[#allocation2 + $0x380] sm:$0xff]
    %v286 = vld [vmem:[#allocation2 + $0x388] sm:$0xff]
    %v287 = vld [vmem:[#allocation2 + $0x390] sm:$0xff]
    %v288 = vld [vmem:[#allocation2 + $0x398] sm:$0xff]
    %v289 = vld [vmem:[#allocation2 + $0x3a0] sm:$0xff]
    %v290 = vld [vmem:[#allocation2 + $0x3a8] sm:$0xff]
    %v291 = vld [vmem:[#allocation2 + $0x3b0] sm:$0xff]
    %v292 = vld [vmem:[#allocation2 + $0x3b8] sm:$0xff]
    %v293 = vld [vmem:[#allocation2 + $0x3c0] sm:$0xff]
    %v294 = vld [vmem:[#allocation2 + $0x3c8] sm:$0xff]
    %v295 = vld [vmem:[#allocation2 + $0x3d0] sm:$0xff]
    %v296 = vld [vmem:[#allocation2 + $0x3d8] sm:$0xff]
    %v297 = vld [vmem:[#allocation2 + $0x3e0] sm:$0xff]
    %v298 = vld [vmem:[#allocation2 + $0x3e8] sm:$0xff]
    %v299 = vld [vmem:[#allocation2 + $0x3f0] sm:$0xff]
    %v300 = vld [vmem:[#allocation2 + $0x3f8] sm:$0xff]
    %v301 = vld [vmem:[#allocation2 + $0x400] sm:$0xff]
    %v302 = vld [vmem:[#allocation2 + $0x408] sm:$0xff]
    %v303 = vld [vmem:[#allocation2 + $0x410] sm:$0xff]
    %v304 = vld [vmem:[#allocation2 + $0x418] sm:$0xff]
    %v305 = vld [vmem:[#allocation2 + $0x420] sm:$0xff]
    %v306 = vld [vmem:[#allocation2 + $0x428] sm:$0xff]
    %v307 = vld [vmem:[#allocation2 + $0x430] sm:$0xff]
    %v308 = vld [vmem:[#allocation2 + $0x438] sm:$0xff]
    %v309 = vld [vmem:[#allocation2 + $0x440] sm:$0xff]
    %v310 = vld [vmem:[#allocation2 + $0x448] sm:$0xff]
    %v311 = vld [vmem:[#allocation2 + $0x450] sm:$0xff]
    %v312 = vld [vmem:[#allocation2 + $0x458] sm:$0xff]
    %v313 = vld [vmem:[#allocation2 + $0x460] sm:$0xff]
    %v314 = vld [vmem:[#allocation2 + $0x468] sm:$0xff]
    %v315 = vld [vmem:[#allocation2 + $0x470] sm:$0xff]
    %v316 = vld [vmem:[#allocation2 + $0x478] sm:$0xff]
    %v317 = vld [vmem:[#allocation2 + $0x480] sm:$0xff]
    %v318 = vld [vmem:[#allocation2 + $0x488] sm:$0xff]
    %v319 = vld [vmem:[#allocation2 + $0x490] sm:$0xff]
    %v320 = vld [vmem:[#allocation2 + $0x498] sm:$0xff]
    %v321 = vld [vmem:[#allocation2 + $0x4a0] sm:$0xff]
    %v322 = vld [vmem:[#allocation2 + $0x4a8] sm:$0xff]
    %v323 = vld [vmem:[#allocation2 + $0x4b0] sm:$0xff]
    %v324 = vld [vmem:[#allocation2 + $0x4b8] sm:$0xff]
    %v325 = vld [vmem:[#allocation2 + $0x4c0] sm:$0xff]
    %v326 = vld [vmem:[#allocation2 + $0x4c8] sm:$0xff]
    %v327 = vld [vmem:[#allocation2 + $0x4d0] sm:$0xff]
    %v328 = vld [vmem:[#allocation2 + $0x4d8] sm:$0xff]
    %v329 = vld [vmem:[#allocation2 + $0x4e0] sm:$0xff]
    %v330 = vld [vmem:[#allocation2 + $0x4e8] sm:$0xff]
    %v331 = vld [vmem:[#allocation2 + $0x4f0] sm:$0xff]
    %v332 = vld [vmem:[#allocation2 + $0x4f8] sm:$0xff]
    %v333 = vld [vmem:[#allocation2 + $0x500] sm:$0xff]
    %v334 = vld [vmem:[#allocation2 + $0x508] sm:$0xff]
    %v335 = vld [vmem:[#allocation2 + $0x510] sm:$0xff]
    %v336 = vld [vmem:[#allocation2 + $0x518] sm:$0xff]
    %v337 = vld [vmem:[#allocation2 + $0x520] sm:$0xff]
    %v338 = vld [vmem:[#allocation2 + $0x528] sm:$0xff]
    %v339 = vld [vmem:[#allocation2 + $0x530] sm:$0xff]
    %v340 = vld [vmem:[#allocation2 + $0x538] sm:$0xff]
    %v341 = vld [vmem:[#allocation2 + $0x540] sm:$0xff]
    %v342 = vld [vmem:[#allocation2 + $0x548] sm:$0xff]
    %v343 = vld [vmem:[#allocation2 + $0x550] sm:$0xff]
    %v344 = vld [vmem:[#allocation2 + $0x558] sm:$0xff]
    %v345 = vld [vmem:[#allocation2 + $0x560] sm:$0xff]
    %v346 = vld [vmem:[#allocation2 + $0x568] sm:$0xff]
    %v347 = vld [vmem:[#allocation2 + $0x570] sm:$0xff]
    %v348 = vld [vmem:[#allocation2 + $0x578] sm:$0xff]
    %v349 = vld [vmem:[#allocation2 + $0x580] sm:$0xff]
    %v350 = vld [vmem:[#allocation2 + $0x588] sm:$0xff]
    %v351 = vld [vmem:[#allocation2 + $0x590] sm:$0xff]
    %v352 = vld [vmem:[#allocation2 + $0x598] sm:$0xff]
    %v353 = vld [vmem:[#allocation2 + $0x5a0] sm:$0xff]
    %v354 = vld [vmem:[#allocation2 + $0x5a8] sm:$0xff]
    %v355 = vld [vmem:[#allocation2 + $0x5b0] sm:$0xff]
    %v356 = vld [vmem:[#allocation2 + $0x5b8] sm:$0xff]
    %v357 = vld [vmem:[#allocation2 + $0x5c0] sm:$0xff]
    %v358 = vld [vmem:[#allocation2 + $0x5c8] sm:$0xff]
    %v359 = vld [vmem:[#allocation2 + $0x5d0] sm:$0xff]
    %v360 = vld [vmem:[#allocation2 + $0x5d8] sm:$0xff]
    %v361 = vld [vmem:[#allocation2 + $0x5e0] sm:$0xff]
    %v362 = vld [vmem:[#allocation2 + $0x5e8] sm:$0xff]
    %v363 = vld [vmem:[#allocation2 + $0x5f0] sm:$0xff]
    %v364 = vld [vmem:[#allocation2 + $0x5f8] sm:$0xff]
    %v365 = vld [vmem:[#allocation2 + $0x600] sm:$0xff]
    %v366 = vld [vmem:[#allocation2 + $0x608] sm:$0xff]
    %v367 = vld [vmem:[#allocation2 + $0x610] sm:$0xff]
    %v368 = vld [vmem:[#allocation2 + $0x618] sm:$0xff]
    %v369 = vld [vmem:[#allocation2 + $0x620] sm:$0xff]
    %v370 = vld [vmem:[#allocation2 + $0x628] sm:$0xff]
    %v371 = vld [vmem:[#allocation2 + $0x630] sm:$0xff]
    %v372 = vld [vmem:[#allocation2 + $0x638] sm:$0xff]
    %v373 = vld [vmem:[#allocation2 + $0x640] sm:$0xff]
    %v374 = vld [vmem:[#allocation2 + $0x648] sm:$0xff]
    %v375 = vld [vmem:[#allocation2 + $0x650] sm:$0xff]
    %v376 = vld [vmem:[#allocation2 + $0x658] sm:$0xff]
    %v377 = vld [vmem:[#allocation2 + $0x660] sm:$0xff]
    %v378 = vld [vmem:[#allocation2 + $0x668] sm:$0xff]
    %v379 = vld [vmem:[#allocation2 + $0x670] sm:$0xff]
    %v380 = vld [vmem:[#allocation2 + $0x678] sm:$0xff]
    %v381 = vld [vmem:[#allocation2 + $0x680] sm:$0xff]
    %v382 = vld [vmem:[#allocation2 + $0x688] sm:$0xff]
    %v383 = vld [vmem:[#allocation2 + $0x690] sm:$0xff]
    %v384 = vld [vmem:[#allocation2 + $0x698] sm:$0xff]
    %v385 = vld [vmem:[#allocation2 + $0x6a0] sm:$0xff]
    %v386 = vld [vmem:[#allocation2 + $0x6a8] sm:$0xff]
    %v387 = vld [vmem:[#allocation2 + $0x6b0] sm:$0xff]
    %v388 = vld [vmem:[#allocation2 + $0x6b8] sm:$0xff]
    %v389 = vld [vmem:[#allocation2 + $0x6c0] sm:$0xff]
    %v390 = vld [vmem:[#allocation2 + $0x6c8] sm:$0xff]
    %v391 = vld [vmem:[#allocation2 + $0x6d0] sm:$0xff]
    %v392 = vld [vmem:[#allocation2 + $0x6d8] sm:$0xff]
    %v393 = vld [vmem:[#allocation2 + $0x6e0] sm:$0xff]
    %v394 = vld [vmem:[#allocation2 + $0x6e8] sm:$0xff]
    %v395 = vld [vmem:[#allocation2 + $0x6f0] sm:$0xff]
    %v396 = vld [vmem:[#allocation2 + $0x6f8] sm:$0xff]
    %v397 = vld [vmem:[#allocation2 + $0x700] sm:$0xff]
    %v398 = vld [vmem:[#allocation2 + $0x708] sm:$0xff]
    %v399 = vld [vmem:[#allocation2 + $0x710] sm:$0xff]
    %v400 = vld [vmem:[#allocation2 + $0x718] sm:$0xff]
    %v401 = vld [vmem:[#allocation2 + $0x720] sm:$0xff]
    %v402 = vld [vmem:[#allocation2 + $0x728] sm:$0xff]
    %v403 = vld [vmem:[#allocation2 + $0x730] sm:$0xff]
    %v404 = vld [vmem:[#allocation2 + $0x738] sm:$0xff]
    %v405 = vld [vmem:[#allocation2 + $0x740] sm:$0xff]
    %v406 = vld [vmem:[#allocation2 + $0x748] sm:$0xff]
    %v407 = vld [vmem:[#allocation2 + $0x750] sm:$0xff]
    %v408 = vld [vmem:[#allocation2 + $0x758] sm:$0xff]
    %v409 = vld [vmem:[#allocation2 + $0x760] sm:$0xff]
    %v410 = vld [vmem:[#allocation2 + $0x768] sm:$0xff]
    %v411 = vld [vmem:[#allocation2 + $0x770] sm:$0xff]
    %v412 = vld [vmem:[#allocation2 + $0x778] sm:$0xff]
    %v413 = vld [vmem:[#allocation2 + $0x780] sm:$0xff]
    %v414 = vld [vmem:[#allocation2 + $0x788] sm:$0xff]
    %v415 = vld [vmem:[#allocation2 + $0x790] sm:$0xff]
    %v416 = vld [vmem:[#allocation2 + $0x798] sm:$0xff]
    %v417 = vld [vmem:[#allocation2 + $0x7a0] sm:$0xff]
    %v418 = vld [vmem:[#allocation2 + $0x7a8] sm:$0xff]
    %v419 = vld [vmem:[#allocation2 + $0x7b0] sm:$0xff]
    %v420 = vld [vmem:[#allocation2 + $0x7b8] sm:$0xff]
    %v421 = vld [vmem:[#allocation2 + $0x7c0] sm:$0xff]
    %v422 = vld [vmem:[#allocation2 + $0x7c8] sm:$0xff]
    %v423 = vld [vmem:[#allocation2 + $0x7d0] sm:$0xff]
    %v424 = vld [vmem:[#allocation2 + $0x7d8] sm:$0xff]
    %v425 = vld [vmem:[#allocation2 + $0x7e0] sm:$0xff]
    %v426 = vld [vmem:[#allocation2 + $0x7e8] sm:$0xff]
    %v427 = vld [vmem:[#allocation2 + $0x7f0] sm:$0xff]
    %v428 = vld [vmem:[#allocation2 + $0x7f8] sm:$0xff]
    %v429 = vld [vmem:[#allocation2 + $0x800] sm:$0xff]
    %v430 = vld [vmem:[#allocation2 + $0x808] sm:$0xff]
    %v431 = vld [vmem:[#allocation2 + $0x810] sm:$0xff]
    %v432 = vld [vmem:[#allocation2 + $0x818] sm:$0xff]
    %v433 = vld [vmem:[#allocation2 + $0x820] sm:$0xff]
    %v434 = vld [vmem:[#allocation2 + $0x828] sm:$0xff]
    %v435 = vld [vmem:[#allocation2 + $0x830] sm:$0xff]
    %v436 = vld [vmem:[#allocation2 + $0x838] sm:$0xff]
    %v437 = vld [vmem:[#allocation2 + $0x840] sm:$0xff]
    %v438 = vld [vmem:[#allocation2 + $0x848] sm:$0xff]
    %v439 = vld [vmem:[#allocation2 + $0x850] sm:$0xff]
    %v440 = vld [vmem:[#allocation2 + $0x858] sm:$0xff]
    %v441 = vld [vmem:[#allocation2 + $0x860] sm:$0xff]
    %v442 = vld [vmem:[#allocation2 + $0x868] sm:$0xff]
    %v443 = vld [vmem:[#allocation2 + $0x870] sm:$0xff]
    %v444 = vld [vmem:[#allocation2 + $0x878] sm:$0xff]
    %v445 = vld [vmem:[#allocation2 + $0x880] sm:$0xff]
    %v446 = vld [vmem:[#allocation2 + $0x888] sm:$0xff]
    %v447 = vld [vmem:[#allocation2 + $0x890] sm:$0xff]
    %v448 = vld [vmem:[#allocation2 + $0x898] sm:$0xff]
    %v449 = vld [vmem:[#allocation2 + $0x8a0] sm:$0xff]
    %v450 = vld [vmem:[#allocation2 + $0x8a8] sm:$0xff]
    %v451 = vld [vmem:[#allocation2 + $0x8b0] sm:$0xff]
    %v452 = vld [vmem:[#allocation2 + $0x8b8] sm:$0xff]
    %v453 = vld [vmem:[#allocation2 + $0x8c0] sm:$0xff]
    %v454 = vld [vmem:[#allocation2 + $0x8c8] sm:$0xff]
    %v455 = vld [vmem:[#allocation2 + $0x8d0] sm:$0xff]
    %v456 = vld [vmem:[#allocation2 + $0x8d8] sm:$0xff]
    %v457 = vld [vmem:[#allocation2 + $0x8e0] sm:$0xff]
    %v458 = vld [vmem:[#allocation2 + $0x8e8] sm:$0xff]
    %v459 = vld [vmem:[#allocation2 + $0x8f0] sm:$0xff]
    %v460 = vld [vmem:[#allocation2 + $0x8f8] sm:$0xff]
    %v461 = vld [vmem:[#allocation2 + $0x900] sm:$0xff]
    %v462 = vld [vmem:[#allocation2 + $0x908] sm:$0xff]
    %v463 = vld [vmem:[#allocation2 + $0x910] sm:$0xff]
    %v464 = vld [vmem:[#allocation2 + $0x918] sm:$0xff]
    %v465 = vld [vmem:[#allocation2 + $0x920] sm:$0xff]
    %v466 = vld [vmem:[#allocation2 + $0x928] sm:$0xff]
    %v467 = vld [vmem:[#allocation2 + $0x930] sm:$0xff]
    %v468 = vld [vmem:[#allocation2 + $0x938] sm:$0xff]
    %v469 = vld [vmem:[#allocation2 + $0x940] sm:$0xff]
    %v470 = vld [vmem:[#allocation2 + $0x948] sm:$0xff]
    %v471 = vld [vmem:[#allocation2 + $0x950] sm:$0xff]
    %v472 = vld [vmem:[#allocation2 + $0x958] sm:$0xff]
    %v473 = vld [vmem:[#allocation2 + $0x960] sm:$0xff]
    %v474 = vld [vmem:[#allocation2 + $0x968] sm:$0xff]
    %v475 = vld [vmem:[#allocation2 + $0x970] sm:$0xff]
    %v476 = vld [vmem:[#allocation2 + $0x978] sm:$0xff]
    %v477 = vld [vmem:[#allocation2 + $0x980] sm:$0xff]
    %v478 = vld [vmem:[#allocation2 + $0x988] sm:$0xff]
    %v479 = vld [vmem:[#allocation2 + $0x990] sm:$0xff]
    %v480 = vld [vmem:[#allocation2 + $0x998] sm:$0xff]
    %v481 = vld [vmem:[#allocation2 + $0x9a0] sm:$0xff]
    %v482 = vld [vmem:[#allocation2 + $0x9a8] sm:$0xff]
    %v483 = vld [vmem:[#allocation2 + $0x9b0] sm:$0xff]
    %v484 = vld [vmem:[#allocation2 + $0x9b8] sm:$0xff]
    %v485 = vld [vmem:[#allocation2 + $0x9c0] sm:$0xff]
    %v486 = vld [vmem:[#allocation2 + $0x9c8] sm:$0xff]
    %v487 = vld [vmem:[#allocation2 + $0x9d0] sm:$0xff]
    %v488 = vld [vmem:[#allocation2 + $0x9d8] sm:$0xff]
    %v489 = vld [vmem:[#allocation2 + $0x9e0] sm:$0xff]
    %v490 = vld [vmem:[#allocation2 + $0x9e8] sm:$0xff]
    %v491 = vld [vmem:[#allocation2 + $0x9f0] sm:$0xff]
    %v492 = vld [vmem:[#allocation2 + $0x9f8] sm:$0xff]
    %v493 = vld [vmem:[#allocation2 + $0xa00] sm:$0xff]
    %v494 = vld [vmem:[#allocation2 + $0xa08] sm:$0xff]
    %v495 = vld [vmem:[#allocation2 + $0xa10] sm:$0xff]
    %v496 = vld [vmem:[#allocation2 + $0xa18] sm:$0xff]
    %v497 = vld [vmem:[#allocation2 + $0xa20] sm:$0xff]
    %v498 = vld [vmem:[#allocation2 + $0xa28] sm:$0xff]
    %v499 = vld [vmem:[#allocation2 + $0xa30] sm:$0xff]
    %v500 = vld [vmem:[#allocation2 + $0xa38] sm:$0xff]
    %v501 = vld [vmem:[#allocation2 + $0xa40] sm:$0xff]
    %v502 = vld [vmem:[#allocation2 + $0xa48] sm:$0xff]
    %v503 = vld [vmem:[#allocation2 + $0xa50] sm:$0xff]
    %v504 = vld [vmem:[#allocation2 + $0xa58] sm:$0xff]
    %v505 = vld [vmem:[#allocation2 + $0xa60] sm:$0xff]
    %v506 = vld [vmem:[#allocation2 + $0xa68] sm:$0xff]
    %v507 = vld [vmem:[#allocation2 + $0xa70] sm:$0xff]
    %v508 = vld [vmem:[#allocation2 + $0xa78] sm:$0xff]
    %v509 = vld [vmem:[#allocation2 + $0xa80] sm:$0xff]
    %v510 = vld [vmem:[#allocation2 + $0xa88] sm:$0xff]
    %v511 = vld [vmem:[#allocation2 + $0xa90] sm:$0xff]
    %v512 = vld [vmem:[#allocation2 + $0xa98] sm:$0xff]
    %v513 = vld [vmem:[#allocation2 + $0xaa0] sm:$0xff]
    %v514 = vld [vmem:[#allocation2 + $0xaa8] sm:$0xff]
    %v515 = vld [vmem:[#allocation2 + $0xab0] sm:$0xff]
    %v516 = vld [vmem:[#allocation2 + $0xab8] sm:$0xff]
    %v517 = vld [vmem:[#allocation2 + $0xac0] sm:$0xff]
    %v518 = vld [vmem:[#allocation2 + $0xac8] sm:$0xff]
    %v519 = vld [vmem:[#allocation2 + $0xad0] sm:$0xff]
    %v520 = vld [vmem:[#allocation2 + $0xad8] sm:$0xff]
    %v521 = vld [vmem:[#allocation2 + $0xae0] sm:$0xff]
    %v522 = vld [vmem:[#allocation2 + $0xae8] sm:$0xff]
    %v523 = vld [vmem:[#allocation2 + $0xaf0] sm:$0xff]
    %v524 = vld [vmem:[#allocation2 + $0xaf8] sm:$0xff]
    %v525 = vld [vmem:[#allocation2 + $0xb00] sm:$0xff]
    %v526 = vld [vmem:[#allocation2 + $0xb08] sm:$0xff]
    %v527 = vld [vmem:[#allocation2 + $0xb10] sm:$0xff]
    %v528 = vld [vmem:[#allocation2 + $0xb18] sm:$0xff]
    %v529 = vld [vmem:[#allocation2 + $0xb20] sm:$0xff]
    %v530 = vld [vmem:[#allocation2 + $0xb28] sm:$0xff]
    %v531 = vld [vmem:[#allocation2 + $0xb30] sm:$0xff]
    %v532 = vld [vmem:[#allocation2 + $0xb38] sm:$0xff]
    %v533 = vld [vmem:[#allocation2 + $0xb40] sm:$0xff]
    %v534 = vld [vmem:[#allocation2 + $0xb48] sm:$0xff]
    %v535 = vld [vmem:[#allocation2 + $0xb50] sm:$0xff]
    %v536 = vld [vmem:[#allocation2 + $0xb58] sm:$0xff]
    %v537 = vld [vmem:[#allocation2 + $0xb60] sm:$0xff]
    %v538 = vld [vmem:[#allocation2 + $0xb68] sm:$0xff]
    %v539 = vld [vmem:[#allocation2 + $0xb70] sm:$0xff]
    %v540 = vld [vmem:[#allocation2 + $0xb78] sm:$0xff]
    %v541 = vld [vmem:[#allocation2 + $0xb80] sm:$0xff]
    %v542 = vld [vmem:[#allocation2 + $0xb88] sm:$0xff]
    %v543 = vld [vmem:[#allocation2 + $0xb90] sm:$0xff]
    %v544 = vld [vmem:[#allocation2 + $0xb98] sm:$0xff]
    %v545 = vld [vmem:[#allocation2 + $0xba0] sm:$0xff]
    %v546 = vld [vmem:[#allocation2 + $0xba8] sm:$0xff]
    %v547 = vld [vmem:[#allocation2 + $0xbb0] sm:$0xff]
    %v548 = vld [vmem:[#allocation2 + $0xbb8] sm:$0xff]
    %v549 = vld [vmem:[#allocation2 + $0xbc0] sm:$0xff]
    %v550 = vld [vmem:[#allocation2 + $0xbc8] sm:$0xff]
    %v551 = vld [vmem:[#allocation2 + $0xbd0] sm:$0xff]
    %v552 = vld [vmem:[#allocation2 + $0xbd8] sm:$0xff]
    %v553 = vld [vmem:[#allocation2 + $0xbe0] sm:$0xff]
    %v554 = vld [vmem:[#allocation2 + $0xbe8] sm:$0xff]
    %v555 = vld [vmem:[#allocation2 + $0xbf0] sm:$0xff]
    %v556 = vld [vmem:[#allocation2 + $0xbf8] sm:$0xff]
    %v557 = vld [vmem:[#allocation2 + $0xc00] sm:$0xff]
    %v558 = vld [vmem:[#allocation2 + $0xc08] sm:$0xff]
    %v559 = vld [vmem:[#allocation2 + $0xc10] sm:$0xff]
    %v560 = vld [vmem:[#allocation2 + $0xc18] sm:$0xff]
    %v561 = vld [vmem:[#allocation2 + $0xc20] sm:$0xff]
    %v562 = vld [vmem:[#allocation2 + $0xc28] sm:$0xff]
    %v563 = vld [vmem:[#allocation2 + $0xc30] sm:$0xff]
    %v564 = vld [vmem:[#allocation2 + $0xc38] sm:$0xff]
    %v565 = vld [vmem:[#allocation2 + $0xc40] sm:$0xff]
    %v566 = vld [vmem:[#allocation2 + $0xc48] sm:$0xff]
    %v567 = vld [vmem:[#allocation2 + $0xc50] sm:$0xff]
    %v568 = vld [vmem:[#allocation2 + $0xc58] sm:$0xff]
    %v569 = vld [vmem:[#allocation2 + $0xc60] sm:$0xff]
    %v570 = vld [vmem:[#allocation2 + $0xc68] sm:$0xff]
    %v571 = vld [vmem:[#allocation2 + $0xc70] sm:$0xff]
    %v572 = vld [vmem:[#allocation2 + $0xc78] sm:$0xff]
    %v573 = vld [vmem:[#allocation2 + $0xc80] sm:$0xff]
    %v574 = vld [vmem:[#allocation2 + $0xc88] sm:$0xff]
    %v575 = vld [vmem:[#allocation2 + $0xc90] sm:$0xff]
    %v576 = vld [vmem:[#allocation2 + $0xc98] sm:$0xff]
    %v577 = vld [vmem:[#allocation2 + $0xca0] sm:$0xff]
    %v578 = vld [vmem:[#allocation2 + $0xca8] sm:$0xff]
    %v579 = vld [vmem:[#allocation2 + $0xcb0] sm:$0xff]
    %v580 = vld [vmem:[#allocation2 + $0xcb8] sm:$0xff]
    %v581 = vld [vmem:[#allocation2 + $0xcc0] sm:$0xff]
    %v582 = vld [vmem:[#allocation2 + $0xcc8] sm:$0xff]
    %v583 = vld [vmem:[#allocation2 + $0xcd0] sm:$0xff]
    %v584 = vld [vmem:[#allocation2 + $0xcd8] sm:$0xff]
    %v585 = vld [vmem:[#allocation2 + $0xce0] sm:$0xff]
    %v586 = vld [vmem:[#allocation2 + $0xce8] sm:$0xff]
    %v587 = vld [vmem:[#allocation2 + $0xcf0] sm:$0xff]
    %v588 = vld [vmem:[#allocation2 + $0xcf8] sm:$0xff]
    %v589 = vld [vmem:[#allocation2 + $0xd00] sm:$0xff]
    %v590 = vld [vmem:[#allocation2 + $0xd08] sm:$0xff]
    %v591 = vld [vmem:[#allocation2 + $0xd10] sm:$0xff]
    %v592 = vld [vmem:[#allocation2 + $0xd18] sm:$0xff]
    %v593 = vld [vmem:[#allocation2 + $0xd20] sm:$0xff]
    %v594 = vld [vmem:[#allocation2 + $0xd28] sm:$0xff]
    %v595 = vld [vmem:[#allocation2 + $0xd30] sm:$0xff]
    %v596 = vld [vmem:[#allocation2 + $0xd38] sm:$0xff]
    %v597 = vld [vmem:[#allocation2 + $0xd40] sm:$0xff]
    %v598 = vld [vmem:[#allocation2 + $0xd48] sm:$0xff]
    %v599 = vld [vmem:[#allocation2 + $0xd50] sm:$0xff]
    %v600 = vld [vmem:[#allocation2 + $0xd58] sm:$0xff]
    %v601 = vld [vmem:[#allocation2 + $0xd60] sm:$0xff]
    %v602 = vld [vmem:[#allocation2 + $0xd68] sm:$0xff]
    %v603 = vld [vmem:[#allocation2 + $0xd70] sm:$0xff]
    %v604 = vld [vmem:[#allocation2 + $0xd78] sm:$0xff]
    %v605 = vld [vmem:[#allocation2 + $0xd80] sm:$0xff]
    %v606 = vld [vmem:[#allocation2 + $0xd88] sm:$0xff]
    %v607 = vld [vmem:[#allocation2 + $0xd90] sm:$0xff]
    %v608 = vld [vmem:[#allocation2 + $0xd98] sm:$0xff]
    %v609 = vld [vmem:[#allocation2 + $0xda0] sm:$0xff]
    %v610 = vld [vmem:[#allocation2 + $0xda8] sm:$0xff]
    %v611 = vld [vmem:[#allocation2 + $0xdb0] sm:$0xff]
    %v612 = vld [vmem:[#allocation2 + $0xdb8] sm:$0xff]
    %v613 = vld [vmem:[#allocation2 + $0xdc0] sm:$0xff]
    %v614 = vld [vmem:[#allocation2 + $0xdc8] sm:$0xff]
    %v615 = vld [vmem:[#allocation2 + $0xdd0] sm:$0xff]
    %v616 = vld [vmem:[#allocation2 + $0xdd8] sm:$0xff]
    %v617 = vld [vmem:[#allocation2 + $0xde0] sm:$0xff]
    %v618 = vld [vmem:[#allocation2 + $0xde8] sm:$0xff]
    %v619 = vld [vmem:[#allocation2 + $0xdf0] sm:$0xff]
    %v620 = vld [vmem:[#allocation2 + $0xdf8] sm:$0xff]
    %v621 = vld [vmem:[#allocation4] sm:$0xff]
    %v623 = vlaneseq
    %v624 = vshrl.u32 %v623, 7
    %v625 = vsub.s32 0, %v624
    %v626 = vrot.slane %v621, %v625
    %v627 = vlaneseq
    %v628 = vshrl.u32 %v627, 7
    %v629 = vsub.s32 1, %v628
    %v630 = vrot.slane %v621, %v629
    %v631 = vlaneseq
    %v632 = vshrl.u32 %v631, 7
    %v633 = vsub.s32 2, %v632
    %v634 = vrot.slane %v621, %v633
    %v635 = vlaneseq
    %v636 = vshrl.u32 %v635, 7
    %v637 = vsub.s32 3, %v636
    %v638 = vrot.slane %v621, %v637
    %v639 = vlaneseq
    %v640 = vshrl.u32 %v639, 7
    %v641 = vsub.s32 4, %v640
    %v642 = vrot.slane %v621, %v641
    %v643 = vlaneseq
    %v644 = vshrl.u32 %v643, 7
    %v645 = vsub.s32 5, %v644
    %v646 = vrot.slane %v621, %v645
    %v647 = vlaneseq
    %v648 = vshrl.u32 %v647, 7
    %v649 = vsub.s32 6, %v648
    %v650 = vrot.slane %v621, %v649
    %v651 = vlaneseq
    %v652 = vshrl.u32 %v651, 7
    %v653 = vsub.s32 7, %v652
    %v654 = vrot.slane %v621, %v653
    %v671 = vunpack.c.l.b16 %v165
    %v672 = vunpack.c.h.b16 %v165
    %v673 = vunpack.c.l.b16 %v166
    %v674 = vunpack.c.h.b16 %v166
    %v675 = vunpack.c.l.b16 %v167
    %v676 = vunpack.c.h.b16 %v167
    %v677 = vunpack.c.l.b16 %v168
    %v678 = vunpack.c.l.b16 %v169
    %v679 = vunpack.c.h.b16 %v169
    %v680 = vunpack.c.l.b16 %v170
    %v681 = vunpack.c.h.b16 %v170
    %v682 = vunpack.c.l.b16 %v171
    %v683 = vunpack.c.h.b16 %v171
    %v684 = vunpack.c.l.b16 %v172
    %v685 = vpack.c.b16 %v678, %v671
    %v686 = vpack.c.b16 %v679, %v672
    %v687 = vpack.c.b16 %v680, %v673
    %v688 = vpack.c.b16 %v681, %v674
    %v689 = vpack.c.b16 %v682, %v675
    %v690 = vpack.c.b16 %v683, %v676
    %v691 = vpack.c.b16 %v684, %v677
    %v1147 = vunpack.c.l.b16 %v173
    %v1148 = vunpack.c.h.b16 %v173
    %v1149 = vunpack.c.l.b16 %v174
    %v1150 = vunpack.c.h.b16 %v174
    %v1151 = vunpack.c.l.b16 %v175
    %v1152 = vunpack.c.h.b16 %v175
    %v1153 = vunpack.c.l.b16 %v176
    %v1154 = vunpack.c.h.b16 %v176
    %v1155 = vunpack.c.l.b16 %v177
    %v1156 = vunpack.c.h.b16 %v177
    %v1157 = vunpack.c.l.b16 %v178
    %v1158 = vunpack.c.h.b16 %v178
    %v1159 = vunpack.c.l.b16 %v179
    %v1160 = vunpack.c.h.b16 %v179
    %v1161 = vunpack.c.l.b16 %v180
    %v1162 = vunpack.c.h.b16 %v180
    %v1163 = vunpack.c.l.b16 %v181
    %v1164 = vunpack.c.h.b16 %v181
    %v1165 = vunpack.c.l.b16 %v182
    %v1166 = vunpack.c.h.b16 %v182
    %v1167 = vunpack.c.l.b16 %v183
    %v1168 = vunpack.c.h.b16 %v183
    %v1169 = vunpack.c.l.b16 %v184
    %v1170 = vunpack.c.h.b16 %v184
    %v1171 = vunpack.c.l.b16 %v185
    %v1172 = vunpack.c.h.b16 %v185
    %v1173 = vunpack.c.l.b16 %v186
    %v1174 = vunpack.c.h.b16 %v186
    %v1175 = vunpack.c.l.b16 %v187
    %v1176 = vunpack.c.h.b16 %v187
    %v1177 = vunpack.c.l.b16 %v188
    %v1178 = vunpack.c.h.b16 %v188
    %v1179 = vunpack.c.l.b16 %v189
    %v1180 = vunpack.c.h.b16 %v189
    %v1181 = vunpack.c.l.b16 %v190
    %v1182 = vunpack.c.h.b16 %v190
    %v1183 = vunpack.c.l.b16 %v191
    %v1184 = vunpack.c.h.b16 %v191
    %v1185 = vunpack.c.l.b16 %v192
    %v1186 = vunpack.c.h.b16 %v192
    %v1187 = vunpack.c.l.b16 %v193
    %v1188 = vunpack.c.h.b16 %v193
    %v1189 = vunpack.c.l.b16 %v194
    %v1190 = vunpack.c.h.b16 %v194
    %v1191 = vunpack.c.l.b16 %v195
    %v1192 = vunpack.c.h.b16 %v195
    %v1193 = vunpack.c.l.b16 %v196
    %v1194 = vunpack.c.h.b16 %v196
    %v1195 = vunpack.c.l.b16 %v197
    %v1196 = vunpack.c.h.b16 %v197
    %v1197 = vunpack.c.l.b16 %v198
    %v1198 = vunpack.c.h.b16 %v198
    %v1199 = vunpack.c.l.b16 %v199
    %v1200 = vunpack.c.h.b16 %v199
    %v1201 = vunpack.c.l.b16 %v200
    %v1202 = vunpack.c.h.b16 %v200
    %v1203 = vunpack.c.l.b16 %v201
    %v1204 = vunpack.c.h.b16 %v201
    %v1205 = vunpack.c.l.b16 %v202
    %v1206 = vunpack.c.h.b16 %v202
    %v1207 = vunpack.c.l.b16 %v203
    %v1208 = vunpack.c.h.b16 %v203
    %v1209 = vunpack.c.l.b16 %v204
    %v1210 = vunpack.c.h.b16 %v204
    %v1211 = vunpack.c.l.b16 %v205
    %v1212 = vunpack.c.h.b16 %v205
    %v1213 = vunpack.c.l.b16 %v206
    %v1214 = vunpack.c.h.b16 %v206
    %v1215 = vunpack.c.l.b16 %v207
    %v1216 = vunpack.c.h.b16 %v207
    %v1217 = vunpack.c.l.b16 %v208
    %v1218 = vunpack.c.h.b16 %v208
    %v1219 = vunpack.c.l.b16 %v209
    %v1220 = vunpack.c.h.b16 %v209
    %v1221 = vunpack.c.l.b16 %v210
    %v1222 = vunpack.c.h.b16 %v210
    %v1223 = vunpack.c.l.b16 %v211
    %v1224 = vunpack.c.h.b16 %v211
    %v1225 = vunpack.c.l.b16 %v212
    %v1226 = vunpack.c.h.b16 %v212
    %v1227 = vunpack.c.l.b16 %v213
    %v1228 = vunpack.c.h.b16 %v213
    %v1229 = vunpack.c.l.b16 %v214
    %v1230 = vunpack.c.h.b16 %v214
    %v1231 = vunpack.c.l.b16 %v215
    %v1232 = vunpack.c.h.b16 %v215
    %v1233 = vunpack.c.l.b16 %v216
    %v1234 = vunpack.c.h.b16 %v216
    %v1235 = vunpack.c.l.b16 %v217
    %v1236 = vunpack.c.h.b16 %v217
    %v1237 = vunpack.c.l.b16 %v218
    %v1238 = vunpack.c.h.b16 %v218
    %v1239 = vunpack.c.l.b16 %v219
    %v1240 = vunpack.c.h.b16 %v219
    %v1241 = vunpack.c.l.b16 %v220
    %v1242 = vunpack.c.h.b16 %v220
    %v1243 = vunpack.c.l.b16 %v221
    %v1244 = vunpack.c.h.b16 %v221
    %v1245 = vunpack.c.l.b16 %v222
    %v1246 = vunpack.c.h.b16 %v222
    %v1247 = vunpack.c.l.b16 %v223
    %v1248 = vunpack.c.h.b16 %v223
    %v1249 = vunpack.c.l.b16 %v224
    %v1250 = vunpack.c.h.b16 %v224
    %v1251 = vunpack.c.l.b16 %v225
    %v1252 = vunpack.c.h.b16 %v225
    %v1253 = vunpack.c.l.b16 %v226
    %v1254 = vunpack.c.h.b16 %v226
    %v1255 = vunpack.c.l.b16 %v227
    %v1256 = vunpack.c.h.b16 %v227
    %v1257 = vunpack.c.l.b16 %v228
    %v1258 = vunpack.c.h.b16 %v228
    %v1259 = vunpack.c.l.b16 %v229
    %v1260 = vunpack.c.h.b16 %v229
    %v1261 = vunpack.c.l.b16 %v230
    %v1262 = vunpack.c.h.b16 %v230
    %v1263 = vunpack.c.l.b16 %v231
    %v1264 = vunpack.c.h.b16 %v231
    %v1265 = vunpack.c.l.b16 %v232
    %v1266 = vunpack.c.h.b16 %v232
    %v1267 = vunpack.c.l.b16 %v233
    %v1268 = vunpack.c.h.b16 %v233
    %v1269 = vunpack.c.l.b16 %v234
    %v1270 = vunpack.c.h.b16 %v234
    %v1271 = vunpack.c.l.b16 %v235
    %v1272 = vunpack.c.h.b16 %v235
    %v1273 = vunpack.c.l.b16 %v236
    %v1274 = vunpack.c.h.b16 %v236
    %v1275 = vunpack.c.l.b16 %v237
    %v1276 = vunpack.c.h.b16 %v237
    %v1277 = vunpack.c.l.b16 %v238
    %v1278 = vunpack.c.h.b16 %v238
    %v1279 = vunpack.c.l.b16 %v239
    %v1280 = vunpack.c.h.b16 %v239
    %v1281 = vunpack.c.l.b16 %v240
    %v1282 = vunpack.c.h.b16 %v240
    %v1283 = vunpack.c.l.b16 %v241
    %v1284 = vunpack.c.h.b16 %v241
    %v1285 = vunpack.c.l.b16 %v242
    %v1286 = vunpack.c.h.b16 %v242
    %v1287 = vunpack.c.l.b16 %v243
    %v1288 = vunpack.c.h.b16 %v243
    %v1289 = vunpack.c.l.b16 %v244
    %v1290 = vunpack.c.h.b16 %v244
    %v1291 = vunpack.c.l.b16 %v245
    %v1292 = vunpack.c.h.b16 %v245
    %v1293 = vunpack.c.l.b16 %v246
    %v1294 = vunpack.c.h.b16 %v246
    %v1295 = vunpack.c.l.b16 %v247
    %v1296 = vunpack.c.h.b16 %v247
    %v1297 = vunpack.c.l.b16 %v248
    %v1298 = vunpack.c.h.b16 %v248
    %v1299 = vunpack.c.l.b16 %v249
    %v1300 = vunpack.c.h.b16 %v249
    %v1301 = vunpack.c.l.b16 %v250
    %v1302 = vunpack.c.h.b16 %v250
    %v1303 = vunpack.c.l.b16 %v251
    %v1304 = vunpack.c.h.b16 %v251
    %v1305 = vunpack.c.l.b16 %v252
    %v1306 = vunpack.c.h.b16 %v252
    %v1307 = vunpack.c.l.b16 %v253
    %v1308 = vunpack.c.h.b16 %v253
    %v1309 = vunpack.c.l.b16 %v254
    %v1310 = vunpack.c.h.b16 %v254
    %v1311 = vunpack.c.l.b16 %v255
    %v1312 = vunpack.c.h.b16 %v255
    %v1313 = vunpack.c.l.b16 %v256
    %v1314 = vunpack.c.h.b16 %v256
    %v1315 = vunpack.c.l.b16 %v257
    %v1316 = vunpack.c.h.b16 %v257
    %v1317 = vunpack.c.l.b16 %v258
    %v1318 = vunpack.c.h.b16 %v258
    %v1319 = vunpack.c.l.b16 %v259
    %v1320 = vunpack.c.h.b16 %v259
    %v1321 = vunpack.c.l.b16 %v260
    %v1322 = vunpack.c.h.b16 %v260
    %v1323 = vunpack.c.l.b16 %v261
    %v1324 = vunpack.c.h.b16 %v261
    %v1325 = vunpack.c.l.b16 %v262
    %v1326 = vunpack.c.h.b16 %v262
    %v1327 = vunpack.c.l.b16 %v263
    %v1328 = vunpack.c.h.b16 %v263
    %v1329 = vunpack.c.l.b16 %v264
    %v1330 = vunpack.c.h.b16 %v264
    %v1331 = vunpack.c.l.b16 %v265
    %v1332 = vunpack.c.h.b16 %v265
    %v1333 = vunpack.c.l.b16 %v266
    %v1334 = vunpack.c.h.b16 %v266
    %v1335 = vunpack.c.l.b16 %v267
    %v1336 = vunpack.c.h.b16 %v267
    %v1337 = vunpack.c.l.b16 %v268
    %v1338 = vunpack.c.h.b16 %v268
    %v1339 = vunpack.c.l.b16 %v269
    %v1340 = vunpack.c.h.b16 %v269
    %v1341 = vunpack.c.l.b16 %v270
    %v1342 = vunpack.c.h.b16 %v270
    %v1343 = vunpack.c.l.b16 %v271
    %v1344 = vunpack.c.h.b16 %v271
    %v1345 = vunpack.c.l.b16 %v272
    %v1346 = vunpack.c.h.b16 %v272
    %v1347 = vunpack.c.l.b16 %v273
    %v1348 = vunpack.c.h.b16 %v273
    %v1349 = vunpack.c.l.b16 %v274
    %v1350 = vunpack.c.h.b16 %v274
    %v1351 = vunpack.c.l.b16 %v275
    %v1352 = vunpack.c.h.b16 %v275
    %v1353 = vunpack.c.l.b16 %v276
    %v1354 = vunpack.c.h.b16 %v276
    %v1355 = vunpack.c.l.b16 %v277
    %v1356 = vunpack.c.h.b16 %v277
    %v1357 = vunpack.c.l.b16 %v278
    %v1358 = vunpack.c.h.b16 %v278
    %v1359 = vunpack.c.l.b16 %v279
    %v1360 = vunpack.c.h.b16 %v279
    %v1361 = vunpack.c.l.b16 %v280
    %v1362 = vunpack.c.h.b16 %v280
    %v1363 = vunpack.c.l.b16 %v281
    %v1364 = vunpack.c.h.b16 %v281
    %v1365 = vunpack.c.l.b16 %v282
    %v1366 = vunpack.c.h.b16 %v282
    %v1367 = vunpack.c.l.b16 %v283
    %v1368 = vunpack.c.h.b16 %v283
    %v1369 = vunpack.c.l.b16 %v284
    %v1370 = vunpack.c.h.b16 %v284
    %v1371 = vunpack.c.l.b16 %v285
    %v1372 = vunpack.c.h.b16 %v285
    %v1373 = vunpack.c.l.b16 %v286
    %v1374 = vunpack.c.h.b16 %v286
    %v1375 = vunpack.c.l.b16 %v287
    %v1376 = vunpack.c.h.b16 %v287
    %v1377 = vunpack.c.l.b16 %v288
    %v1378 = vunpack.c.h.b16 %v288
    %v1379 = vunpack.c.l.b16 %v289
    %v1380 = vunpack.c.h.b16 %v289
    %v1381 = vunpack.c.l.b16 %v290
    %v1382 = vunpack.c.h.b16 %v290
    %v1383 = vunpack.c.l.b16 %v291
    %v1384 = vunpack.c.h.b16 %v291
    %v1385 = vunpack.c.l.b16 %v292
    %v1386 = vunpack.c.h.b16 %v292
    %v1387 = vunpack.c.l.b16 %v293
    %v1388 = vunpack.c.h.b16 %v293
    %v1389 = vunpack.c.l.b16 %v294
    %v1390 = vunpack.c.h.b16 %v294
    %v1391 = vunpack.c.l.b16 %v295
    %v1392 = vunpack.c.h.b16 %v295
    %v1393 = vunpack.c.l.b16 %v296
    %v1394 = vunpack.c.h.b16 %v296
    %v1395 = vunpack.c.l.b16 %v297
    %v1396 = vunpack.c.h.b16 %v297
    %v1397 = vunpack.c.l.b16 %v298
    %v1398 = vunpack.c.h.b16 %v298
    %v1399 = vunpack.c.l.b16 %v299
    %v1400 = vunpack.c.h.b16 %v299
    %v1401 = vunpack.c.l.b16 %v300
    %v1402 = vunpack.c.h.b16 %v300
    %v1403 = vunpack.c.l.b16 %v301
    %v1404 = vunpack.c.h.b16 %v301
    %v1405 = vunpack.c.l.b16 %v302
    %v1406 = vunpack.c.h.b16 %v302
    %v1407 = vunpack.c.l.b16 %v303
    %v1408 = vunpack.c.h.b16 %v303
    %v1409 = vunpack.c.l.b16 %v304
    %v1410 = vunpack.c.h.b16 %v304
    %v1411 = vunpack.c.l.b16 %v305
    %v1412 = vunpack.c.h.b16 %v305
    %v1413 = vunpack.c.l.b16 %v306
    %v1414 = vunpack.c.h.b16 %v306
    %v1415 = vunpack.c.l.b16 %v307
    %v1416 = vunpack.c.h.b16 %v307
    %v1417 = vunpack.c.l.b16 %v308
    %v1418 = vunpack.c.h.b16 %v308
    %v1419 = vunpack.c.l.b16 %v309
    %v1420 = vunpack.c.h.b16 %v309
    %v1421 = vunpack.c.l.b16 %v310
    %v1422 = vunpack.c.h.b16 %v310
    %v1423 = vunpack.c.l.b16 %v311
    %v1424 = vunpack.c.h.b16 %v311
    %v1425 = vunpack.c.l.b16 %v312
    %v1426 = vunpack.c.h.b16 %v312
    %v1427 = vunpack.c.l.b16 %v313
    %v1428 = vunpack.c.h.b16 %v313
    %v1429 = vunpack.c.l.b16 %v314
    %v1430 = vunpack.c.h.b16 %v314
    %v1431 = vunpack.c.l.b16 %v315
    %v1432 = vunpack.c.h.b16 %v315
    %v1433 = vunpack.c.l.b16 %v316
    %v1434 = vunpack.c.h.b16 %v316
    %v1435 = vunpack.c.l.b16 %v317
    %v1436 = vunpack.c.h.b16 %v317
    %v1437 = vunpack.c.l.b16 %v318
    %v1438 = vunpack.c.h.b16 %v318
    %v1439 = vunpack.c.l.b16 %v319
    %v1440 = vunpack.c.h.b16 %v319
    %v1441 = vunpack.c.l.b16 %v320
    %v1442 = vunpack.c.h.b16 %v320
    %v1443 = vunpack.c.l.b16 %v321
    %v1444 = vunpack.c.h.b16 %v321
    %v1445 = vunpack.c.l.b16 %v322
    %v1446 = vunpack.c.h.b16 %v322
    %v1447 = vunpack.c.l.b16 %v323
    %v1448 = vunpack.c.h.b16 %v323
    %v1449 = vunpack.c.l.b16 %v324
    %v1450 = vunpack.c.h.b16 %v324
    %v1451 = vunpack.c.l.b16 %v325
    %v1452 = vunpack.c.h.b16 %v325
    %v1453 = vunpack.c.l.b16 %v326
    %v1454 = vunpack.c.h.b16 %v326
    %v1455 = vunpack.c.l.b16 %v327
    %v1456 = vunpack.c.h.b16 %v327
    %v1457 = vunpack.c.l.b16 %v328
    %v1458 = vunpack.c.h.b16 %v328
    %v1459 = vunpack.c.l.b16 %v329
    %v1460 = vunpack.c.h.b16 %v329
    %v1461 = vunpack.c.l.b16 %v330
    %v1462 = vunpack.c.h.b16 %v330
    %v1463 = vunpack.c.l.b16 %v331
    %v1464 = vunpack.c.h.b16 %v331
    %v1465 = vunpack.c.l.b16 %v332
    %v1466 = vunpack.c.h.b16 %v332
    %v1467 = vunpack.c.l.b16 %v333
    %v1468 = vunpack.c.h.b16 %v333
    %v1469 = vunpack.c.l.b16 %v334
    %v1470 = vunpack.c.h.b16 %v334
    %v1471 = vunpack.c.l.b16 %v335
    %v1472 = vunpack.c.h.b16 %v335
    %v1473 = vunpack.c.l.b16 %v336
    %v1474 = vunpack.c.h.b16 %v336
    %v1475 = vunpack.c.l.b16 %v337
    %v1476 = vunpack.c.h.b16 %v337
    %v1477 = vunpack.c.l.b16 %v338
    %v1478 = vunpack.c.h.b16 %v338
    %v1479 = vunpack.c.l.b16 %v339
    %v1480 = vunpack.c.h.b16 %v339
    %v1481 = vunpack.c.l.b16 %v340
    %v1482 = vunpack.c.h.b16 %v340
    %v1483 = vunpack.c.l.b16 %v341
    %v1484 = vunpack.c.h.b16 %v341
    %v1485 = vunpack.c.l.b16 %v342
    %v1486 = vunpack.c.h.b16 %v342
    %v1487 = vunpack.c.l.b16 %v343
    %v1488 = vunpack.c.h.b16 %v343
    %v1489 = vunpack.c.l.b16 %v344
    %v1490 = vunpack.c.h.b16 %v344
    %v1491 = vunpack.c.l.b16 %v345
    %v1492 = vunpack.c.h.b16 %v345
    %v1493 = vunpack.c.l.b16 %v346
    %v1494 = vunpack.c.h.b16 %v346
    %v1495 = vunpack.c.l.b16 %v347
    %v1496 = vunpack.c.h.b16 %v347
    %v1497 = vunpack.c.l.b16 %v348
    %v1498 = vunpack.c.h.b16 %v348
    %v1499 = vunpack.c.l.b16 %v349
    %v1500 = vunpack.c.h.b16 %v349
    %v1501 = vunpack.c.l.b16 %v350
    %v1502 = vunpack.c.h.b16 %v350
    %v1503 = vunpack.c.l.b16 %v351
    %v1504 = vunpack.c.h.b16 %v351
    %v1505 = vunpack.c.l.b16 %v352
    %v1506 = vunpack.c.h.b16 %v352
    %v1507 = vunpack.c.l.b16 %v353
    %v1508 = vunpack.c.h.b16 %v353
    %v1509 = vunpack.c.l.b16 %v354
    %v1510 = vunpack.c.h.b16 %v354
    %v1511 = vunpack.c.l.b16 %v355
    %v1512 = vunpack.c.h.b16 %v355
    %v1513 = vunpack.c.l.b16 %v356
    %v1514 = vunpack.c.h.b16 %v356
    %v1515 = vunpack.c.l.b16 %v357
    %v1516 = vunpack.c.h.b16 %v357
    %v1517 = vunpack.c.l.b16 %v358
    %v1518 = vunpack.c.h.b16 %v358
    %v1519 = vunpack.c.l.b16 %v359
    %v1520 = vunpack.c.h.b16 %v359
    %v1521 = vunpack.c.l.b16 %v360
    %v1522 = vunpack.c.h.b16 %v360
    %v1523 = vunpack.c.l.b16 %v361
    %v1524 = vunpack.c.h.b16 %v361
    %v1525 = vunpack.c.l.b16 %v362
    %v1526 = vunpack.c.h.b16 %v362
    %v1527 = vunpack.c.l.b16 %v363
    %v1528 = vunpack.c.h.b16 %v363
    %v1529 = vunpack.c.l.b16 %v364
    %v1530 = vunpack.c.h.b16 %v364
    %v1531 = vunpack.c.l.b16 %v365
    %v1532 = vunpack.c.h.b16 %v365
    %v1533 = vunpack.c.l.b16 %v366
    %v1534 = vunpack.c.h.b16 %v366
    %v1535 = vunpack.c.l.b16 %v367
    %v1536 = vunpack.c.h.b16 %v367
    %v1537 = vunpack.c.l.b16 %v368
    %v1538 = vunpack.c.h.b16 %v368
    %v1539 = vunpack.c.l.b16 %v369
    %v1540 = vunpack.c.h.b16 %v369
    %v1541 = vunpack.c.l.b16 %v370
    %v1542 = vunpack.c.h.b16 %v370
    %v1543 = vunpack.c.l.b16 %v371
    %v1544 = vunpack.c.h.b16 %v371
    %v1545 = vunpack.c.l.b16 %v372
    %v1546 = vunpack.c.h.b16 %v372
    %v1547 = vunpack.c.l.b16 %v373
    %v1548 = vunpack.c.h.b16 %v373
    %v1549 = vunpack.c.l.b16 %v374
    %v1550 = vunpack.c.h.b16 %v374
    %v1551 = vunpack.c.l.b16 %v375
    %v1552 = vunpack.c.h.b16 %v375
    %v1553 = vunpack.c.l.b16 %v376
    %v1554 = vunpack.c.h.b16 %v376
    %v1555 = vunpack.c.l.b16 %v377
    %v1556 = vunpack.c.h.b16 %v377
    %v1557 = vunpack.c.l.b16 %v378
    %v1558 = vunpack.c.h.b16 %v378
    %v1559 = vunpack.c.l.b16 %v379
    %v1560 = vunpack.c.h.b16 %v379
    %v1561 = vunpack.c.l.b16 %v380
    %v1562 = vunpack.c.h.b16 %v380
    %v1563 = vunpack.c.l.b16 %v381
    %v1564 = vunpack.c.h.b16 %v381
    %v1565 = vunpack.c.l.b16 %v382
    %v1566 = vunpack.c.h.b16 %v382
    %v1567 = vunpack.c.l.b16 %v383
    %v1568 = vunpack.c.h.b16 %v383
    %v1569 = vunpack.c.l.b16 %v384
    %v1570 = vunpack.c.h.b16 %v384
    %v1571 = vunpack.c.l.b16 %v385
    %v1572 = vunpack.c.h.b16 %v385
    %v1573 = vunpack.c.l.b16 %v386
    %v1574 = vunpack.c.h.b16 %v386
    %v1575 = vunpack.c.l.b16 %v387
    %v1576 = vunpack.c.h.b16 %v387
    %v1577 = vunpack.c.l.b16 %v388
    %v1578 = vunpack.c.h.b16 %v388
    %v1579 = vunpack.c.l.b16 %v389
    %v1580 = vunpack.c.h.b16 %v389
    %v1581 = vunpack.c.l.b16 %v390
    %v1582 = vunpack.c.h.b16 %v390
    %v1583 = vunpack.c.l.b16 %v391
    %v1584 = vunpack.c.h.b16 %v391
    %v1585 = vunpack.c.l.b16 %v392
    %v1586 = vunpack.c.h.b16 %v392
    %v1587 = vunpack.c.l.b16 %v393
    %v1588 = vunpack.c.h.b16 %v393
    %v1589 = vunpack.c.l.b16 %v394
    %v1590 = vunpack.c.h.b16 %v394
    %v1591 = vunpack.c.l.b16 %v395
    %v1592 = vunpack.c.h.b16 %v395
    %v1593 = vunpack.c.l.b16 %v396
    %v1594 = vunpack.c.h.b16 %v396
    %v1595 = vunpack.c.l.b16 %v397
    %v1596 = vunpack.c.h.b16 %v397
    %v1597 = vunpack.c.l.b16 %v398
    %v1598 = vunpack.c.h.b16 %v398
    %v1599 = vunpack.c.l.b16 %v399
    %v1600 = vunpack.c.h.b16 %v399
    %v1601 = vunpack.c.l.b16 %v400
    %v1602 = vunpack.c.h.b16 %v400
    %v1603 = vunpack.c.l.b16 %v401
    %v1604 = vunpack.c.h.b16 %v401
    %v1605 = vunpack.c.l.b16 %v402
    %v1606 = vunpack.c.h.b16 %v402
    %v1607 = vunpack.c.l.b16 %v403
    %v1608 = vunpack.c.h.b16 %v403
    %v1609 = vunpack.c.l.b16 %v404
    %v1610 = vunpack.c.h.b16 %v404
    %v1611 = vunpack.c.l.b16 %v405
    %v1612 = vunpack.c.h.b16 %v405
    %v1613 = vunpack.c.l.b16 %v406
    %v1614 = vunpack.c.h.b16 %v406
    %v1615 = vunpack.c.l.b16 %v407
    %v1616 = vunpack.c.h.b16 %v407
    %v1617 = vunpack.c.l.b16 %v408
    %v1618 = vunpack.c.h.b16 %v408
    %v1619 = vunpack.c.l.b16 %v409
    %v1620 = vunpack.c.h.b16 %v409
    %v1621 = vunpack.c.l.b16 %v410
    %v1622 = vunpack.c.h.b16 %v410
    %v1623 = vunpack.c.l.b16 %v411
    %v1624 = vunpack.c.h.b16 %v411
    %v1625 = vunpack.c.l.b16 %v412
    %v1626 = vunpack.c.h.b16 %v412
    %v1627 = vunpack.c.l.b16 %v413
    %v1628 = vunpack.c.h.b16 %v413
    %v1629 = vunpack.c.l.b16 %v414
    %v1630 = vunpack.c.h.b16 %v414
    %v1631 = vunpack.c.l.b16 %v415
    %v1632 = vunpack.c.h.b16 %v415
    %v1633 = vunpack.c.l.b16 %v416
    %v1634 = vunpack.c.h.b16 %v416
    %v1635 = vunpack.c.l.b16 %v417
    %v1636 = vunpack.c.h.b16 %v417
    %v1637 = vunpack.c.l.b16 %v418
    %v1638 = vunpack.c.h.b16 %v418
    %v1639 = vunpack.c.l.b16 %v419
    %v1640 = vunpack.c.h.b16 %v419
    %v1641 = vunpack.c.l.b16 %v420
    %v1642 = vunpack.c.h.b16 %v420
    %v1643 = vunpack.c.l.b16 %v421
    %v1644 = vunpack.c.h.b16 %v421
    %v1645 = vunpack.c.l.b16 %v422
    %v1646 = vunpack.c.h.b16 %v422
    %v1647 = vunpack.c.l.b16 %v423
    %v1648 = vunpack.c.h.b16 %v423
    %v1649 = vunpack.c.l.b16 %v424
    %v1650 = vunpack.c.h.b16 %v424
    %v1651 = vunpack.c.l.b16 %v425
    %v1652 = vunpack.c.h.b16 %v425
    %v1653 = vunpack.c.l.b16 %v426
    %v1654 = vunpack.c.h.b16 %v426
    %v1655 = vunpack.c.l.b16 %v427
    %v1656 = vunpack.c.h.b16 %v427
    %v1657 = vunpack.c.l.b16 %v428
    %v1658 = vunpack.c.h.b16 %v428
    %v1659 = vunpack.c.l.b16 %v429
    %v1660 = vunpack.c.h.b16 %v429
    %v1661 = vunpack.c.l.b16 %v430
    %v1662 = vunpack.c.h.b16 %v430
    %v1663 = vunpack.c.l.b16 %v431
    %v1664 = vunpack.c.h.b16 %v431
    %v1665 = vunpack.c.l.b16 %v432
    %v1666 = vunpack.c.h.b16 %v432
    %v1667 = vunpack.c.l.b16 %v433
    %v1668 = vunpack.c.h.b16 %v433
    %v1669 = vunpack.c.l.b16 %v434
    %v1670 = vunpack.c.h.b16 %v434
    %v1671 = vunpack.c.l.b16 %v435
    %v1672 = vunpack.c.h.b16 %v435
    %v1673 = vunpack.c.l.b16 %v436
    %v1674 = vunpack.c.h.b16 %v436
    %v1675 = vunpack.c.l.b16 %v437
    %v1676 = vunpack.c.h.b16 %v437
    %v1677 = vunpack.c.l.b16 %v438
    %v1678 = vunpack.c.h.b16 %v438
    %v1679 = vunpack.c.l.b16 %v439
    %v1680 = vunpack.c.h.b16 %v439
    %v1681 = vunpack.c.l.b16 %v440
    %v1682 = vunpack.c.h.b16 %v440
    %v1683 = vunpack.c.l.b16 %v441
    %v1684 = vunpack.c.h.b16 %v441
    %v1685 = vunpack.c.l.b16 %v442
    %v1686 = vunpack.c.h.b16 %v442
    %v1687 = vunpack.c.l.b16 %v443
    %v1688 = vunpack.c.h.b16 %v443
    %v1689 = vunpack.c.l.b16 %v444
    %v1690 = vunpack.c.h.b16 %v444
    %v1691 = vunpack.c.l.b16 %v445
    %v1692 = vunpack.c.h.b16 %v445
    %v1693 = vunpack.c.l.b16 %v446
    %v1694 = vunpack.c.h.b16 %v446
    %v1695 = vunpack.c.l.b16 %v447
    %v1696 = vunpack.c.h.b16 %v447
    %v1697 = vunpack.c.l.b16 %v448
    %v1698 = vunpack.c.h.b16 %v448
    %v1699 = vunpack.c.l.b16 %v449
    %v1700 = vunpack.c.h.b16 %v449
    %v1701 = vunpack.c.l.b16 %v450
    %v1702 = vunpack.c.h.b16 %v450
    %v1703 = vunpack.c.l.b16 %v451
    %v1704 = vunpack.c.h.b16 %v451
    %v1705 = vunpack.c.l.b16 %v452
    %v1706 = vunpack.c.h.b16 %v452
    %v1707 = vunpack.c.l.b16 %v453
    %v1708 = vunpack.c.h.b16 %v453
    %v1709 = vunpack.c.l.b16 %v454
    %v1710 = vunpack.c.h.b16 %v454
    %v1711 = vunpack.c.l.b16 %v455
    %v1712 = vunpack.c.h.b16 %v455
    %v1713 = vunpack.c.l.b16 %v456
    %v1714 = vunpack.c.h.b16 %v456
    %v1715 = vunpack.c.l.b16 %v457
    %v1716 = vunpack.c.h.b16 %v457
    %v1717 = vunpack.c.l.b16 %v458
    %v1718 = vunpack.c.h.b16 %v458
    %v1719 = vunpack.c.l.b16 %v459
    %v1720 = vunpack.c.h.b16 %v459
    %v1721 = vunpack.c.l.b16 %v460
    %v1722 = vunpack.c.h.b16 %v460
    %v1723 = vunpack.c.l.b16 %v461
    %v1724 = vunpack.c.h.b16 %v461
    %v1725 = vunpack.c.l.b16 %v462
    %v1726 = vunpack.c.h.b16 %v462
    %v1727 = vunpack.c.l.b16 %v463
    %v1728 = vunpack.c.h.b16 %v463
    %v1729 = vunpack.c.l.b16 %v464
    %v1730 = vunpack.c.h.b16 %v464
    %v1731 = vunpack.c.l.b16 %v465
    %v1732 = vunpack.c.h.b16 %v465
    %v1733 = vunpack.c.l.b16 %v466
    %v1734 = vunpack.c.h.b16 %v466
    %v1735 = vunpack.c.l.b16 %v467
    %v1736 = vunpack.c.h.b16 %v467
    %v1737 = vunpack.c.l.b16 %v468
    %v1738 = vunpack.c.h.b16 %v468
    %v1739 = vunpack.c.l.b16 %v469
    %v1740 = vunpack.c.h.b16 %v469
    %v1741 = vunpack.c.l.b16 %v470
    %v1742 = vunpack.c.h.b16 %v470
    %v1743 = vunpack.c.l.b16 %v471
    %v1744 = vunpack.c.h.b16 %v471
    %v1745 = vunpack.c.l.b16 %v472
    %v1746 = vunpack.c.h.b16 %v472
    %v1747 = vunpack.c.l.b16 %v473
    %v1748 = vunpack.c.h.b16 %v473
    %v1749 = vunpack.c.l.b16 %v474
    %v1750 = vunpack.c.h.b16 %v474
    %v1751 = vunpack.c.l.b16 %v475
    %v1752 = vunpack.c.h.b16 %v475
    %v1753 = vunpack.c.l.b16 %v476
    %v1754 = vunpack.c.h.b16 %v476
    %v1755 = vunpack.c.l.b16 %v477
    %v1756 = vunpack.c.h.b16 %v477
    %v1757 = vunpack.c.l.b16 %v478
    %v1758 = vunpack.c.h.b16 %v478
    %v1759 = vunpack.c.l.b16 %v479
    %v1760 = vunpack.c.h.b16 %v479
    %v1761 = vunpack.c.l.b16 %v480
    %v1762 = vunpack.c.h.b16 %v480
    %v1763 = vunpack.c.l.b16 %v481
    %v1764 = vunpack.c.h.b16 %v481
    %v1765 = vunpack.c.l.b16 %v482
    %v1766 = vunpack.c.h.b16 %v482
    %v1767 = vunpack.c.l.b16 %v483
    %v1768 = vunpack.c.h.b16 %v483
    %v1769 = vunpack.c.l.b16 %v484
    %v1770 = vunpack.c.h.b16 %v484
    %v1771 = vunpack.c.l.b16 %v485
    %v1772 = vunpack.c.h.b16 %v485
    %v1773 = vunpack.c.l.b16 %v486
    %v1774 = vunpack.c.h.b16 %v486
    %v1775 = vunpack.c.l.b16 %v487
    %v1776 = vunpack.c.h.b16 %v487
    %v1777 = vunpack.c.l.b16 %v488
    %v1778 = vunpack.c.h.b16 %v488
    %v1779 = vunpack.c.l.b16 %v489
    %v1780 = vunpack.c.h.b16 %v489
    %v1781 = vunpack.c.l.b16 %v490
    %v1782 = vunpack.c.h.b16 %v490
    %v1783 = vunpack.c.l.b16 %v491
    %v1784 = vunpack.c.h.b16 %v491
    %v1785 = vunpack.c.l.b16 %v492
    %v1786 = vunpack.c.h.b16 %v492
    %v1787 = vunpack.c.l.b16 %v493
    %v1788 = vunpack.c.h.b16 %v493
    %v1789 = vunpack.c.l.b16 %v494
    %v1790 = vunpack.c.h.b16 %v494
    %v1791 = vunpack.c.l.b16 %v495
    %v1792 = vunpack.c.h.b16 %v495
    %v1793 = vunpack.c.l.b16 %v496
    %v1794 = vunpack.c.h.b16 %v496
    %v1795 = vunpack.c.l.b16 %v497
    %v1796 = vunpack.c.h.b16 %v497
    %v1797 = vunpack.c.l.b16 %v498
    %v1798 = vunpack.c.h.b16 %v498
    %v1799 = vunpack.c.l.b16 %v499
    %v1800 = vunpack.c.h.b16 %v499
    %v1801 = vunpack.c.l.b16 %v500
    %v1802 = vunpack.c.h.b16 %v500
    %v1803 = vunpack.c.l.b16 %v501
    %v1804 = vunpack.c.h.b16 %v501
    %v1805 = vunpack.c.l.b16 %v502
    %v1806 = vunpack.c.h.b16 %v502
    %v1807 = vunpack.c.l.b16 %v503
    %v1808 = vunpack.c.h.b16 %v503
    %v1809 = vunpack.c.l.b16 %v504
    %v1810 = vunpack.c.h.b16 %v504
    %v1811 = vunpack.c.l.b16 %v505
    %v1812 = vunpack.c.h.b16 %v505
    %v1813 = vunpack.c.l.b16 %v506
    %v1814 = vunpack.c.h.b16 %v506
    %v1815 = vunpack.c.l.b16 %v507
    %v1816 = vunpack.c.h.b16 %v507
    %v1817 = vunpack.c.l.b16 %v508
    %v1818 = vunpack.c.h.b16 %v508
    %v1819 = vunpack.c.l.b16 %v509
    %v1820 = vunpack.c.h.b16 %v509
    %v1821 = vunpack.c.l.b16 %v510
    %v1822 = vunpack.c.h.b16 %v510
    %v1823 = vunpack.c.l.b16 %v511
    %v1824 = vunpack.c.h.b16 %v511
    %v1825 = vunpack.c.l.b16 %v512
    %v1826 = vunpack.c.h.b16 %v512
    %v1827 = vunpack.c.l.b16 %v513
    %v1828 = vunpack.c.h.b16 %v513
    %v1829 = vunpack.c.l.b16 %v514
    %v1830 = vunpack.c.h.b16 %v514
    %v1831 = vunpack.c.l.b16 %v515
    %v1832 = vunpack.c.h.b16 %v515
    %v1833 = vunpack.c.l.b16 %v516
    %v1834 = vunpack.c.h.b16 %v516
    %v1835 = vunpack.c.l.b16 %v517
    %v1836 = vunpack.c.h.b16 %v517
    %v1837 = vunpack.c.l.b16 %v518
    %v1838 = vunpack.c.h.b16 %v518
    %v1839 = vunpack.c.l.b16 %v519
    %v1840 = vunpack.c.h.b16 %v519
    %v1841 = vunpack.c.l.b16 %v520
    %v1842 = vunpack.c.h.b16 %v520
    %v1843 = vunpack.c.l.b16 %v521
    %v1844 = vunpack.c.h.b16 %v521
    %v1845 = vunpack.c.l.b16 %v522
    %v1846 = vunpack.c.h.b16 %v522
    %v1847 = vunpack.c.l.b16 %v523
    %v1848 = vunpack.c.h.b16 %v523
    %v1849 = vunpack.c.l.b16 %v524
    %v1850 = vunpack.c.h.b16 %v524
    %v1851 = vunpack.c.l.b16 %v525
    %v1852 = vunpack.c.h.b16 %v525
    %v1853 = vunpack.c.l.b16 %v526
    %v1854 = vunpack.c.h.b16 %v526
    %v1855 = vunpack.c.l.b16 %v527
    %v1856 = vunpack.c.h.b16 %v527
    %v1857 = vunpack.c.l.b16 %v528
    %v1858 = vunpack.c.h.b16 %v528
    %v1859 = vunpack.c.l.b16 %v529
    %v1860 = vunpack.c.h.b16 %v529
    %v1861 = vunpack.c.l.b16 %v530
    %v1862 = vunpack.c.h.b16 %v530
    %v1863 = vunpack.c.l.b16 %v531
    %v1864 = vunpack.c.h.b16 %v531
    %v1865 = vunpack.c.l.b16 %v532
    %v1866 = vunpack.c.h.b16 %v532
    %v1867 = vunpack.c.l.b16 %v533
    %v1868 = vunpack.c.h.b16 %v533
    %v1869 = vunpack.c.l.b16 %v534
    %v1870 = vunpack.c.h.b16 %v534
    %v1871 = vunpack.c.l.b16 %v535
    %v1872 = vunpack.c.h.b16 %v535
    %v1873 = vunpack.c.l.b16 %v536
    %v1874 = vunpack.c.h.b16 %v536
    %v1875 = vunpack.c.l.b16 %v537
    %v1876 = vunpack.c.h.b16 %v537
    %v1877 = vunpack.c.l.b16 %v538
    %v1878 = vunpack.c.h.b16 %v538
    %v1879 = vunpack.c.l.b16 %v539
    %v1880 = vunpack.c.h.b16 %v539
    %v1881 = vunpack.c.l.b16 %v540
    %v1882 = vunpack.c.h.b16 %v540
    %v1883 = vunpack.c.l.b16 %v541
    %v1884 = vunpack.c.h.b16 %v541
    %v1885 = vunpack.c.l.b16 %v542
    %v1886 = vunpack.c.h.b16 %v542
    %v1887 = vunpack.c.l.b16 %v543
    %v1888 = vunpack.c.h.b16 %v543
    %v1889 = vunpack.c.l.b16 %v544
    %v1890 = vunpack.c.h.b16 %v544
    %v1891 = vunpack.c.l.b16 %v545
    %v1892 = vunpack.c.h.b16 %v545
    %v1893 = vunpack.c.l.b16 %v546
    %v1894 = vunpack.c.h.b16 %v546
    %v1895 = vunpack.c.l.b16 %v547
    %v1896 = vunpack.c.h.b16 %v547
    %v1897 = vunpack.c.l.b16 %v548
    %v1898 = vunpack.c.h.b16 %v548
    %v1899 = vunpack.c.l.b16 %v549
    %v1900 = vunpack.c.h.b16 %v549
    %v1901 = vunpack.c.l.b16 %v550
    %v1902 = vunpack.c.h.b16 %v550
    %v1903 = vunpack.c.l.b16 %v551
    %v1904 = vunpack.c.h.b16 %v551
    %v1905 = vunpack.c.l.b16 %v552
    %v1906 = vunpack.c.h.b16 %v552
    %v1907 = vunpack.c.l.b16 %v553
    %v1908 = vunpack.c.h.b16 %v553
    %v1909 = vunpack.c.l.b16 %v554
    %v1910 = vunpack.c.h.b16 %v554
    %v1911 = vunpack.c.l.b16 %v555
    %v1912 = vunpack.c.h.b16 %v555
    %v1913 = vunpack.c.l.b16 %v556
    %v1914 = vunpack.c.h.b16 %v556
    %v1915 = vunpack.c.l.b16 %v557
    %v1916 = vunpack.c.h.b16 %v557
    %v1917 = vunpack.c.l.b16 %v558
    %v1918 = vunpack.c.h.b16 %v558
    %v1919 = vunpack.c.l.b16 %v559
    %v1920 = vunpack.c.h.b16 %v559
    %v1921 = vunpack.c.l.b16 %v560
    %v1922 = vunpack.c.h.b16 %v560
    %v1923 = vunpack.c.l.b16 %v561
    %v1924 = vunpack.c.h.b16 %v561
    %v1925 = vunpack.c.l.b16 %v562
    %v1926 = vunpack.c.h.b16 %v562
    %v1927 = vunpack.c.l.b16 %v563
    %v1928 = vunpack.c.h.b16 %v563
    %v1929 = vunpack.c.l.b16 %v564
    %v1930 = vunpack.c.h.b16 %v564
    %v1931 = vunpack.c.l.b16 %v565
    %v1932 = vunpack.c.h.b16 %v565
    %v1933 = vunpack.c.l.b16 %v566
    %v1934 = vunpack.c.h.b16 %v566
    %v1935 = vunpack.c.l.b16 %v567
    %v1936 = vunpack.c.h.b16 %v567
    %v1937 = vunpack.c.l.b16 %v568
    %v1938 = vunpack.c.h.b16 %v568
    %v1939 = vunpack.c.l.b16 %v569
    %v1940 = vunpack.c.h.b16 %v569
    %v1941 = vunpack.c.l.b16 %v570
    %v1942 = vunpack.c.h.b16 %v570
    %v1943 = vunpack.c.l.b16 %v571
    %v1944 = vunpack.c.h.b16 %v571
    %v1945 = vunpack.c.l.b16 %v572
    %v1946 = vunpack.c.h.b16 %v572
    %v1947 = vunpack.c.l.b16 %v573
    %v1948 = vunpack.c.h.b16 %v573
    %v1949 = vunpack.c.l.b16 %v574
    %v1950 = vunpack.c.h.b16 %v574
    %v1951 = vunpack.c.l.b16 %v575
    %v1952 = vunpack.c.h.b16 %v575
    %v1953 = vunpack.c.l.b16 %v576
    %v1954 = vunpack.c.h.b16 %v576
    %v1955 = vunpack.c.l.b16 %v577
    %v1956 = vunpack.c.h.b16 %v577
    %v1957 = vunpack.c.l.b16 %v578
    %v1958 = vunpack.c.h.b16 %v578
    %v1959 = vunpack.c.l.b16 %v579
    %v1960 = vunpack.c.h.b16 %v579
    %v1961 = vunpack.c.l.b16 %v580
    %v1962 = vunpack.c.h.b16 %v580
    %v1963 = vunpack.c.l.b16 %v581
    %v1964 = vunpack.c.h.b16 %v581
    %v1965 = vunpack.c.l.b16 %v582
    %v1966 = vunpack.c.h.b16 %v582
    %v1967 = vunpack.c.l.b16 %v583
    %v1968 = vunpack.c.h.b16 %v583
    %v1969 = vunpack.c.l.b16 %v584
    %v1970 = vunpack.c.h.b16 %v584
    %v1971 = vunpack.c.l.b16 %v585
    %v1972 = vunpack.c.h.b16 %v585
    %v1973 = vunpack.c.l.b16 %v586
    %v1974 = vunpack.c.h.b16 %v586
    %v1975 = vunpack.c.l.b16 %v587
    %v1976 = vunpack.c.h.b16 %v587
    %v1977 = vunpack.c.l.b16 %v588
    %v1978 = vunpack.c.h.b16 %v588
    %v1979 = vunpack.c.l.b16 %v589
    %v1980 = vunpack.c.h.b16 %v589
    %v1981 = vunpack.c.l.b16 %v590
    %v1982 = vunpack.c.h.b16 %v590
    %v1983 = vunpack.c.l.b16 %v591
    %v1984 = vunpack.c.h.b16 %v591
    %v1985 = vunpack.c.l.b16 %v592
    %v1986 = vunpack.c.h.b16 %v592
    %v1987 = vunpack.c.l.b16 %v593
    %v1988 = vunpack.c.h.b16 %v593
    %v1989 = vunpack.c.l.b16 %v594
    %v1990 = vunpack.c.h.b16 %v594
    %v1991 = vunpack.c.l.b16 %v595
    %v1992 = vunpack.c.h.b16 %v595
    %v1993 = vunpack.c.l.b16 %v596
    %v1994 = vunpack.c.h.b16 %v596
    %v1995 = vunpack.c.l.b16 %v597
    %v1996 = vunpack.c.h.b16 %v597
    %v1997 = vunpack.c.l.b16 %v598
    %v1998 = vunpack.c.h.b16 %v598
    %v1999 = vunpack.c.l.b16 %v599
    %v2000 = vunpack.c.h.b16 %v599
    %v2001 = vunpack.c.l.b16 %v600
    %v2002 = vunpack.c.h.b16 %v600
    %v2003 = vunpack.c.l.b16 %v601
    %v2004 = vunpack.c.h.b16 %v601
    %v2005 = vunpack.c.l.b16 %v602
    %v2006 = vunpack.c.h.b16 %v602
    %v2007 = vunpack.c.l.b16 %v603
    %v2008 = vunpack.c.h.b16 %v603
    %v2009 = vunpack.c.l.b16 %v604
    %v2010 = vunpack.c.h.b16 %v604
    %v2011 = vunpack.c.l.b16 %v605
    %v2012 = vunpack.c.h.b16 %v605
    %v2013 = vunpack.c.l.b16 %v606
    %v2014 = vunpack.c.h.b16 %v606
    %v2015 = vunpack.c.l.b16 %v607
    %v2016 = vunpack.c.h.b16 %v607
    %v2017 = vunpack.c.l.b16 %v608
    %v2018 = vunpack.c.h.b16 %v608
    %v2019 = vunpack.c.l.b16 %v609
    %v2020 = vunpack.c.h.b16 %v609
    %v2021 = vunpack.c.l.b16 %v610
    %v2022 = vunpack.c.h.b16 %v610
    %v2023 = vunpack.c.l.b16 %v611
    %v2024 = vunpack.c.h.b16 %v611
    %v2025 = vunpack.c.l.b16 %v612
    %v2026 = vunpack.c.h.b16 %v612
    %v2027 = vunpack.c.l.b16 %v613
    %v2028 = vunpack.c.h.b16 %v613
    %v2029 = vunpack.c.l.b16 %v614
    %v2030 = vunpack.c.h.b16 %v614
    %v2031 = vunpack.c.l.b16 %v615
    %v2032 = vunpack.c.h.b16 %v615
    %v2033 = vunpack.c.l.b16 %v616
    %v2034 = vunpack.c.h.b16 %v616
    %v2035 = vunpack.c.l.b16 %v617
    %v2036 = vunpack.c.h.b16 %v617
    %v2037 = vunpack.c.l.b16 %v618
    %v2038 = vunpack.c.h.b16 %v618
    %v2039 = vunpack.c.l.b16 %v619
    %v2040 = vunpack.c.h.b16 %v619
    %v2041 = vunpack.c.l.b16 %v620
    %v2042 = vunpack.c.h.b16 %v620
    %v2043 = vpack.c.b16 %v1155, %v1147
    %v2044 = vpack.c.b16 %v1156, %v1148
    %v2045 = vpack.c.b16 %v1157, %v1149
    %v2046 = vpack.c.b16 %v1158, %v1150
    %v2047 = vpack.c.b16 %v1159, %v1151
    %v2048 = vpack.c.b16 %v1160, %v1152
    %v2049 = vpack.c.b16 %v1161, %v1153
    %v2050 = vpack.c.b16 %v1162, %v1154
    %v2051 = vpack.c.b16 %v1171, %v1163
    %v2052 = vpack.c.b16 %v1172, %v1164
    %v2053 = vpack.c.b16 %v1173, %v1165
    %v2054 = vpack.c.b16 %v1174, %v1166
    %v2055 = vpack.c.b16 %v1175, %v1167
    %v2056 = vpack.c.b16 %v1176, %v1168
    %v2057 = vpack.c.b16 %v1177, %v1169
    %v2058 = vpack.c.b16 %v1178, %v1170
    %v2059 = vpack.c.b16 %v1187, %v1179
    %v2060 = vpack.c.b16 %v1188, %v1180
    %v2061 = vpack.c.b16 %v1189, %v1181
    %v2062 = vpack.c.b16 %v1190, %v1182
    %v2063 = vpack.c.b16 %v1191, %v1183
    %v2064 = vpack.c.b16 %v1192, %v1184
    %v2065 = vpack.c.b16 %v1193, %v1185
    %v2066 = vpack.c.b16 %v1194, %v1186
    %v2067 = vpack.c.b16 %v1203, %v1195
    %v2068 = vpack.c.b16 %v1204, %v1196
    %v2069 = vpack.c.b16 %v1205, %v1197
    %v2070 = vpack.c.b16 %v1206, %v1198
    %v2071 = vpack.c.b16 %v1207, %v1199
    %v2072 = vpack.c.b16 %v1208, %v1200
    %v2073 = vpack.c.b16 %v1209, %v1201
    %v2074 = vpack.c.b16 %v1210, %v1202
    %v2075 = vpack.c.b16 %v1219, %v1211
    %v2076 = vpack.c.b16 %v1220, %v1212
    %v2077 = vpack.c.b16 %v1221, %v1213
    %v2078 = vpack.c.b16 %v1222, %v1214
    %v2079 = vpack.c.b16 %v1223, %v1215
    %v2080 = vpack.c.b16 %v1224, %v1216
    %v2081 = vpack.c.b16 %v1225, %v1217
    %v2082 = vpack.c.b16 %v1226, %v1218
    %v2083 = vpack.c.b16 %v1235, %v1227
    %v2084 = vpack.c.b16 %v1236, %v1228
    %v2085 = vpack.c.b16 %v1237, %v1229
    %v2086 = vpack.c.b16 %v1238, %v1230
    %v2087 = vpack.c.b16 %v1239, %v1231
    %v2088 = vpack.c.b16 %v1240, %v1232
    %v2089 = vpack.c.b16 %v1241, %v1233
    %v2090 = vpack.c.b16 %v1242, %v1234
    %v2091 = vpack.c.b16 %v1251, %v1243
    %v2092 = vpack.c.b16 %v1252, %v1244
    %v2093 = vpack.c.b16 %v1253, %v1245
    %v2094 = vpack.c.b16 %v1254, %v1246
    %v2095 = vpack.c.b16 %v1255, %v1247
    %v2096 = vpack.c.b16 %v1256, %v1248
    %v2097 = vpack.c.b16 %v1257, %v1249
    %v2098 = vpack.c.b16 %v1258, %v1250
    %v2099 = vpack.c.b16 %v1267, %v1259
    %v2100 = vpack.c.b16 %v1268, %v1260
    %v2101 = vpack.c.b16 %v1269, %v1261
    %v2102 = vpack.c.b16 %v1270, %v1262
    %v2103 = vpack.c.b16 %v1271, %v1263
    %v2104 = vpack.c.b16 %v1272, %v1264
    %v2105 = vpack.c.b16 %v1273, %v1265
    %v2106 = vpack.c.b16 %v1274, %v1266
    %v2107 = vpack.c.b16 %v1283, %v1275
    %v2108 = vpack.c.b16 %v1284, %v1276
    %v2109 = vpack.c.b16 %v1285, %v1277
    %v2110 = vpack.c.b16 %v1286, %v1278
    %v2111 = vpack.c.b16 %v1287, %v1279
    %v2112 = vpack.c.b16 %v1288, %v1280
    %v2113 = vpack.c.b16 %v1289, %v1281
    %v2114 = vpack.c.b16 %v1290, %v1282
    %v2115 = vpack.c.b16 %v1299, %v1291
    %v2116 = vpack.c.b16 %v1300, %v1292
    %v2117 = vpack.c.b16 %v1301, %v1293
    %v2118 = vpack.c.b16 %v1302, %v1294
    %v2119 = vpack.c.b16 %v1303, %v1295
    %v2120 = vpack.c.b16 %v1304, %v1296
    %v2121 = vpack.c.b16 %v1305, %v1297
    %v2122 = vpack.c.b16 %v1306, %v1298
    %v2123 = vpack.c.b16 %v1315, %v1307
    %v2124 = vpack.c.b16 %v1316, %v1308
    %v2125 = vpack.c.b16 %v1317, %v1309
    %v2126 = vpack.c.b16 %v1318, %v1310
    %v2127 = vpack.c.b16 %v1319, %v1311
    %v2128 = vpack.c.b16 %v1320, %v1312
    %v2129 = vpack.c.b16 %v1321, %v1313
    %v2130 = vpack.c.b16 %v1322, %v1314
    %v2131 = vpack.c.b16 %v1331, %v1323
    %v2132 = vpack.c.b16 %v1332, %v1324
    %v2133 = vpack.c.b16 %v1333, %v1325
    %v2134 = vpack.c.b16 %v1334, %v1326
    %v2135 = vpack.c.b16 %v1335, %v1327
    %v2136 = vpack.c.b16 %v1336, %v1328
    %v2137 = vpack.c.b16 %v1337, %v1329
    %v2138 = vpack.c.b16 %v1338, %v1330
    %v2139 = vpack.c.b16 %v1347, %v1339
    %v2140 = vpack.c.b16 %v1348, %v1340
    %v2141 = vpack.c.b16 %v1349, %v1341
    %v2142 = vpack.c.b16 %v1350, %v1342
    %v2143 = vpack.c.b16 %v1351, %v1343
    %v2144 = vpack.c.b16 %v1352, %v1344
    %v2145 = vpack.c.b16 %v1353, %v1345
    %v2146 = vpack.c.b16 %v1354, %v1346
    %v2147 = vpack.c.b16 %v1363, %v1355
    %v2148 = vpack.c.b16 %v1364, %v1356
    %v2149 = vpack.c.b16 %v1365, %v1357
    %v2150 = vpack.c.b16 %v1366, %v1358
    %v2151 = vpack.c.b16 %v1367, %v1359
    %v2152 = vpack.c.b16 %v1368, %v1360
    %v2153 = vpack.c.b16 %v1369, %v1361
    %v2154 = vpack.c.b16 %v1370, %v1362
    %v2155 = vpack.c.b16 %v1379, %v1371
    %v2156 = vpack.c.b16 %v1380, %v1372
    %v2157 = vpack.c.b16 %v1381, %v1373
    %v2158 = vpack.c.b16 %v1382, %v1374
    %v2159 = vpack.c.b16 %v1383, %v1375
    %v2160 = vpack.c.b16 %v1384, %v1376
    %v2161 = vpack.c.b16 %v1385, %v1377
    %v2162 = vpack.c.b16 %v1386, %v1378
    %v2163 = vpack.c.b16 %v1395, %v1387
    %v2164 = vpack.c.b16 %v1396, %v1388
    %v2165 = vpack.c.b16 %v1397, %v1389
    %v2166 = vpack.c.b16 %v1398, %v1390
    %v2167 = vpack.c.b16 %v1399, %v1391
    %v2168 = vpack.c.b16 %v1400, %v1392
    %v2169 = vpack.c.b16 %v1401, %v1393
    %v2170 = vpack.c.b16 %v1402, %v1394
    %v2171 = vpack.c.b16 %v1411, %v1403
    %v2172 = vpack.c.b16 %v1412, %v1404
    %v2173 = vpack.c.b16 %v1413, %v1405
    %v2174 = vpack.c.b16 %v1414, %v1406
    %v2175 = vpack.c.b16 %v1415, %v1407
    %v2176 = vpack.c.b16 %v1416, %v1408
    %v2177 = vpack.c.b16 %v1417, %v1409
    %v2178 = vpack.c.b16 %v1418, %v1410
    %v2179 = vpack.c.b16 %v1427, %v1419
    %v2180 = vpack.c.b16 %v1428, %v1420
    %v2181 = vpack.c.b16 %v1429, %v1421
    %v2182 = vpack.c.b16 %v1430, %v1422
    %v2183 = vpack.c.b16 %v1431, %v1423
    %v2184 = vpack.c.b16 %v1432, %v1424
    %v2185 = vpack.c.b16 %v1433, %v1425
    %v2186 = vpack.c.b16 %v1434, %v1426
    %v2187 = vpack.c.b16 %v1443, %v1435
    %v2188 = vpack.c.b16 %v1444, %v1436
    %v2189 = vpack.c.b16 %v1445, %v1437
    %v2190 = vpack.c.b16 %v1446, %v1438
    %v2191 = vpack.c.b16 %v1447, %v1439
    %v2192 = vpack.c.b16 %v1448, %v1440
    %v2193 = vpack.c.b16 %v1449, %v1441
    %v2194 = vpack.c.b16 %v1450, %v1442
    %v2195 = vpack.c.b16 %v1459, %v1451
    %v2196 = vpack.c.b16 %v1460, %v1452
    %v2197 = vpack.c.b16 %v1461, %v1453
    %v2198 = vpack.c.b16 %v1462, %v1454
    %v2199 = vpack.c.b16 %v1463, %v1455
    %v2200 = vpack.c.b16 %v1464, %v1456
    %v2201 = vpack.c.b16 %v1465, %v1457
    %v2202 = vpack.c.b16 %v1466, %v1458
    %v2203 = vpack.c.b16 %v1475, %v1467
    %v2204 = vpack.c.b16 %v1476, %v1468
    %v2205 = vpack.c.b16 %v1477, %v1469
    %v2206 = vpack.c.b16 %v1478, %v1470
    %v2207 = vpack.c.b16 %v1479, %v1471
    %v2208 = vpack.c.b16 %v1480, %v1472
    %v2209 = vpack.c.b16 %v1481, %v1473
    %v2210 = vpack.c.b16 %v1482, %v1474
    %v2211 = vpack.c.b16 %v1491, %v1483
    %v2212 = vpack.c.b16 %v1492, %v1484
    %v2213 = vpack.c.b16 %v1493, %v1485
    %v2214 = vpack.c.b16 %v1494, %v1486
    %v2215 = vpack.c.b16 %v1495, %v1487
    %v2216 = vpack.c.b16 %v1496, %v1488
    %v2217 = vpack.c.b16 %v1497, %v1489
    %v2218 = vpack.c.b16 %v1498, %v1490
    %v2219 = vpack.c.b16 %v1507, %v1499
    %v2220 = vpack.c.b16 %v1508, %v1500
    %v2221 = vpack.c.b16 %v1509, %v1501
    %v2222 = vpack.c.b16 %v1510, %v1502
    %v2223 = vpack.c.b16 %v1511, %v1503
    %v2224 = vpack.c.b16 %v1512, %v1504
    %v2225 = vpack.c.b16 %v1513, %v1505
    %v2226 = vpack.c.b16 %v1514, %v1506
    %v2227 = vpack.c.b16 %v1523, %v1515
    %v2228 = vpack.c.b16 %v1524, %v1516
    %v2229 = vpack.c.b16 %v1525, %v1517
    %v2230 = vpack.c.b16 %v1526, %v1518
    %v2231 = vpack.c.b16 %v1527, %v1519
    %v2232 = vpack.c.b16 %v1528, %v1520
    %v2233 = vpack.c.b16 %v1529, %v1521
    %v2234 = vpack.c.b16 %v1530, %v1522
    %v2235 = vpack.c.b16 %v1539, %v1531
    %v2236 = vpack.c.b16 %v1540, %v1532
    %v2237 = vpack.c.b16 %v1541, %v1533
    %v2238 = vpack.c.b16 %v1542, %v1534
    %v2239 = vpack.c.b16 %v1543, %v1535
    %v2240 = vpack.c.b16 %v1544, %v1536
    %v2241 = vpack.c.b16 %v1545, %v1537
    %v2242 = vpack.c.b16 %v1546, %v1538
    %v2243 = vpack.c.b16 %v1555, %v1547
    %v2244 = vpack.c.b16 %v1556, %v1548
    %v2245 = vpack.c.b16 %v1557, %v1549
    %v2246 = vpack.c.b16 %v1558, %v1550
    %v2247 = vpack.c.b16 %v1559, %v1551
    %v2248 = vpack.c.b16 %v1560, %v1552
    %v2249 = vpack.c.b16 %v1561, %v1553
    %v2250 = vpack.c.b16 %v1562, %v1554
    %v2251 = vpack.c.b16 %v1571, %v1563
    %v2252 = vpack.c.b16 %v1572, %v1564
    %v2253 = vpack.c.b16 %v1573, %v1565
    %v2254 = vpack.c.b16 %v1574, %v1566
    %v2255 = vpack.c.b16 %v1575, %v1567
    %v2256 = vpack.c.b16 %v1576, %v1568
    %v2257 = vpack.c.b16 %v1577, %v1569
    %v2258 = vpack.c.b16 %v1578, %v1570
    %v2259 = vpack.c.b16 %v1587, %v1579
    %v2260 = vpack.c.b16 %v1588, %v1580
    %v2261 = vpack.c.b16 %v1589, %v1581
    %v2262 = vpack.c.b16 %v1590, %v1582
    %v2263 = vpack.c.b16 %v1591, %v1583
    %v2264 = vpack.c.b16 %v1592, %v1584
    %v2265 = vpack.c.b16 %v1593, %v1585
    %v2266 = vpack.c.b16 %v1594, %v1586
    %v2267 = vpack.c.b16 %v1603, %v1595
    %v2268 = vpack.c.b16 %v1604, %v1596
    %v2269 = vpack.c.b16 %v1605, %v1597
    %v2270 = vpack.c.b16 %v1606, %v1598
    %v2271 = vpack.c.b16 %v1607, %v1599
    %v2272 = vpack.c.b16 %v1608, %v1600
    %v2273 = vpack.c.b16 %v1609, %v1601
    %v2274 = vpack.c.b16 %v1610, %v1602
    %v2275 = vpack.c.b16 %v1619, %v1611
    %v2276 = vpack.c.b16 %v1620, %v1612
    %v2277 = vpack.c.b16 %v1621, %v1613
    %v2278 = vpack.c.b16 %v1622, %v1614
    %v2279 = vpack.c.b16 %v1623, %v1615
    %v2280 = vpack.c.b16 %v1624, %v1616
    %v2281 = vpack.c.b16 %v1625, %v1617
    %v2282 = vpack.c.b16 %v1626, %v1618
    %v2283 = vpack.c.b16 %v1635, %v1627
    %v2284 = vpack.c.b16 %v1636, %v1628
    %v2285 = vpack.c.b16 %v1637, %v1629
    %v2286 = vpack.c.b16 %v1638, %v1630
    %v2287 = vpack.c.b16 %v1639, %v1631
    %v2288 = vpack.c.b16 %v1640, %v1632
    %v2289 = vpack.c.b16 %v1641, %v1633
    %v2290 = vpack.c.b16 %v1642, %v1634
    %v2291 = vpack.c.b16 %v1651, %v1643
    %v2292 = vpack.c.b16 %v1652, %v1644
    %v2293 = vpack.c.b16 %v1653, %v1645
    %v2294 = vpack.c.b16 %v1654, %v1646
    %v2295 = vpack.c.b16 %v1655, %v1647
    %v2296 = vpack.c.b16 %v1656, %v1648
    %v2297 = vpack.c.b16 %v1657, %v1649
    %v2298 = vpack.c.b16 %v1658, %v1650
    %v2299 = vpack.c.b16 %v1667, %v1659
    %v2300 = vpack.c.b16 %v1668, %v1660
    %v2301 = vpack.c.b16 %v1669, %v1661
    %v2302 = vpack.c.b16 %v1670, %v1662
    %v2303 = vpack.c.b16 %v1671, %v1663
    %v2304 = vpack.c.b16 %v1672, %v1664
    %v2305 = vpack.c.b16 %v1673, %v1665
    %v2306 = vpack.c.b16 %v1674, %v1666
    %v2307 = vpack.c.b16 %v1683, %v1675
    %v2308 = vpack.c.b16 %v1684, %v1676
    %v2309 = vpack.c.b16 %v1685, %v1677
    %v2310 = vpack.c.b16 %v1686, %v1678
    %v2311 = vpack.c.b16 %v1687, %v1679
    %v2312 = vpack.c.b16 %v1688, %v1680
    %v2313 = vpack.c.b16 %v1689, %v1681
    %v2314 = vpack.c.b16 %v1690, %v1682
    %v2315 = vpack.c.b16 %v1699, %v1691
    %v2316 = vpack.c.b16 %v1700, %v1692
    %v2317 = vpack.c.b16 %v1701, %v1693
    %v2318 = vpack.c.b16 %v1702, %v1694
    %v2319 = vpack.c.b16 %v1703, %v1695
    %v2320 = vpack.c.b16 %v1704, %v1696
    %v2321 = vpack.c.b16 %v1705, %v1697
    %v2322 = vpack.c.b16 %v1706, %v1698
    %v2323 = vpack.c.b16 %v1715, %v1707
    %v2324 = vpack.c.b16 %v1716, %v1708
    %v2325 = vpack.c.b16 %v1717, %v1709
    %v2326 = vpack.c.b16 %v1718, %v1710
    %v2327 = vpack.c.b16 %v1719, %v1711
    %v2328 = vpack.c.b16 %v1720, %v1712
    %v2329 = vpack.c.b16 %v1721, %v1713
    %v2330 = vpack.c.b16 %v1722, %v1714
    %v2331 = vpack.c.b16 %v1731, %v1723
    %v2332 = vpack.c.b16 %v1732, %v1724
    %v2333 = vpack.c.b16 %v1733, %v1725
    %v2334 = vpack.c.b16 %v1734, %v1726
    %v2335 = vpack.c.b16 %v1735, %v1727
    %v2336 = vpack.c.b16 %v1736, %v1728
    %v2337 = vpack.c.b16 %v1737, %v1729
    %v2338 = vpack.c.b16 %v1738, %v1730
    %v2339 = vpack.c.b16 %v1747, %v1739
    %v2340 = vpack.c.b16 %v1748, %v1740
    %v2341 = vpack.c.b16 %v1749, %v1741
    %v2342 = vpack.c.b16 %v1750, %v1742
    %v2343 = vpack.c.b16 %v1751, %v1743
    %v2344 = vpack.c.b16 %v1752, %v1744
    %v2345 = vpack.c.b16 %v1753, %v1745
    %v2346 = vpack.c.b16 %v1754, %v1746
    %v2347 = vpack.c.b16 %v1763, %v1755
    %v2348 = vpack.c.b16 %v1764, %v1756
    %v2349 = vpack.c.b16 %v1765, %v1757
    %v2350 = vpack.c.b16 %v1766, %v1758
    %v2351 = vpack.c.b16 %v1767, %v1759
    %v2352 = vpack.c.b16 %v1768, %v1760
    %v2353 = vpack.c.b16 %v1769, %v1761
    %v2354 = vpack.c.b16 %v1770, %v1762
    %v2355 = vpack.c.b16 %v1779, %v1771
    %v2356 = vpack.c.b16 %v1780, %v1772
    %v2357 = vpack.c.b16 %v1781, %v1773
    %v2358 = vpack.c.b16 %v1782, %v1774
    %v2359 = vpack.c.b16 %v1783, %v1775
    %v2360 = vpack.c.b16 %v1784, %v1776
    %v2361 = vpack.c.b16 %v1785, %v1777
    %v2362 = vpack.c.b16 %v1786, %v1778
    %v2363 = vpack.c.b16 %v1795, %v1787
    %v2364 = vpack.c.b16 %v1796, %v1788
    %v2365 = vpack.c.b16 %v1797, %v1789
    %v2366 = vpack.c.b16 %v1798, %v1790
    %v2367 = vpack.c.b16 %v1799, %v1791
    %v2368 = vpack.c.b16 %v1800, %v1792
    %v2369 = vpack.c.b16 %v1801, %v1793
    %v2370 = vpack.c.b16 %v1802, %v1794
    %v2371 = vpack.c.b16 %v1811, %v1803
    %v2372 = vpack.c.b16 %v1812, %v1804
    %v2373 = vpack.c.b16 %v1813, %v1805
    %v2374 = vpack.c.b16 %v1814, %v1806
    %v2375 = vpack.c.b16 %v1815, %v1807
    %v2376 = vpack.c.b16 %v1816, %v1808
    %v2377 = vpack.c.b16 %v1817, %v1809
    %v2378 = vpack.c.b16 %v1818, %v1810
    %v2379 = vpack.c.b16 %v1827, %v1819
    %v2380 = vpack.c.b16 %v1828, %v1820
    %v2381 = vpack.c.b16 %v1829, %v1821
    %v2382 = vpack.c.b16 %v1830, %v1822
    %v2383 = vpack.c.b16 %v1831, %v1823
    %v2384 = vpack.c.b16 %v1832, %v1824
    %v2385 = vpack.c.b16 %v1833, %v1825
    %v2386 = vpack.c.b16 %v1834, %v1826
    %v2387 = vpack.c.b16 %v1843, %v1835
    %v2388 = vpack.c.b16 %v1844, %v1836
    %v2389 = vpack.c.b16 %v1845, %v1837
    %v2390 = vpack.c.b16 %v1846, %v1838
    %v2391 = vpack.c.b16 %v1847, %v1839
    %v2392 = vpack.c.b16 %v1848, %v1840
    %v2393 = vpack.c.b16 %v1849, %v1841
    %v2394 = vpack.c.b16 %v1850, %v1842
    %v2395 = vpack.c.b16 %v1859, %v1851
    %v2396 = vpack.c.b16 %v1860, %v1852
    %v2397 = vpack.c.b16 %v1861, %v1853
    %v2398 = vpack.c.b16 %v1862, %v1854
    %v2399 = vpack.c.b16 %v1863, %v1855
    %v2400 = vpack.c.b16 %v1864, %v1856
    %v2401 = vpack.c.b16 %v1865, %v1857
    %v2402 = vpack.c.b16 %v1866, %v1858
    %v2403 = vpack.c.b16 %v1875, %v1867
    %v2404 = vpack.c.b16 %v1876, %v1868
    %v2405 = vpack.c.b16 %v1877, %v1869
    %v2406 = vpack.c.b16 %v1878, %v1870
    %v2407 = vpack.c.b16 %v1879, %v1871
    %v2408 = vpack.c.b16 %v1880, %v1872
    %v2409 = vpack.c.b16 %v1881, %v1873
    %v2410 = vpack.c.b16 %v1882, %v1874
    %v2411 = vpack.c.b16 %v1891, %v1883
    %v2412 = vpack.c.b16 %v1892, %v1884
    %v2413 = vpack.c.b16 %v1893, %v1885
    %v2414 = vpack.c.b16 %v1894, %v1886
    %v2415 = vpack.c.b16 %v1895, %v1887
    %v2416 = vpack.c.b16 %v1896, %v1888
    %v2417 = vpack.c.b16 %v1897, %v1889
    %v2418 = vpack.c.b16 %v1898, %v1890
    %v2419 = vpack.c.b16 %v1907, %v1899
    %v2420 = vpack.c.b16 %v1908, %v1900
    %v2421 = vpack.c.b16 %v1909, %v1901
    %v2422 = vpack.c.b16 %v1910, %v1902
    %v2423 = vpack.c.b16 %v1911, %v1903
    %v2424 = vpack.c.b16 %v1912, %v1904
    %v2425 = vpack.c.b16 %v1913, %v1905
    %v2426 = vpack.c.b16 %v1914, %v1906
    %v2427 = vpack.c.b16 %v1923, %v1915
    %v2428 = vpack.c.b16 %v1924, %v1916
    %v2429 = vpack.c.b16 %v1925, %v1917
    %v2430 = vpack.c.b16 %v1926, %v1918
    %v2431 = vpack.c.b16 %v1927, %v1919
    %v2432 = vpack.c.b16 %v1928, %v1920
    %v2433 = vpack.c.b16 %v1929, %v1921
    %v2434 = vpack.c.b16 %v1930, %v1922
    %v2435 = vpack.c.b16 %v1939, %v1931
    %v2436 = vpack.c.b16 %v1940, %v1932
    %v2437 = vpack.c.b16 %v1941, %v1933
    %v2438 = vpack.c.b16 %v1942, %v1934
    %v2439 = vpack.c.b16 %v1943, %v1935
    %v2440 = vpack.c.b16 %v1944, %v1936
    %v2441 = vpack.c.b16 %v1945, %v1937
    %v2442 = vpack.c.b16 %v1946, %v1938
    %v2443 = vpack.c.b16 %v1955, %v1947
    %v2444 = vpack.c.b16 %v1956, %v1948
    %v2445 = vpack.c.b16 %v1957, %v1949
    %v2446 = vpack.c.b16 %v1958, %v1950
    %v2447 = vpack.c.b16 %v1959, %v1951
    %v2448 = vpack.c.b16 %v1960, %v1952
    %v2449 = vpack.c.b16 %v1961, %v1953
    %v2450 = vpack.c.b16 %v1962, %v1954
    %v2451 = vpack.c.b16 %v1971, %v1963
    %v2452 = vpack.c.b16 %v1972, %v1964
    %v2453 = vpack.c.b16 %v1973, %v1965
    %v2454 = vpack.c.b16 %v1974, %v1966
    %v2455 = vpack.c.b16 %v1975, %v1967
    %v2456 = vpack.c.b16 %v1976, %v1968
    %v2457 = vpack.c.b16 %v1977, %v1969
    %v2458 = vpack.c.b16 %v1978, %v1970
    %v2459 = vpack.c.b16 %v1987, %v1979
    %v2460 = vpack.c.b16 %v1988, %v1980
    %v2461 = vpack.c.b16 %v1989, %v1981
    %v2462 = vpack.c.b16 %v1990, %v1982
    %v2463 = vpack.c.b16 %v1991, %v1983
    %v2464 = vpack.c.b16 %v1992, %v1984
    %v2465 = vpack.c.b16 %v1993, %v1985
    %v2466 = vpack.c.b16 %v1994, %v1986
    %v2467 = vpack.c.b16 %v2003, %v1995
    %v2468 = vpack.c.b16 %v2004, %v1996
    %v2469 = vpack.c.b16 %v2005, %v1997
    %v2470 = vpack.c.b16 %v2006, %v1998
    %v2471 = vpack.c.b16 %v2007, %v1999
    %v2472 = vpack.c.b16 %v2008, %v2000
    %v2473 = vpack.c.b16 %v2009, %v2001
    %v2474 = vpack.c.b16 %v2010, %v2002
    %v2475 = vpack.c.b16 %v2019, %v2011
    %v2476 = vpack.c.b16 %v2020, %v2012
    %v2477 = vpack.c.b16 %v2021, %v2013
    %v2478 = vpack.c.b16 %v2022, %v2014
    %v2479 = vpack.c.b16 %v2023, %v2015
    %v2480 = vpack.c.b16 %v2024, %v2016
    %v2481 = vpack.c.b16 %v2025, %v2017
    %v2482 = vpack.c.b16 %v2026, %v2018
    %v2483 = vpack.c.b16 %v2035, %v2027
    %v2484 = vpack.c.b16 %v2036, %v2028
    %v2485 = vpack.c.b16 %v2037, %v2029
    %v2486 = vpack.c.b16 %v2038, %v2030
    %v2487 = vpack.c.b16 %v2039, %v2031
    %v2488 = vpack.c.b16 %v2040, %v2032
    %v2489 = vpack.c.b16 %v2041, %v2033
    %v2490 = vpack.c.b16 %v2042, %v2034
    %2939 = vmatprep.subr.bf16.mxu0 %v2044
    %2940 = vmatpush1.bf16.msra.mxu0 %v2043
    %2941 = vmatprep.subr.bf16.mxu0 %v2052
    %2942 = vmatpush1.bf16.msra.mxu0 %v2051
    %2943 = vmatprep.subr.bf16.mxu0 %v2060
    %2944 = vmatpush1.bf16.msra.mxu0 %v2059
    %2945 = vmatprep.subr.bf16.mxu0 %v2068
    %2946 = vmatpush1.bf16.msra.mxu0 %v2067
    %2947 = vmatprep.subr.bf16.mxu0 %v2076
    %2948 = vmatpush1.bf16.msra.mxu0 %v2075
    %2949 = vmatprep.subr.bf16.mxu0 %v2084
    %2950 = vmatpush1.bf16.msra.mxu0 %v2083
    %2951 = vmatprep.subr.bf16.mxu0 %v2092
    %2952 = vmatpush1.bf16.msra.mxu0 %v2091
    %2953 = vmatprep.subr.bf16.mxu0 %v2100
    %2954 = vmatpush1.bf16.msra.mxu0 %v2099
    %2955 = vmatprep.subr.bf16.mxu0 %v2108
    %2956 = vmatpush1.bf16.msra.mxu0 %v2107
    %2957 = vmatprep.subr.bf16.mxu0 %v2116
    %2958 = vmatpush1.bf16.msra.mxu0 %v2115
    %2959 = vmatprep.subr.bf16.mxu0 %v2124
    %2960 = vmatpush1.bf16.msra.mxu0 %v2123
    %2961 = vmatprep.subr.bf16.mxu0 %v2132
    %2962 = vmatpush1.bf16.msra.mxu0 %v2131
    %2963 = vmatprep.subr.bf16.mxu0 %v2140
    %2964 = vmatpush1.bf16.msra.mxu0 %v2139
    %2965 = vmatprep.subr.bf16.mxu0 %v2148
    %2966 = vmatpush1.bf16.msra.mxu0 %v2147
    %2967 = vmatprep.subr.bf16.mxu0 %v2156
    %2968 = vmatpush1.bf16.msra.mxu0 %v2155
    %2969 = vmatprep.subr.bf16.mxu0 %v2164
    %2970 = vmatpush1.bf16.msra.mxu0 %v2163
    %2971 = vmatprep.mubr.bf16.mxu0 %v686
    %2972 = vmatmul.mubr.bf16.gmra.mrb[0].mxu0 %v685
    %v2973 = vpop.f32.mrb[0].mxu0
    %v2974 = vadd.f32 %v626, %v2973
    %v2975 = vpop.f32.mrb[0].mxu0
    %v2976 = vadd.f32 %v630, %v2975
    %v2977 = vpop.f32.mrb[0].mxu0
    %v2978 = vadd.f32 %v626, %v2977
    %v2979 = vpop.f32.mrb[0].mxu0
    %v2980 = vadd.f32 %v630, %v2979
    %2981 = vdwg.mxu0
    %2982 = vmatprep.subr.bf16.mxu0 %v2172
    %2983 = vmatpush1.bf16.msra.mxu0 %v2171
    %2984 = vmatprep.subr.bf16.mxu0 %v2180
    %2985 = vmatpush1.bf16.msra.mxu0 %v2179
    %2986 = vmatprep.subr.bf16.mxu0 %v2188
    %2987 = vmatpush1.bf16.msra.mxu0 %v2187
    %2988 = vmatprep.subr.bf16.mxu0 %v2196
    %2989 = vmatpush1.bf16.msra.mxu0 %v2195
    %2990 = vmatprep.subr.bf16.mxu0 %v2204
    %2991 = vmatpush1.bf16.msra.mxu0 %v2203
    %2992 = vmatprep.subr.bf16.mxu0 %v2212
    %2993 = vmatpush1.bf16.msra.mxu0 %v2211
    %2994 = vmatprep.subr.bf16.mxu0 %v2220
    %2995 = vmatpush1.bf16.msra.mxu0 %v2219
    %2996 = vmatprep.subr.bf16.mxu0 %v2228
    %2997 = vmatpush1.bf16.msra.mxu0 %v2227
    %2998 = vmatprep.subr.bf16.mxu0 %v2236
    %2999 = vmatpush1.bf16.msra.mxu0 %v2235
    %3000 = vmatprep.subr.bf16.mxu0 %v2244
    %3001 = vmatpush1.bf16.msra.mxu0 %v2243
    %3002 = vmatprep.subr.bf16.mxu0 %v2252
    %3003 = vmatpush1.bf16.msra.mxu0 %v2251
    %3004 = vmatprep.subr.bf16.mxu0 %v2260
    %3005 = vmatpush1.bf16.msra.mxu0 %v2259
    %3006 = vmatprep.subr.bf16.mxu0 %v2268
    %3007 = vmatpush1.bf16.msra.mxu0 %v2267
    %3008 = vmatprep.subr.bf16.mxu0 %v2276
    %3009 = vmatpush1.bf16.msra.mxu0 %v2275
    %3010 = vmatprep.subr.bf16.mxu0 %v2284
    %3011 = vmatpush1.bf16.msra.mxu0 %v2283
    %3012 = vmatprep.subr.bf16.mxu0 %v2292
    %3013 = vmatpush1.bf16.msra.mxu0 %v2291
    %3014 = vmatprep.mubr.bf16.mxu0 %v688
    %3015 = vmatmul.mubr.bf16.gmra.mrb[0].mxu0 %v687
    %v3016 = vpop.f32.mrb[0].mxu0
    %v3017 = vadd.f32 %v2974, %v3016
    %v3018 = vpop.f32.mrb[0].mxu0
    %v3019 = vadd.f32 %v2976, %v3018
    %v3020 = vpop.f32.mrb[0].mxu0
    %v3021 = vadd.f32 %v2978, %v3020
    %v3022 = vpop.f32.mrb[0].mxu0
    %v3023 = vadd.f32 %v2980, %v3022
    %3024 = vdwg.mxu0
    %3025 = vmatprep.subr.bf16.mxu0 %v2300
    %3026 = vmatpush1.bf16.msra.mxu0 %v2299
    %3027 = vmatprep.subr.bf16.mxu0 %v2308
    %3028 = vmatpush1.bf16.msra.mxu0 %v2307
    %3029 = vmatprep.subr.bf16.mxu0 %v2316
    %3030 = vmatpush1.bf16.msra.mxu0 %v2315
    %3031 = vmatprep.subr.bf16.mxu0 %v2324
    %3032 = vmatpush1.bf16.msra.mxu0 %v2323
    %3033 = vmatprep.subr.bf16.mxu0 %v2332
    %3034 = vmatpush1.bf16.msra.mxu0 %v2331
    %3035 = vmatprep.subr.bf16.mxu0 %v2340
    %3036 = vmatpush1.bf16.msra.mxu0 %v2339
    %3037 = vmatprep.subr.bf16.mxu0 %v2348
    %3038 = vmatpush1.bf16.msra.mxu0 %v2347
    %3039 = vmatprep.subr.bf16.mxu0 %v2356
    %3040 = vmatpush1.bf16.msra.mxu0 %v2355
    %3041 = vmatprep.subr.bf16.mxu0 %v2364
    %3042 = vmatpush1.bf16.msra.mxu0 %v2363
    %3043 = vmatprep.subr.bf16.mxu0 %v2372
    %3044 = vmatpush1.bf16.msra.mxu0 %v2371
    %3045 = vmatprep.subr.bf16.mxu0 %v2380
    %3046 = vmatpush1.bf16.msra.mxu0 %v2379
    %3047 = vmatprep.subr.bf16.mxu0 %v2388
    %3048 = vmatpush1.bf16.msra.mxu0 %v2387
    %3049 = vmatprep.subr.bf16.mxu0 %v2396
    %3050 = vmatpush1.bf16.msra.mxu0 %v2395
    %3051 = vmatprep.subr.bf16.mxu0 %v2404
    %3052 = vmatpush1.bf16.msra.mxu0 %v2403
    %3053 = vmatprep.subr.bf16.mxu0 %v2412
    %3054 = vmatpush1.bf16.msra.mxu0 %v2411
    %3055 = vmatprep.subr.bf16.mxu0 %v2420
    %3056 = vmatpush1.bf16.msra.mxu0 %v2419
    %3057 = vmatprep.mubr.bf16.mxu0 %v690
    %3058 = vmatmul.mubr.bf16.gmra.mrb[0].mxu0 %v689
    %v3059 = vpop.f32.mrb[0].mxu0
    %v3060 = vadd.f32 %v3017, %v3059
    %v3061 = vpop.f32.mrb[0].mxu0
    %v3062 = vadd.f32 %v3019, %v3061
    %v3063 = vpop.f32.mrb[0].mxu0
    %v3064 = vadd.f32 %v3021, %v3063
    %v3065 = vpop.f32.mrb[0].mxu0
    %v3066 = vadd.f32 %v3023, %v3065
    %3067 = vdwg.mxu0
    %3068 = vmatprep.subr.bf16.mxu0 %v2428
    %3069 = vmatpush1.bf16.msra.mxu0 %v2427
    %3070 = vmatprep.subr.bf16.mxu0 %v2436
    %3071 = vmatpush1.bf16.msra.mxu0 %v2435
    %3072 = vmatprep.subr.bf16.mxu0 %v2444
    %3073 = vmatpush1.bf16.msra.mxu0 %v2443
    %3074 = vmatprep.subr.bf16.mxu0 %v2452
    %3075 = vmatpush1.bf16.msra.mxu0 %v2451
    %3076 = vmatprep.subr.bf16.mxu0 %v2460
    %3077 = vmatpush1.bf16.msra.mxu0 %v2459
    %3078 = vmatprep.subr.bf16.mxu0 %v2468
    %3079 = vmatpush1.bf16.msra.mxu0 %v2467
    %3080 = vmatprep.subr.bf16.mxu0 %v2476
    %3081 = vmatpush1.bf16.msra.mxu0 %v2475
    %3082 = vmatprep.subr.bf16.mxu0 %v2484
    %3083 = vmatpush1.bf16.msra.mxu0 %v2483
    %3084 = vmatprep.subr.bf16.mxu0 0
    %3085 = vmatpush1.bf16.msra.mxu0 0
    %3086 = vmatprep.subr.bf16.mxu0 0
    %3087 = vmatpush1.bf16.msra.mxu0 0
    %3088 = vmatprep.subr.bf16.mxu0 0
    %3089 = vmatpush1.bf16.msra.mxu0 0
    %3090 = vmatprep.subr.bf16.mxu0 0
    %3091 = vmatpush1.bf16.msra.mxu0 0
    %3092 = vmatprep.subr.bf16.mxu0 0
    %3093 = vmatpush1.bf16.msra.mxu0 0
    %3094 = vmatprep.subr.bf16.mxu0 0
    %3095 = vmatpush1.bf16.msra.mxu0 0
    %3096 = vmatprep.subr.bf16.mxu0 0
    %3097 = vmatpush1.bf16.msra.mxu0 0
    %3098 = vmatprep.subr.bf16.mxu0 0
    %3099 = vmatpush1.bf16.msra.mxu0 0
    %3100 = vmatprep.mubr.bf16.mxu0 0
    %3101 = vmatmul.mubr.bf16.gmra.mrb[0].mxu0 %v691
    %v3102 = vpop.f32.mrb[0].mxu0
    %v3103 = vadd.f32 %v3060, %v3102
    %v3104 = vpop.f32.mrb[0].mxu0
    %v3105 = vadd.f32 %v3062, %v3104
    %v3106 = vpop.f32.mrb[0].mxu0
    %v3107 = vadd.f32 %v3064, %v3106
    %v3108 = vpop.f32.mrb[0].mxu0
    %v3109 = vadd.f32 %v3066, %v3108
    %3110 = vdwg.mxu0
    %3111 = vmatprep.subr.bf16.mxu0 %v2046
    %3112 = vmatpush1.bf16.msra.mxu0 %v2045
    %3113 = vmatprep.subr.bf16.mxu0 %v2054
    %3114 = vmatpush1.bf16.msra.mxu0 %v2053
    %3115 = vmatprep.subr.bf16.mxu0 %v2062
    %3116 = vmatpush1.bf16.msra.mxu0 %v2061
    %3117 = vmatprep.subr.bf16.mxu0 %v2070
    %3118 = vmatpush1.bf16.msra.mxu0 %v2069
    %3119 = vmatprep.subr.bf16.mxu0 %v2078
    %3120 = vmatpush1.bf16.msra.mxu0 %v2077
    %3121 = vmatprep.subr.bf16.mxu0 %v2086
    %3122 = vmatpush1.bf16.msra.mxu0 %v2085
    %3123 = vmatprep.subr.bf16.mxu0 %v2094
    %3124 = vmatpush1.bf16.msra.mxu0 %v2093
    %3125 = vmatprep.subr.bf16.mxu0 %v2102
    %3126 = vmatpush1.bf16.msra.mxu0 %v2101
    %3127 = vmatprep.subr.bf16.mxu0 %v2110
    %3128 = vmatpush1.bf16.msra.mxu0 %v2109
    %3129 = vmatprep.subr.bf16.mxu0 %v2118
    %3130 = vmatpush1.bf16.msra.mxu0 %v2117
    %3131 = vmatprep.subr.bf16.mxu0 %v2126
    %3132 = vmatpush1.bf16.msra.mxu0 %v2125
    %3133 = vmatprep.subr.bf16.mxu0 %v2134
    %3134 = vmatpush1.bf16.msra.mxu0 %v2133
    %3135 = vmatprep.subr.bf16.mxu0 %v2142
    %3136 = vmatpush1.bf16.msra.mxu0 %v2141
    %3137 = vmatprep.subr.bf16.mxu0 %v2150
    %3138 = vmatpush1.bf16.msra.mxu0 %v2149
    %3139 = vmatprep.subr.bf16.mxu0 %v2158
    %3140 = vmatpush1.bf16.msra.mxu0 %v2157
    %3141 = vmatprep.subr.bf16.mxu0 %v2166
    %3142 = vmatpush1.bf16.msra.mxu0 %v2165
    %3143 = vmatprep.mubr.bf16.mxu0 %v686
    %3144 = vmatmul.mubr.bf16.gmra.mrb[0].mxu0 %v685
    %v3145 = vpop.f32.mrb[0].mxu0
    %v3146 = vadd.f32 %v634, %v3145
    %v3147 = vpop.f32.mrb[0].mxu0
    %v3148 = vadd.f32 %v638, %v3147
    %v3149 = vpop.f32.mrb[0].mxu0
    %v3150 = vadd.f32 %v634, %v3149
    %v3151 = vpop.f32.mrb[0].mxu0
    %v3152 = vadd.f32 %v638, %v3151
    %3153 = vdwg.mxu0
    %3154 = vmatprep.subr.bf16.mxu0 %v2174
    %3155 = vmatpush1.bf16.msra.mxu0 %v2173
    %3156 = vmatprep.subr.bf16.mxu0 %v2182
    %3157 = vmatpush1.bf16.msra.mxu0 %v2181
    %3158 = vmatprep.subr.bf16.mxu0 %v2190
    %3159 = vmatpush1.bf16.msra.mxu0 %v2189
    %3160 = vmatprep.subr.bf16.mxu0 %v2198
    %3161 = vmatpush1.bf16.msra.mxu0 %v2197
    %3162 = vmatprep.subr.bf16.mxu0 %v2206
    %3163 = vmatpush1.bf16.msra.mxu0 %v2205
    %3164 = vmatprep.subr.bf16.mxu0 %v2214
    %3165 = vmatpush1.bf16.msra.mxu0 %v2213
    %3166 = vmatprep.subr.bf16.mxu0 %v2222
    %3167 = vmatpush1.bf16.msra.mxu0 %v2221
    %3168 = vmatprep.subr.bf16.mxu0 %v2230
    %3169 = vmatpush1.bf16.msra.mxu0 %v2229
    %3170 = vmatprep.subr.bf16.mxu0 %v2238
    %3171 = vmatpush1.bf16.msra.mxu0 %v2237
    %3172 = vmatprep.subr.bf16.mxu0 %v2246
    %3173 = vmatpush1.bf16.msra.mxu0 %v2245
    %3174 = vmatprep.subr.bf16.mxu0 %v2254
    %3175 = vmatpush1.bf16.msra.mxu0 %v2253
    %3176 = vmatprep.subr.bf16.mxu0 %v2262
    %3177 = vmatpush1.bf16.msra.mxu0 %v2261
    %3178 = vmatprep.subr.bf16.mxu0 %v2270
    %3179 = vmatpush1.bf16.msra.mxu0 %v2269
    %3180 = vmatprep.subr.bf16.mxu0 %v2278
    %3181 = vmatpush1.bf16.msra.mxu0 %v2277
    %3182 = vmatprep.subr.bf16.mxu0 %v2286
    %3183 = vmatpush1.bf16.msra.mxu0 %v2285
    %3184 = vmatprep.subr.bf16.mxu0 %v2294
    %3185 = vmatpush1.bf16.msra.mxu0 %v2293
    %3186 = vmatprep.mubr.bf16.mxu0 %v688
    %3187 = vmatmul.mubr.bf16.gmra.mrb[0].mxu0 %v687
    %v3188 = vpop.f32.mrb[0].mxu0
    %v3189 = vadd.f32 %v3146, %v3188
    %v3190 = vpop.f32.mrb[0].mxu0
    %v3191 = vadd.f32 %v3148, %v3190
    %v3192 = vpop.f32.mrb[0].mxu0
    %v3193 = vadd.f32 %v3150, %v3192
    %v3194 = vpop.f32.mrb[0].mxu0
    %v3195 = vadd.f32 %v3152, %v3194
    %3196 = vdwg.mxu0
    %3197 = vmatprep.subr.bf16.mxu0 %v2302
    %3198 = vmatpush1.bf16.msra.mxu0 %v2301
    %3199 = vmatprep.subr.bf16.mxu0 %v2310
    %3200 = vmatpush1.bf16.msra.mxu0 %v2309
    %3201 = vmatprep.subr.bf16.mxu0 %v2318
    %3202 = vmatpush1.bf16.msra.mxu0 %v2317
    %3203 = vmatprep.subr.bf16.mxu0 %v2326
    %3204 = vmatpush1.bf16.msra.mxu0 %v2325
    %3205 = vmatprep.subr.bf16.mxu0 %v2334
    %3206 = vmatpush1.bf16.msra.mxu0 %v2333
    %3207 = vmatprep.subr.bf16.mxu0 %v2342
    %3208 = vmatpush1.bf16.msra.mxu0 %v2341
    %3209 = vmatprep.subr.bf16.mxu0 %v2350
    %3210 = vmatpush1.bf16.msra.mxu0 %v2349
    %3211 = vmatprep.subr.bf16.mxu0 %v2358
    %3212 = vmatpush1.bf16.msra.mxu0 %v2357
    %3213 = vmatprep.subr.bf16.mxu0 %v2366
    %3214 = vmatpush1.bf16.msra.mxu0 %v2365
    %3215 = vmatprep.subr.bf16.mxu0 %v2374
    %3216 = vmatpush1.bf16.msra.mxu0 %v2373
    %3217 = vmatprep.subr.bf16.mxu0 %v2382
    %3218 = vmatpush1.bf16.msra.mxu0 %v2381
    %3219 = vmatprep.subr.bf16.mxu0 %v2390
    %3220 = vmatpush1.bf16.msra.mxu0 %v2389
    %3221 = vmatprep.subr.bf16.mxu0 %v2398
    %3222 = vmatpush1.bf16.msra.mxu0 %v2397
    %3223 = vmatprep.subr.bf16.mxu0 %v2406
    %3224 = vmatpush1.bf16.msra.mxu0 %v2405
    %3225 = vmatprep.subr.bf16.mxu0 %v2414
    %3226 = vmatpush1.bf16.msra.mxu0 %v2413
    %3227 = vmatprep.subr.bf16.mxu0 %v2422
    %3228 = vmatpush1.bf16.msra.mxu0 %v2421
    %3229 = vmatprep.mubr.bf16.mxu0 %v690
    %3230 = vmatmul.mubr.bf16.gmra.mrb[0].mxu0 %v689
    %v3231 = vpop.f32.mrb[0].mxu0
    %v3232 = vadd.f32 %v3189, %v3231
    %v3233 = vpop.f32.mrb[0].mxu0
    %v3234 = vadd.f32 %v3191, %v3233
    %v3235 = vpop.f32.mrb[0].mxu0
    %v3236 = vadd.f32 %v3193, %v3235
    %v3237 = vpop.f32.mrb[0].mxu0
    %v3238 = vadd.f32 %v3195, %v3237
    %3239 = vdwg.mxu0
    %3240 = vmatprep.subr.bf16.mxu0 %v2430
    %3241 = vmatpush1.bf16.msra.mxu0 %v2429
    %3242 = vmatprep.subr.bf16.mxu0 %v2438
    %3243 = vmatpush1.bf16.msra.mxu0 %v2437
    %3244 = vmatprep.subr.bf16.mxu0 %v2446
    %3245 = vmatpush1.bf16.msra.mxu0 %v2445
    %3246 = vmatprep.subr.bf16.mxu0 %v2454
    %3247 = vmatpush1.bf16.msra.mxu0 %v2453
    %3248 = vmatprep.subr.bf16.mxu0 %v2462
    %3249 = vmatpush1.bf16.msra.mxu0 %v2461
    %3250 = vmatprep.subr.bf16.mxu0 %v2470
    %3251 = vmatpush1.bf16.msra.mxu0 %v2469
    %3252 = vmatprep.subr.bf16.mxu0 %v2478
    %3253 = vmatpush1.bf16.msra.mxu0 %v2477
    %3254 = vmatprep.subr.bf16.mxu0 %v2486
    %3255 = vmatpush1.bf16.msra.mxu0 %v2485
    %3256 = vmatprep.subr.bf16.mxu0 0
    %3257 = vmatpush1.bf16.msra.mxu0 0
    %3258 = vmatprep.subr.bf16.mxu0 0
    %3259 = vmatpush1.bf16.msra.mxu0 0
    %3260 = vmatprep.subr.bf16.mxu0 0
    %3261 = vmatpush1.bf16.msra.mxu0 0
    %3262 = vmatprep.subr.bf16.mxu0 0
    %3263 = vmatpush1.bf16.msra.mxu0 0
    %3264 = vmatprep.subr.bf16.mxu0 0
    %3265 = vmatpush1.bf16.msra.mxu0 0
    %3266 = vmatprep.subr.bf16.mxu0 0
    %3267 = vmatpush1.bf16.msra.mxu0 0
    %3268 = vmatprep.subr.bf16.mxu0 0
    %3269 = vmatpush1.bf16.msra.mxu0 0
    %3270 = vmatprep.subr.bf16.mxu0 0
    %3271 = vmatpush1.bf16.msra.mxu0 0
    %3272 = vmatprep.mubr.bf16.mxu0 0
    %3273 = vmatmul.mubr.bf16.gmra.mrb[0].mxu0 %v691
    %v3274 = vpop.f32.mrb[0].mxu0
    %v3275 = vadd.f32 %v3232, %v3274
    %v3276 = vpop.f32.mrb[0].mxu0
    %v3277 = vadd.f32 %v3234, %v3276
    %v3278 = vpop.f32.mrb[0].mxu0
    %v3279 = vadd.f32 %v3236, %v3278
    %v3280 = vpop.f32.mrb[0].mxu0
    %v3281 = vadd.f32 %v3238, %v3280
    %3282 = vdwg.mxu0
    %3283 = vmatprep.subr.bf16.mxu0 %v2048
    %3284 = vmatpush1.bf16.msra.mxu0 %v2047
    %3285 = vmatprep.subr.bf16.mxu0 %v2056
    %3286 = vmatpush1.bf16.msra.mxu0 %v2055
    %3287 = vmatprep.subr.bf16.mxu0 %v2064
    %3288 = vmatpush1.bf16.msra.mxu0 %v2063
    %3289 = vmatprep.subr.bf16.mxu0 %v2072
    %3290 = vmatpush1.bf16.msra.mxu0 %v2071
    %3291 = vmatprep.subr.bf16.mxu0 %v2080
    %3292 = vmatpush1.bf16.msra.mxu0 %v2079
    %3293 = vmatprep.subr.bf16.mxu0 %v2088
    %3294 = vmatpush1.bf16.msra.mxu0 %v2087
    %3295 = vmatprep.subr.bf16.mxu0 %v2096
    %3296 = vmatpush1.bf16.msra.mxu0 %v2095
    %3297 = vmatprep.subr.bf16.mxu0 %v2104
    %3298 = vmatpush1.bf16.msra.mxu0 %v2103
    %3299 = vmatprep.subr.bf16.mxu0 %v2112
    %3300 = vmatpush1.bf16.msra.mxu0 %v2111
    %3301 = vmatprep.subr.bf16.mxu0 %v2120
    %3302 = vmatpush1.bf16.msra.mxu0 %v2119
    %3303 = vmatprep.subr.bf16.mxu0 %v2128
    %3304 = vmatpush1.bf16.msra.mxu0 %v2127
    %3305 = vmatprep.subr.bf16.mxu0 %v2136
    %3306 = vmatpush1.bf16.msra.mxu0 %v2135
    %3307 = vmatprep.subr.bf16.mxu0 %v2144
    %3308 = vmatpush1.bf16.msra.mxu0 %v2143
    %3309 = vmatprep.subr.bf16.mxu0 %v2152
    %3310 = vmatpush1.bf16.msra.mxu0 %v2151
    %3311 = vmatprep.subr.bf16.mxu0 %v2160
    %3312 = vmatpush1.bf16.msra.mxu0 %v2159
    %3313 = vmatprep.subr.bf16.mxu0 %v2168
    %3314 = vmatpush1.bf16.msra.mxu0 %v2167
    %3315 = vmatprep.mubr.bf16.mxu0 %v686
    %3316 = vmatmul.mubr.bf16.gmra.mrb[0].mxu0 %v685
    %v3317 = vpop.f32.mrb[0].mxu0
    %v3318 = vadd.f32 %v642, %v3317
    %v3319 = vpop.f32.mrb[0].mxu0
    %v3320 = vadd.f32 %v646, %v3319
    %v3321 = vpop.f32.mrb[0].mxu0
    %v3322 = vadd.f32 %v642, %v3321
    %v3323 = vpop.f32.mrb[0].mxu0
    %v3324 = vadd.f32 %v646, %v3323
    %3325 = vdwg.mxu0
    %3326 = vmatprep.subr.bf16.mxu0 %v2176
    %3327 = vmatpush1.bf16.msra.mxu0 %v2175
    %3328 = vmatprep.subr.bf16.mxu0 %v2184
    %3329 = vmatpush1.bf16.msra.mxu0 %v2183
    %3330 = vmatprep.subr.bf16.mxu0 %v2192
    %3331 = vmatpush1.bf16.msra.mxu0 %v2191
    %3332 = vmatprep.subr.bf16.mxu0 %v2200
    %3333 = vmatpush1.bf16.msra.mxu0 %v2199
    %3334 = vmatprep.subr.bf16.mxu0 %v2208
    %3335 = vmatpush1.bf16.msra.mxu0 %v2207
    %3336 = vmatprep.subr.bf16.mxu0 %v2216
    %3337 = vmatpush1.bf16.msra.mxu0 %v2215
    %3338 = vmatprep.subr.bf16.mxu0 %v2224
    %3339 = vmatpush1.bf16.msra.mxu0 %v2223
    %3340 = vmatprep.subr.bf16.mxu0 %v2232
    %3341 = vmatpush1.bf16.msra.mxu0 %v2231
    %3342 = vmatprep.subr.bf16.mxu0 %v2240
    %3343 = vmatpush1.bf16.msra.mxu0 %v2239
    %3344 = vmatprep.subr.bf16.mxu0 %v2248
    %3345 = vmatpush1.bf16.msra.mxu0 %v2247
    %3346 = vmatprep.subr.bf16.mxu0 %v2256
    %3347 = vmatpush1.bf16.msra.mxu0 %v2255
    %3348 = vmatprep.subr.bf16.mxu0 %v2264
    %3349 = vmatpush1.bf16.msra.mxu0 %v2263
    %3350 = vmatprep.subr.bf16.mxu0 %v2272
    %3351 = vmatpush1.bf16.msra.mxu0 %v2271
    %3352 = vmatprep.subr.bf16.mxu0 %v2280
    %3353 = vmatpush1.bf16.msra.mxu0 %v2279
    %3354 = vmatprep.subr.bf16.mxu0 %v2288
    %3355 = vmatpush1.bf16.msra.mxu0 %v2287
    %3356 = vmatprep.subr.bf16.mxu0 %v2296
    %3357 = vmatpush1.bf16.msra.mxu0 %v2295
    %3358 = vmatprep.mubr.bf16.mxu0 %v688
    %3359 = vmatmul.mubr.bf16.gmra.mrb[0].mxu0 %v687
    %v3360 = vpop.f32.mrb[0].mxu0
    %v3361 = vadd.f32 %v3318, %v3360
    %v3362 = vpop.f32.mrb[0].mxu0
    %v3363 = vadd.f32 %v3320, %v3362
    %v3364 = vpop.f32.mrb[0].mxu0
    %v3365 = vadd.f32 %v3322, %v3364
    %v3366 = vpop.f32.mrb[0].mxu0
    %v3367 = vadd.f32 %v3324, %v3366
    %3368 = vdwg.mxu0
    %3369 = vmatprep.subr.bf16.mxu0 %v2304
    %3370 = vmatpush1.bf16.msra.mxu0 %v2303
    %3371 = vmatprep.subr.bf16.mxu0 %v2312
    %3372 = vmatpush1.bf16.msra.mxu0 %v2311
    %3373 = vmatprep.subr.bf16.mxu0 %v2320
    %3374 = vmatpush1.bf16.msra.mxu0 %v2319
    %3375 = vmatprep.subr.bf16.mxu0 %v2328
    %3376 = vmatpush1.bf16.msra.mxu0 %v2327
    %3377 = vmatprep.subr.bf16.mxu0 %v2336
    %3378 = vmatpush1.bf16.msra.mxu0 %v2335
    %3379 = vmatprep.subr.bf16.mxu0 %v2344
    %3380 = vmatpush1.bf16.msra.mxu0 %v2343
    %3381 = vmatprep.subr.bf16.mxu0 %v2352
    %3382 = vmatpush1.bf16.msra.mxu0 %v2351
    %3383 = vmatprep.subr.bf16.mxu0 %v2360
    %3384 = vmatpush1.bf16.msra.mxu0 %v2359
    %3385 = vmatprep.subr.bf16.mxu0 %v2368
    %3386 = vmatpush1.bf16.msra.mxu0 %v2367
    %3387 = vmatprep.subr.bf16.mxu0 %v2376
    %3388 = vmatpush1.bf16.msra.mxu0 %v2375
    %3389 = vmatprep.subr.bf16.mxu0 %v2384
    %3390 = vmatpush1.bf16.msra.mxu0 %v2383
    %3391 = vmatprep.subr.bf16.mxu0 %v2392
    %3392 = vmatpush1.bf16.msra.mxu0 %v2391
    %3393 = vmatprep.subr.bf16.mxu0 %v2400
    %3394 = vmatpush1.bf16.msra.mxu0 %v2399
    %3395 = vmatprep.subr.bf16.mxu0 %v2408
    %3396 = vmatpush1.bf16.msra.mxu0 %v2407
    %3397 = vmatprep.subr.bf16.mxu0 %v2416
    %3398 = vmatpush1.bf16.msra.mxu0 %v2415
    %3399 = vmatprep.subr.bf16.mxu0 %v2424
    %3400 = vmatpush1.bf16.msra.mxu0 %v2423
    %3401 = vmatprep.mubr.bf16.mxu0 %v690
    %3402 = vmatmul.mubr.bf16.gmra.mrb[0].mxu0 %v689
    %v3403 = vpop.f32.mrb[0].mxu0
    %v3404 = vadd.f32 %v3361, %v3403
    %v3405 = vpop.f32.mrb[0].mxu0
    %v3406 = vadd.f32 %v3363, %v3405
    %v3407 = vpop.f32.mrb[0].mxu0
    %v3408 = vadd.f32 %v3365, %v3407
    %v3409 = vpop.f32.mrb[0].mxu0
    %v3410 = vadd.f32 %v3367, %v3409
    %3411 = vdwg.mxu0
    %3412 = vmatprep.subr.bf16.mxu0 %v2432
    %3413 = vmatpush1.bf16.msra.mxu0 %v2431
    %3414 = vmatprep.subr.bf16.mxu0 %v2440
    %3415 = vmatpush1.bf16.msra.mxu0 %v2439
    %3416 = vmatprep.subr.bf16.mxu0 %v2448
    %3417 = vmatpush1.bf16.msra.mxu0 %v2447
    %3418 = vmatprep.subr.bf16.mxu0 %v2456
    %3419 = vmatpush1.bf16.msra.mxu0 %v2455
    %3420 = vmatprep.subr.bf16.mxu0 %v2464
    %3421 = vmatpush1.bf16.msra.mxu0 %v2463
    %3422 = vmatprep.subr.bf16.mxu0 %v2472
    %3423 = vmatpush1.bf16.msra.mxu0 %v2471
    %3424 = vmatprep.subr.bf16.mxu0 %v2480
    %3425 = vmatpush1.bf16.msra.mxu0 %v2479
    %3426 = vmatprep.subr.bf16.mxu0 %v2488
    %3427 = vmatpush1.bf16.msra.mxu0 %v2487
    %3428 = vmatprep.subr.bf16.mxu0 0
    %3429 = vmatpush1.bf16.msra.mxu0 0
    %3430 = vmatprep.subr.bf16.mxu0 0
    %3431 = vmatpush1.bf16.msra.mxu0 0
    %3432 = vmatprep.subr.bf16.mxu0 0
    %3433 = vmatpush1.bf16.msra.mxu0 0
    %3434 = vmatprep.subr.bf16.mxu0 0
    %3435 = vmatpush1.bf16.msra.mxu0 0
    %3436 = vmatprep.subr.bf16.mxu0 0
    %3437 = vmatpush1.bf16.msra.mxu0 0
    %3438 = vmatprep.subr.bf16.mxu0 0
    %3439 = vmatpush1.bf16.msra.mxu0 0
    %3440 = vmatprep.subr.bf16.mxu0 0
    %3441 = vmatpush1.bf16.msra.mxu0 0
    %3442 = vmatprep.subr.bf16.mxu0 0
    %3443 = vmatpush1.bf16.msra.mxu0 0
    %3444 = vmatprep.mubr.bf16.mxu0 0
    %3445 = vmatmul.mubr.bf16.gmra.mrb[0].mxu0 %v691
    %v3446 = vpop.f32.mrb[0].mxu0
    %v3447 = vadd.f32 %v3404, %v3446
    %v3448 = vpop.f32.mrb[0].mxu0
    %v3449 = vadd.f32 %v3406, %v3448
    %v3450 = vpop.f32.mrb[0].mxu0
    %v3451 = vadd.f32 %v3408, %v3450
    %v3452 = vpop.f32.mrb[0].mxu0
    %v3453 = vadd.f32 %v3410, %v3452
    %3454 = vdwg.mxu0
    %3455 = vmatprep.subr.bf16.mxu0 %v2050
    %3456 = vmatpush1.bf16.msra.mxu0 %v2049
    %3457 = vmatprep.subr.bf16.mxu0 %v2058
    %3458 = vmatpush1.bf16.msra.mxu0 %v2057
    %3459 = vmatprep.subr.bf16.mxu0 %v2066
    %3460 = vmatpush1.bf16.msra.mxu0 %v2065
    %3461 = vmatprep.subr.bf16.mxu0 %v2074
    %3462 = vmatpush1.bf16.msra.mxu0 %v2073
    %3463 = vmatprep.subr.bf16.mxu0 %v2082
    %3464 = vmatpush1.bf16.msra.mxu0 %v2081
    %3465 = vmatprep.subr.bf16.mxu0 %v2090
    %3466 = vmatpush1.bf16.msra.mxu0 %v2089
    %3467 = vmatprep.subr.bf16.mxu0 %v2098
    %3468 = vmatpush1.bf16.msra.mxu0 %v2097
    %3469 = vmatprep.subr.bf16.mxu0 %v2106
    %3470 = vmatpush1.bf16.msra.mxu0 %v2105
    %3471 = vmatprep.subr.bf16.mxu0 %v2114
    %3472 = vmatpush1.bf16.msra.mxu0 %v2113
    %3473 = vmatprep.subr.bf16.mxu0 %v2122
    %3474 = vmatpush1.bf16.msra.mxu0 %v2121
    %3475 = vmatprep.subr.bf16.mxu0 %v2130
    %3476 = vmatpush1.bf16.msra.mxu0 %v2129
    %3477 = vmatprep.subr.bf16.mxu0 %v2138
    %3478 = vmatpush1.bf16.msra.mxu0 %v2137
    %3479 = vmatprep.subr.bf16.mxu0 %v2146
    %3480 = vmatpush1.bf16.msra.mxu0 %v2145
    %3481 = vmatprep.subr.bf16.mxu0 %v2154
    %3482 = vmatpush1.bf16.msra.mxu0 %v2153
    %3483 = vmatprep.subr.bf16.mxu0 %v2162
    %3484 = vmatpush1.bf16.msra.mxu0 %v2161
    %3485 = vmatprep.subr.bf16.mxu0 %v2170
    %3486 = vmatpush1.bf16.msra.mxu0 %v2169
    %3487 = vmatprep.mubr.bf16.mxu0 %v686
    %3488 = vmatmul.mubr.bf16.gmra.mrb[0].mxu0 %v685
    %v3489 = vpop.f32.mrb[0].mxu0
    %v3490 = vadd.f32 %v650, %v3489
    %v3491 = vpop.f32.mrb[0].mxu0
    %v3492 = vadd.f32 %v654, %v3491
    %v3493 = vpop.f32.mrb[0].mxu0
    %v3494 = vadd.f32 %v650, %v3493
    %v3495 = vpop.f32.mrb[0].mxu0
    %v3496 = vadd.f32 %v654, %v3495
    %3497 = vdwg.mxu0
    %3498 = vmatprep.subr.bf16.mxu0 %v2178
    %3499 = vmatpush1.bf16.msra.mxu0 %v2177
    %3500 = vmatprep.subr.bf16.mxu0 %v2186
    %3501 = vmatpush1.bf16.msra.mxu0 %v2185
    %3502 = vmatprep.subr.bf16.mxu0 %v2194
    %3503 = vmatpush1.bf16.msra.mxu0 %v2193
    %3504 = vmatprep.subr.bf16.mxu0 %v2202
    %3505 = vmatpush1.bf16.msra.mxu0 %v2201
    %3506 = vmatprep.subr.bf16.mxu0 %v2210
    %3507 = vmatpush1.bf16.msra.mxu0 %v2209
    %3508 = vmatprep.subr.bf16.mxu0 %v2218
    %3509 = vmatpush1.bf16.msra.mxu0 %v2217
    %3510 = vmatprep.subr.bf16.mxu0 %v2226
    %3511 = vmatpush1.bf16.msra.mxu0 %v2225
    %3512 = vmatprep.subr.bf16.mxu0 %v2234
    %3513 = vmatpush1.bf16.msra.mxu0 %v2233
    %3514 = vmatprep.subr.bf16.mxu0 %v2242
    %3515 = vmatpush1.bf16.msra.mxu0 %v2241
    %3516 = vmatprep.subr.bf16.mxu0 %v2250
    %3517 = vmatpush1.bf16.msra.mxu0 %v2249
    %3518 = vmatprep.subr.bf16.mxu0 %v2258
    %3519 = vmatpush1.bf16.msra.mxu0 %v2257
    %3520 = vmatprep.subr.bf16.mxu0 %v2266
    %3521 = vmatpush1.bf16.msra.mxu0 %v2265
    %3522 = vmatprep.subr.bf16.mxu0 %v2274
    %3523 = vmatpush1.bf16.msra.mxu0 %v2273
    %3524 = vmatprep.subr.bf16.mxu0 %v2282
    %3525 = vmatpush1.bf16.msra.mxu0 %v2281
    %3526 = vmatprep.subr.bf16.mxu0 %v2290
    %3527 = vmatpush1.bf16.msra.mxu0 %v2289
    %3528 = vmatprep.subr.bf16.mxu0 %v2298
    %3529 = vmatpush1.bf16.msra.mxu0 %v2297
    %3530 = vmatprep.mubr.bf16.mxu0 %v688
    %3531 = vmatmul.mubr.bf16.gmra.mrb[0].mxu0 %v687
    %v3532 = vpop.f32.mrb[0].mxu0
    %v3533 = vadd.f32 %v3490, %v3532
    %v3534 = vpop.f32.mrb[0].mxu0
    %v3535 = vadd.f32 %v3492, %v3534
    %v3536 = vpop.f32.mrb[0].mxu0
    %v3537 = vadd.f32 %v3494, %v3536
    %v3538 = vpop.f32.mrb[0].mxu0
    %v3539 = vadd.f32 %v3496, %v3538
    %3540 = vdwg.mxu0
    %3541 = vmatprep.subr.bf16.mxu0 %v2306
    %3542 = vmatpush1.bf16.msra.mxu0 %v2305
    %3543 = vmatprep.subr.bf16.mxu0 %v2314
    %3544 = vmatpush1.bf16.msra.mxu0 %v2313
    %3545 = vmatprep.subr.bf16.mxu0 %v2322
    %3546 = vmatpush1.bf16.msra.mxu0 %v2321
    %3547 = vmatprep.subr.bf16.mxu0 %v2330
    %3548 = vmatpush1.bf16.msra.mxu0 %v2329
    %3549 = vmatprep.subr.bf16.mxu0 %v2338
    %3550 = vmatpush1.bf16.msra.mxu0 %v2337
    %3551 = vmatprep.subr.bf16.mxu0 %v2346
    %3552 = vmatpush1.bf16.msra.mxu0 %v2345
    %3553 = vmatprep.subr.bf16.mxu0 %v2354
    %3554 = vmatpush1.bf16.msra.mxu0 %v2353
    %3555 = vmatprep.subr.bf16.mxu0 %v2362
    %3556 = vmatpush1.bf16.msra.mxu0 %v2361
    %3557 = vmatprep.subr.bf16.mxu0 %v2370
    %3558 = vmatpush1.bf16.msra.mxu0 %v2369
    %3559 = vmatprep.subr.bf16.mxu0 %v2378
    %3560 = vmatpush1.bf16.msra.mxu0 %v2377
    %3561 = vmatprep.subr.bf16.mxu0 %v2386
    %3562 = vmatpush1.bf16.msra.mxu0 %v2385
    %3563 = vmatprep.subr.bf16.mxu0 %v2394
    %3564 = vmatpush1.bf16.msra.mxu0 %v2393
    %3565 = vmatprep.subr.bf16.mxu0 %v2402
    %3566 = vmatpush1.bf16.msra.mxu0 %v2401
    %3567 = vmatprep.subr.bf16.mxu0 %v2410
    %3568 = vmatpush1.bf16.msra.mxu0 %v2409
    %3569 = vmatprep.subr.bf16.mxu0 %v2418
    %3570 = vmatpush1.bf16.msra.mxu0 %v2417
    %3571 = vmatprep.subr.bf16.mxu0 %v2426
    %3572 = vmatpush1.bf16.msra.mxu0 %v2425
    %3573 = vmatprep.mubr.bf16.mxu0 %v690
    %3574 = vmatmul.mubr.bf16.gmra.mrb[0].mxu0 %v689
    %v3575 = vpop.f32.mrb[0].mxu0
    %v3576 = vadd.f32 %v3533, %v3575
    %v3577 = vpop.f32.mrb[0].mxu0
    %v3578 = vadd.f32 %v3535, %v3577
    %v3579 = vpop.f32.mrb[0].mxu0
    %v3580 = vadd.f32 %v3537, %v3579
    %v3581 = vpop.f32.mrb[0].mxu0
    %v3582 = vadd.f32 %v3539, %v3581
    %3583 = vdwg.mxu0
    %3584 = vmatprep.subr.bf16.mxu0 %v2434
    %3585 = vmatpush1.bf16.msra.mxu0 %v2433
    %3586 = vmatprep.subr.bf16.mxu0 %v2442
    %3587 = vmatpush1.bf16.msra.mxu0 %v2441
    %3588 = vmatprep.subr.bf16.mxu0 %v2450
    %3589 = vmatpush1.bf16.msra.mxu0 %v2449
    %3590 = vmatprep.subr.bf16.mxu0 %v2458
    %3591 = vmatpush1.bf16.msra.mxu0 %v2457
    %3592 = vmatprep.subr.bf16.mxu0 %v2466
    %3593 = vmatpush1.bf16.msra.mxu0 %v2465
    %3594 = vmatprep.subr.bf16.mxu0 %v2474
    %3595 = vmatpush1.bf16.msra.mxu0 %v2473
    %3596 = vmatprep.subr.bf16.mxu0 %v2482
    %3597 = vmatpush1.bf16.msra.mxu0 %v2481
    %3598 = vmatprep.subr.bf16.mxu0 %v2490
    %3599 = vmatpush1.bf16.msra.mxu0 %v2489
    %3600 = vmatprep.subr.bf16.mxu0 0
    %3601 = vmatpush1.bf16.msra.mxu0 0
    %3602 = vmatprep.subr.bf16.mxu0 0
    %3603 = vmatpush1.bf16.msra.mxu0 0
    %3604 = vmatprep.subr.bf16.mxu0 0
    %3605 = vmatpush1.bf16.msra.mxu0 0
    %3606 = vmatprep.subr.bf16.mxu0 0
    %3607 = vmatpush1.bf16.msra.mxu0 0
    %3608 = vmatprep.subr.bf16.mxu0 0
    %3609 = vmatpush1.bf16.msra.mxu0 0
    %3610 = vmatprep.subr.bf16.mxu0 0
    %3611 = vmatpush1.bf16.msra.mxu0 0
    %3612 = vmatprep.subr.bf16.mxu0 0
    %3613 = vmatpush1.bf16.msra.mxu0 0
    %3614 = vmatprep.subr.bf16.mxu0 0
    %3615 = vmatpush1.bf16.msra.mxu0 0
    %3616 = vmatprep.mubr.bf16.mxu0 0
    %3617 = vmatmul.mubr.bf16.gmra.mrb[0].mxu0 %v691
    %v3618 = vpop.f32.mrb[0].mxu0
    %v3619 = vadd.f32 %v3576, %v3618
    %v3620 = vpop.f32.mrb[0].mxu0
    %v3621 = vadd.f32 %v3578, %v3620
    %v3622 = vpop.f32.mrb[0].mxu0
    %v3623 = vadd.f32 %v3580, %v3622
    %v3624 = vpop.f32.mrb[0].mxu0
    %v3625 = vadd.f32 %v3582, %v3624
    %3626 = vdwg.mxu0
    %v3627 = vmul.f32 %v3103, 0.5
    %v3628 = vmul.f32 %v3105, 0.5
    %v3629 = vmul.f32 %v3275, 0.5
    %v3630 = vmul.f32 %v3277, 0.5
    %v3631 = vmul.f32 %v3447, 0.5
    %v3632 = vmul.f32 %v3449, 0.5
    %v3633 = vmul.f32 %v3619, 0.5
    %v3634 = vmul.f32 %v3621, 0.5
    %v3635 = vmul.f32 %v3107, 0.5
    %v3636 = vmul.f32 %v3109, 0.5
    %v3637 = vmul.f32 %v3279, 0.5
    %v3638 = vmul.f32 %v3281, 0.5
    %v3639 = vmul.f32 %v3451, 0.5
    %v3640 = vmul.f32 %v3453, 0.5
    %v3641 = vmul.f32 %v3623, 0.5
    %v3642 = vmul.f32 %v3625, 0.5
    %v3643 = vmul.f32 %v3103, 0.044715
    %v3644 = vmul.f32 %v3105, 0.044715
    %v3645 = vmul.f32 %v3275, 0.044715
    %v3646 = vmul.f32 %v3277, 0.044715
    %v3647 = vmul.f32 %v3447, 0.044715
    %v3648 = vmul.f32 %v3449, 0.044715
    %v3649 = vmul.f32 %v3619, 0.044715
    %v3650 = vmul.f32 %v3621, 0.044715
    %v3651 = vmul.f32 %v3107, 0.044715
    %v3652 = vmul.f32 %v3109, 0.044715
    %v3653 = vmul.f32 %v3279, 0.044715
    %v3654 = vmul.f32 %v3281, 0.044715
    %v3655 = vmul.f32 %v3451, 0.044715
    %v3656 = vmul.f32 %v3453, 0.044715
    %v3657 = vmul.f32 %v3623, 0.044715
    %v3658 = vmul.f32 %v3625, 0.044715
    %v3659 = vmul.f32 %v3643, %v3103
    %v3660 = vmul.f32 %v3644, %v3105
    %v3661 = vmul.f32 %v3645, %v3275
    %v3662 = vmul.f32 %v3646, %v3277
    %v3663 = vmul.f32 %v3647, %v3447
    %v3664 = vmul.f32 %v3648, %v3449
    %v3665 = vmul.f32 %v3649, %v3619
    %v3666 = vmul.f32 %v3650, %v3621
    %v3667 = vmul.f32 %v3651, %v3107
    %v3668 = vmul.f32 %v3652, %v3109
    %v3669 = vmul.f32 %v3653, %v3279
    %v3670 = vmul.f32 %v3654, %v3281
    %v3671 = vmul.f32 %v3655, %v3451
    %v3672 = vmul.f32 %v3656, %v3453
    %v3673 = vmul.f32 %v3657, %v3623
    %v3674 = vmul.f32 %v3658, %v3625
    %v3675 = vmul.f32 %v3659, %v3103
    %v3676 = vmul.f32 %v3660, %v3105
    %v3677 = vmul.f32 %v3661, %v3275
    %v3678 = vmul.f32 %v3662, %v3277
    %v3679 = vmul.f32 %v3663, %v3447
    %v3680 = vmul.f32 %v3664, %v3449
    %v3681 = vmul.f32 %v3665, %v3619
    %v3682 = vmul.f32 %v3666, %v3621
    %v3683 = vmul.f32 %v3667, %v3107
    %v3684 = vmul.f32 %v3668, %v3109
    %v3685 = vmul.f32 %v3669, %v3279
    %v3686 = vmul.f32 %v3670, %v3281
    %v3687 = vmul.f32 %v3671, %v3451
    %v3688 = vmul.f32 %v3672, %v3453
    %v3689 = vmul.f32 %v3673, %v3623
    %v3690 = vmul.f32 %v3674, %v3625
    %v3691 = vadd.f32 %v3103, %v3675
    %v3692 = vadd.f32 %v3105, %v3676
    %v3693 = vadd.f32 %v3275, %v3677
    %v3694 = vadd.f32 %v3277, %v3678
    %v3695 = vadd.f32 %v3447, %v3679
    %v3696 = vadd.f32 %v3449, %v3680
    %v3697 = vadd.f32 %v3619, %v3681
    %v3698 = vadd.f32 %v3621, %v3682
    %v3699 = vadd.f32 %v3107, %v3683
    %v3700 = vadd.f32 %v3109, %v3684
    %v3701 = vadd.f32 %v3279, %v3685
    %v3702 = vadd.f32 %v3281, %v3686
    %v3703 = vadd.f32 %v3451, %v3687
    %v3704 = vadd.f32 %v3453, %v3688
    %v3705 = vadd.f32 %v3623, %v3689
    %v3706 = vadd.f32 %v3625, %v3690
    %v3707 = vmul.f32 %v3691, 0.7978846
    %v3708 = vmul.f32 %v3692, 0.7978846
    %v3709 = vmul.f32 %v3693, 0.7978846
    %v3710 = vmul.f32 %v3694, 0.7978846
    %v3711 = vmul.f32 %v3695, 0.7978846
    %v3712 = vmul.f32 %v3696, 0.7978846
    %v3713 = vmul.f32 %v3697, 0.7978846
    %v3714 = vmul.f32 %v3698, 0.7978846
    %v3715 = vmul.f32 %v3699, 0.7978846
    %v3716 = vmul.f32 %v3700, 0.7978846
    %v3717 = vmul.f32 %v3701, 0.7978846
    %v3718 = vmul.f32 %v3702, 0.7978846
    %v3719 = vmul.f32 %v3703, 0.7978846
    %v3720 = vmul.f32 %v3704, 0.7978846
    %v3721 = vmul.f32 %v3705, 0.7978846
    %v3722 = vmul.f32 %v3706, 0.7978846
    %v3723 = vtanh.pop %v3707
    %v3724 = vtanh.pop %v3708
    %v3725 = vtanh.pop %v3709
    %v3726 = vtanh.pop %v3710
    %v3727 = vtanh.pop %v3711
    %v3728 = vtanh.pop %v3712
    %v3729 = vtanh.pop %v3713
    %v3730 = vtanh.pop %v3714
    %v3731 = vtanh.pop %v3715
    %v3732 = vtanh.pop %v3716
    %v3733 = vtanh.pop %v3717
    %v3734 = vtanh.pop %v3718
    %v3735 = vtanh.pop %v3719
    %v3736 = vtanh.pop %v3720
    %v3737 = vtanh.pop %v3721
    %v3738 = vtanh.pop %v3722
    %v3739 = vadd.f32 %v3723, 1.0
    %v3740 = vadd.f32 %v3724, 1.0
    %v3741 = vadd.f32 %v3725, 1.0
    %v3742 = vadd.f32 %v3726, 1.0
    %v3743 = vadd.f32 %v3727, 1.0
    %v3744 = vadd.f32 %v3728, 1.0
    %v3745 = vadd.f32 %v3729, 1.0
    %v3746 = vadd.f32 %v3730, 1.0
    %v3747 = vadd.f32 %v3731, 1.0
    %v3748 = vadd.f32 %v3732, 1.0
    %v3749 = vadd.f32 %v3733, 1.0
    %v3750 = vadd.f32 %v3734, 1.0
    %v3751 = vadd.f32 %v3735, 1.0
    %v3752 = vadd.f32 %v3736, 1.0
    %v3753 = vadd.f32 %v3737, 1.0
    %v3754 = vadd.f32 %v3738, 1.0
    %v3755 = vmul.f32 %v3627, %v3739
    %v3756 = vmul.f32 %v3628, %v3740
    %v3757 = vmul.f32 %v3629, %v3741
    %v3758 = vmul.f32 %v3630, %v3742
    %v3759 = vmul.f32 %v3631, %v3743
    %v3760 = vmul.f32 %v3632, %v3744
    %v3761 = vmul.f32 %v3633, %v3745
    %v3762 = vmul.f32 %v3634, %v3746
    %v3763 = vmul.f32 %v3635, %v3747
    %v3764 = vmul.f32 %v3636, %v3748
    %v3765 = vmul.f32 %v3637, %v3749
    %v3766 = vmul.f32 %v3638, %v3750
    %v3767 = vmul.f32 %v3639, %v3751
    %v3768 = vmul.f32 %v3640, %v3752
    %v3769 = vmul.f32 %v3641, %v3753
    %v3770 = vmul.f32 %v3642, %v3754
    %v3771 = vpack.c.bf16 %v3763, %v3755
    %v3772 = vpack.c.bf16 %v3764, %v3756
    %v3773 = vpack.c.bf16 %v3765, %v3757
    %v3774 = vpack.c.bf16 %v3766, %v3758
    %v3775 = vpack.c.bf16 %v3767, %v3759
    %v3776 = vpack.c.bf16 %v3768, %v3760
    %v3777 = vpack.c.bf16 %v3769, %v3761
    %v3778 = vpack.c.bf16 %v3770, %v3762
    %v3779 = vld [vmem:[#allocation6] sm:$0xff]
    %v3780 = vld [vmem:[#allocation6 + $0x8] sm:$0xff]
    %v3781 = vld [vmem:[#allocation6 + $0x10] sm:$0xff]
    %v3782 = vld [vmem:[#allocation6 + $0x18] sm:$0xff]
    %v3783 = vld [vmem:[#allocation6 + $0x20] sm:$0xff]
    %v3784 = vld [vmem:[#allocation6 + $0x28] sm:$0xff]
    %v3785 = vld [vmem:[#allocation6 + $0x30] sm:$0xff]
    %v3786 = vld [vmem:[#allocation6 + $0x38] sm:$0xff]
    %v3787 = vld [vmem:[#allocation6 + $0x40] sm:$0xff]
    %v3788 = vld [vmem:[#allocation6 + $0x48] sm:$0xff]
    %v3789 = vld [vmem:[#allocation6 + $0x50] sm:$0xff]
    %v3790 = vld [vmem:[#allocation6 + $0x58] sm:$0xff]
    %v3791 = vld [vmem:[#allocation6 + $0x60] sm:$0xff]
    %v3792 = vld [vmem:[#allocation6 + $0x68] sm:$0xff]
    %v3793 = vld [vmem:[#allocation6 + $0x70] sm:$0xff]
    %v3794 = vld [vmem:[#allocation6 + $0x78] sm:$0xff]
    %v3795 = vld [vmem:[#allocation6 + $0x80] sm:$0xff]
    %v3796 = vld [vmem:[#allocation6 + $0x88] sm:$0xff]
    %v3797 = vld [vmem:[#allocation6 + $0x90] sm:$0xff]
    %v3798 = vld [vmem:[#allocation6 + $0x98] sm:$0xff]
    %v3799 = vld [vmem:[#allocation6 + $0xa0] sm:$0xff]
    %v3800 = vld [vmem:[#allocation6 + $0xa8] sm:$0xff]
    %v3801 = vld [vmem:[#allocation6 + $0xb0] sm:$0xff]
    %v3802 = vld [vmem:[#allocation6 + $0xb8] sm:$0xff]
    %v3803 = vld [vmem:[#allocation6 + $0xc0] sm:$0xff]
    %v3804 = vld [vmem:[#allocation6 + $0xc8] sm:$0xff]
    %v3805 = vld [vmem:[#allocation6 + $0xd0] sm:$0xff]
    %v3806 = vld [vmem:[#allocation6 + $0xd8] sm:$0xff]
    %v3807 = vld [vmem:[#allocation6 + $0xe0] sm:$0xff]
    %v3808 = vld [vmem:[#allocation6 + $0xe8] sm:$0xff]
    %v3809 = vld [vmem:[#allocation6 + $0xf0] sm:$0xff]
    %v3810 = vld [vmem:[#allocation6 + $0xf8] sm:$0xff]
    %v3811 = vld [vmem:[#allocation6 + $0x100] sm:$0xff]
    %v3812 = vld [vmem:[#allocation6 + $0x108] sm:$0xff]
    %v3813 = vld [vmem:[#allocation6 + $0x110] sm:$0xff]
    %v3814 = vld [vmem:[#allocation6 + $0x118] sm:$0xff]
    %v3815 = vld [vmem:[#allocation6 + $0x120] sm:$0xff]
    %v3816 = vld [vmem:[#allocation6 + $0x128] sm:$0xff]
    %v3817 = vld [vmem:[#allocation6 + $0x130] sm:$0xff]
    %v3818 = vld [vmem:[#allocation6 + $0x138] sm:$0xff]
    %v3819 = vld [vmem:[#allocation6 + $0x140] sm:$0xff]
    %v3820 = vld [vmem:[#allocation6 + $0x148] sm:$0xff]
    %v3821 = vld [vmem:[#allocation6 + $0x150] sm:$0xff]
    %v3822 = vld [vmem:[#allocation6 + $0x158] sm:$0xff]
    %v3823 = vld [vmem:[#allocation6 + $0x160] sm:$0xff]
    %v3824 = vld [vmem:[#allocation6 + $0x168] sm:$0xff]
    %v3825 = vld [vmem:[#allocation6 + $0x170] sm:$0xff]
    %v3826 = vld [vmem:[#allocation6 + $0x178] sm:$0xff]
    %v3827 = vld [vmem:[#allocation6 + $0x180] sm:$0xff]
    %v3828 = vld [vmem:[#allocation6 + $0x188] sm:$0xff]
    %v3829 = vld [vmem:[#allocation6 + $0x190] sm:$0xff]
    %v3830 = vld [vmem:[#allocation6 + $0x198] sm:$0xff]
    %v3831 = vld [vmem:[#allocation6 + $0x1a0] sm:$0xff]
    %v3832 = vld [vmem:[#allocation6 + $0x1a8] sm:$0xff]
    %v3833 = vld [vmem:[#allocation6 + $0x1b0] sm:$0xff]
    %v3834 = vld [vmem:[#allocation6 + $0x1b8] sm:$0xff]
    %v3835 = vld [vmem:[#allocation6 + $0x1c0] sm:$0xff]
    %v3836 = vld [vmem:[#allocation6 + $0x1c8] sm:$0xff]
    %v3837 = vld [vmem:[#allocation6 + $0x1d0] sm:$0xff]
    %v3838 = vld [vmem:[#allocation6 + $0x1d8] sm:$0xff]
    %v3839 = vld [vmem:[#allocation6 + $0x1e0] sm:$0xff]
    %v3840 = vld [vmem:[#allocation6 + $0x1e8] sm:$0xff]
    %v3841 = vld [vmem:[#allocation6 + $0x1f0] sm:$0xff]
    %v3842 = vld [vmem:[#allocation6 + $0x1f8] sm:$0xff]
    %v3843 = vld [vmem:[#allocation6 + $0x200] sm:$0xff]
    %v3844 = vld [vmem:[#allocation6 + $0x208] sm:$0xff]
    %v3845 = vld [vmem:[#allocation6 + $0x210] sm:$0xff]
    %v3846 = vld [vmem:[#allocation6 + $0x218] sm:$0xff]
    %v3847 = vld [vmem:[#allocation6 + $0x220] sm:$0xff]
    %v3848 = vld [vmem:[#allocation6 + $0x228] sm:$0xff]
    %v3849 = vld [vmem:[#allocation6 + $0x230] sm:$0xff]
    %v3850 = vld [vmem:[#allocation6 + $0x238] sm:$0xff]
    %v3851 = vld [vmem:[#allocation6 + $0x240] sm:$0xff]
    %v3852 = vld [vmem:[#allocation6 + $0x248] sm:$0xff]
    %v3853 = vld [vmem:[#allocation6 + $0x250] sm:$0xff]
    %v3854 = vld [vmem:[#allocation6 + $0x258] sm:$0xff]
    %v3855 = vld [vmem:[#allocation6 + $0x260] sm:$0xff]
    %v3856 = vld [vmem:[#allocation6 + $0x268] sm:$0xff]
    %v3857 = vld [vmem:[#allocation6 + $0x270] sm:$0xff]
    %v3858 = vld [vmem:[#allocation6 + $0x278] sm:$0xff]
    %v3859 = vld [vmem:[#allocation6 + $0x280] sm:$0xff]
    %v3860 = vld [vmem:[#allocation6 + $0x288] sm:$0xff]
    %v3861 = vld [vmem:[#allocation6 + $0x290] sm:$0xff]
    %v3862 = vld [vmem:[#allocation6 + $0x298] sm:$0xff]
    %v3863 = vld [vmem:[#allocation6 + $0x2a0] sm:$0xff]
    %v3864 = vld [vmem:[#allocation6 + $0x2a8] sm:$0xff]
    %v3865 = vld [vmem:[#allocation6 + $0x2b0] sm:$0xff]
    %v3866 = vld [vmem:[#allocation6 + $0x2b8] sm:$0xff]
    %v3867 = vld [vmem:[#allocation6 + $0x2c0] sm:$0xff]
    %v3868 = vld [vmem:[#allocation6 + $0x2c8] sm:$0xff]
    %v3869 = vld [vmem:[#allocation6 + $0x2d0] sm:$0xff]
    %v3870 = vld [vmem:[#allocation6 + $0x2d8] sm:$0xff]
    %v3871 = vld [vmem:[#allocation6 + $0x2e0] sm:$0xff]
    %v3872 = vld [vmem:[#allocation6 + $0x2e8] sm:$0xff]
    %v3873 = vld [vmem:[#allocation6 + $0x2f0] sm:$0xff]
    %v3874 = vld [vmem:[#allocation6 + $0x2f8] sm:$0xff]
    %v3875 = vld [vmem:[#allocation6 + $0x300] sm:$0xff]
    %v3876 = vld [vmem:[#allocation6 + $0x308] sm:$0xff]
    %v3877 = vld [vmem:[#allocation6 + $0x310] sm:$0xff]
    %v3878 = vld [vmem:[#allocation6 + $0x318] sm:$0xff]
    %v3879 = vld [vmem:[#allocation6 + $0x320] sm:$0xff]
    %v3880 = vld [vmem:[#allocation6 + $0x328] sm:$0xff]
    %v3881 = vld [vmem:[#allocation6 + $0x330] sm:$0xff]
    %v3882 = vld [vmem:[#allocation6 + $0x338] sm:$0xff]
    %v3883 = vld [vmem:[#allocation6 + $0x340] sm:$0xff]
    %v3884 = vld [vmem:[#allocation6 + $0x348] sm:$0xff]
    %v3885 = vld [vmem:[#allocation6 + $0x350] sm:$0xff]
    %v3886 = vld [vmem:[#allocation6 + $0x358] sm:$0xff]
    %v3887 = vld [vmem:[#allocation6 + $0x360] sm:$0xff]
    %v3888 = vld [vmem:[#allocation6 + $0x368] sm:$0xff]
    %v3889 = vld [vmem:[#allocation6 + $0x370] sm:$0xff]
    %v3890 = vld [vmem:[#allocation6 + $0x378] sm:$0xff]
    %v3891 = vld [vmem:[#allocation6 + $0x380] sm:$0xff]
    %v3892 = vld [vmem:[#allocation6 + $0x388] sm:$0xff]
    %v3893 = vld [vmem:[#allocation6 + $0x390] sm:$0xff]
    %v3894 = vld [vmem:[#allocation6 + $0x398] sm:$0xff]
    %v3895 = vld [vmem:[#allocation6 + $0x3a0] sm:$0xff]
    %v3896 = vld [vmem:[#allocation6 + $0x3a8] sm:$0xff]
    %v3897 = vld [vmem:[#allocation6 + $0x3b0] sm:$0xff]
    %v3898 = vld [vmem:[#allocation6 + $0x3b8] sm:$0xff]
    %v3899 = vld [vmem:[#allocation6 + $0x3c0] sm:$0xff]
    %v3900 = vld [vmem:[#allocation6 + $0x3c8] sm:$0xff]
    %v3901 = vld [vmem:[#allocation6 + $0x3d0] sm:$0xff]
    %v3902 = vld [vmem:[#allocation6 + $0x3d8] sm:$0xff]
    %v3903 = vld [vmem:[#allocation6 + $0x3e0] sm:$0xff]
    %v3904 = vld [vmem:[#allocation6 + $0x3e8] sm:$0xff]
    %v3905 = vld [vmem:[#allocation6 + $0x3f0] sm:$0xff]
    %v3906 = vld [vmem:[#allocation6 + $0x3f8] sm:$0xff]
    %v3907 = vld [vmem:[#allocation7] sm:$0x3]
    %v3909 = vlaneseq
    %v3910 = vshrl.u32 %v3909, 7
    %v3911 = vsub.s32 0, %v3910
    %v3912 = vrot.slane %v3907, %v3911
    %v3913 = vlaneseq
    %v3914 = vshrl.u32 %v3913, 7
    %v3915 = vsub.s32 1, %v3914
    %v3916 = vrot.slane %v3907, %v3915
    %v4047 = vunpack.c.l.b16 %v3779
    %v4048 = vunpack.c.h.b16 %v3779
    %v4049 = vunpack.c.l.b16 %v3780
    %v4050 = vunpack.c.h.b16 %v3780
    %v4051 = vunpack.c.l.b16 %v3781
    %v4052 = vunpack.c.h.b16 %v3781
    %v4053 = vunpack.c.l.b16 %v3782
    %v4054 = vunpack.c.h.b16 %v3782
    %v4055 = vunpack.c.l.b16 %v3783
    %v4056 = vunpack.c.h.b16 %v3783
    %v4057 = vunpack.c.l.b16 %v3784
    %v4058 = vunpack.c.h.b16 %v3784
    %v4059 = vunpack.c.l.b16 %v3785
    %v4060 = vunpack.c.h.b16 %v3785
    %v4061 = vunpack.c.l.b16 %v3786
    %v4062 = vunpack.c.h.b16 %v3786
    %v4063 = vunpack.c.l.b16 %v3787
    %v4064 = vunpack.c.h.b16 %v3787
    %v4065 = vunpack.c.l.b16 %v3788
    %v4066 = vunpack.c.h.b16 %v3788
    %v4067 = vunpack.c.l.b16 %v3789
    %v4068 = vunpack.c.h.b16 %v3789
    %v4069 = vunpack.c.l.b16 %v3790
    %v4070 = vunpack.c.h.b16 %v3790
    %v4071 = vunpack.c.l.b16 %v3791
    %v4072 = vunpack.c.h.b16 %v3791
    %v4073 = vunpack.c.l.b16 %v3792
    %v4074 = vunpack.c.h.b16 %v3792
    %v4075 = vunpack.c.l.b16 %v3793
    %v4076 = vunpack.c.h.b16 %v3793
    %v4077 = vunpack.c.l.b16 %v3794
    %v4078 = vunpack.c.h.b16 %v3794
    %v4079 = vunpack.c.l.b16 %v3795
    %v4080 = vunpack.c.h.b16 %v3795
    %v4081 = vunpack.c.l.b16 %v3796
    %v4082 = vunpack.c.h.b16 %v3796
    %v4083 = vunpack.c.l.b16 %v3797
    %v4084 = vunpack.c.h.b16 %v3797
    %v4085 = vunpack.c.l.b16 %v3798
    %v4086 = vunpack.c.h.b16 %v3798
    %v4087 = vunpack.c.l.b16 %v3799
    %v4088 = vunpack.c.h.b16 %v3799
    %v4089 = vunpack.c.l.b16 %v3800
    %v4090 = vunpack.c.h.b16 %v3800
    %v4091 = vunpack.c.l.b16 %v3801
    %v4092 = vunpack.c.h.b16 %v3801
    %v4093 = vunpack.c.l.b16 %v3802
    %v4094 = vunpack.c.h.b16 %v3802
    %v4095 = vunpack.c.l.b16 %v3803
    %v4096 = vunpack.c.h.b16 %v3803
    %v4097 = vunpack.c.l.b16 %v3804
    %v4098 = vunpack.c.h.b16 %v3804
    %v4099 = vunpack.c.l.b16 %v3805
    %v4100 = vunpack.c.h.b16 %v3805
    %v4101 = vunpack.c.l.b16 %v3806
    %v4102 = vunpack.c.h.b16 %v3806
    %v4103 = vunpack.c.l.b16 %v3807
    %v4104 = vunpack.c.h.b16 %v3807
    %v4105 = vunpack.c.l.b16 %v3808
    %v4106 = vunpack.c.h.b16 %v3808
    %v4107 = vunpack.c.l.b16 %v3809
    %v4108 = vunpack.c.h.b16 %v3809
    %v4109 = vunpack.c.l.b16 %v3810
    %v4110 = vunpack.c.h.b16 %v3810
    %v4111 = vunpack.c.l.b16 %v3811
    %v4112 = vunpack.c.h.b16 %v3811
    %v4113 = vunpack.c.l.b16 %v3812
    %v4114 = vunpack.c.h.b16 %v3812
    %v4115 = vunpack.c.l.b16 %v3813
    %v4116 = vunpack.c.h.b16 %v3813
    %v4117 = vunpack.c.l.b16 %v3814
    %v4118 = vunpack.c.h.b16 %v3814
    %v4119 = vunpack.c.l.b16 %v3815
    %v4120 = vunpack.c.h.b16 %v3815
    %v4121 = vunpack.c.l.b16 %v3816
    %v4122 = vunpack.c.h.b16 %v3816
    %v4123 = vunpack.c.l.b16 %v3817
    %v4124 = vunpack.c.h.b16 %v3817
    %v4125 = vunpack.c.l.b16 %v3818
    %v4126 = vunpack.c.h.b16 %v3818
    %v4127 = vunpack.c.l.b16 %v3819
    %v4128 = vunpack.c.h.b16 %v3819
    %v4129 = vunpack.c.l.b16 %v3820
    %v4130 = vunpack.c.h.b16 %v3820
    %v4131 = vunpack.c.l.b16 %v3821
    %v4132 = vunpack.c.h.b16 %v3821
    %v4133 = vunpack.c.l.b16 %v3822
    %v4134 = vunpack.c.h.b16 %v3822
    %v4135 = vunpack.c.l.b16 %v3823
    %v4136 = vunpack.c.h.b16 %v3823
    %v4137 = vunpack.c.l.b16 %v3824
    %v4138 = vunpack.c.h.b16 %v3824
    %v4139 = vunpack.c.l.b16 %v3825
    %v4140 = vunpack.c.h.b16 %v3825
    %v4141 = vunpack.c.l.b16 %v3826
    %v4142 = vunpack.c.h.b16 %v3826
    %v4143 = vunpack.c.l.b16 %v3827
    %v4144 = vunpack.c.h.b16 %v3827
    %v4145 = vunpack.c.l.b16 %v3828
    %v4146 = vunpack.c.h.b16 %v3828
    %v4147 = vunpack.c.l.b16 %v3829
    %v4148 = vunpack.c.h.b16 %v3829
    %v4149 = vunpack.c.l.b16 %v3830
    %v4150 = vunpack.c.h.b16 %v3830
    %v4151 = vunpack.c.l.b16 %v3831
    %v4152 = vunpack.c.h.b16 %v3831
    %v4153 = vunpack.c.l.b16 %v3832
    %v4154 = vunpack.c.h.b16 %v3832
    %v4155 = vunpack.c.l.b16 %v3833
    %v4156 = vunpack.c.h.b16 %v3833
    %v4157 = vunpack.c.l.b16 %v3834
    %v4158 = vunpack.c.h.b16 %v3834
    %v4159 = vunpack.c.l.b16 %v3835
    %v4160 = vunpack.c.h.b16 %v3835
    %v4161 = vunpack.c.l.b16 %v3836
    %v4162 = vunpack.c.h.b16 %v3836
    %v4163 = vunpack.c.l.b16 %v3837
    %v4164 = vunpack.c.h.b16 %v3837
    %v4165 = vunpack.c.l.b16 %v3838
    %v4166 = vunpack.c.h.b16 %v3838
    %v4167 = vunpack.c.l.b16 %v3839
    %v4168 = vunpack.c.h.b16 %v3839
    %v4169 = vunpack.c.l.b16 %v3840
    %v4170 = vunpack.c.h.b16 %v3840
    %v4171 = vunpack.c.l.b16 %v3841
    %v4172 = vunpack.c.h.b16 %v3841
    %v4173 = vunpack.c.l.b16 %v3842
    %v4174 = vunpack.c.h.b16 %v3842
    %v4175 = vunpack.c.l.b16 %v3843
    %v4176 = vunpack.c.h.b16 %v3843
    %v4177 = vunpack.c.l.b16 %v3844
    %v4178 = vunpack.c.h.b16 %v3844
    %v4179 = vunpack.c.l.b16 %v3845
    %v4180 = vunpack.c.h.b16 %v3845
    %v4181 = vunpack.c.l.b16 %v3846
    %v4182 = vunpack.c.h.b16 %v3846
    %v4183 = vunpack.c.l.b16 %v3847
    %v4184 = vunpack.c.h.b16 %v3847
    %v4185 = vunpack.c.l.b16 %v3848
    %v4186 = vunpack.c.h.b16 %v3848
    %v4187 = vunpack.c.l.b16 %v3849
    %v4188 = vunpack.c.h.b16 %v3849
    %v4189 = vunpack.c.l.b16 %v3850
    %v4190 = vunpack.c.h.b16 %v3850
    %v4191 = vunpack.c.l.b16 %v3851
    %v4192 = vunpack.c.h.b16 %v3851
    %v4193 = vunpack.c.l.b16 %v3852
    %v4194 = vunpack.c.h.b16 %v3852
    %v4195 = vunpack.c.l.b16 %v3853
    %v4196 = vunpack.c.h.b16 %v3853
    %v4197 = vunpack.c.l.b16 %v3854
    %v4198 = vunpack.c.h.b16 %v3854
    %v4199 = vunpack.c.l.b16 %v3855
    %v4200 = vunpack.c.h.b16 %v3855
    %v4201 = vunpack.c.l.b16 %v3856
    %v4202 = vunpack.c.h.b16 %v3856
    %v4203 = vunpack.c.l.b16 %v3857
    %v4204 = vunpack.c.h.b16 %v3857
    %v4205 = vunpack.c.l.b16 %v3858
    %v4206 = vunpack.c.h.b16 %v3858
    %v4207 = vunpack.c.l.b16 %v3859
    %v4208 = vunpack.c.h.b16 %v3859
    %v4209 = vunpack.c.l.b16 %v3860
    %v4210 = vunpack.c.h.b16 %v3860
    %v4211 = vunpack.c.l.b16 %v3861
    %v4212 = vunpack.c.h.b16 %v3861
    %v4213 = vunpack.c.l.b16 %v3862
    %v4214 = vunpack.c.h.b16 %v3862
    %v4215 = vunpack.c.l.b16 %v3863
    %v4216 = vunpack.c.h.b16 %v3863
    %v4217 = vunpack.c.l.b16 %v3864
    %v4218 = vunpack.c.h.b16 %v3864
    %v4219 = vunpack.c.l.b16 %v3865
    %v4220 = vunpack.c.h.b16 %v3865
    %v4221 = vunpack.c.l.b16 %v3866
    %v4222 = vunpack.c.h.b16 %v3866
    %v4223 = vunpack.c.l.b16 %v3867
    %v4224 = vunpack.c.h.b16 %v3867
    %v4225 = vunpack.c.l.b16 %v3868
    %v4226 = vunpack.c.h.b16 %v3868
    %v4227 = vunpack.c.l.b16 %v3869
    %v4228 = vunpack.c.h.b16 %v3869
    %v4229 = vunpack.c.l.b16 %v3870
    %v4230 = vunpack.c.h.b16 %v3870
    %v4231 = vunpack.c.l.b16 %v3871
    %v4232 = vunpack.c.h.b16 %v3871
    %v4233 = vunpack.c.l.b16 %v3872
    %v4234 = vunpack.c.h.b16 %v3872
    %v4235 = vunpack.c.l.b16 %v3873
    %v4236 = vunpack.c.h.b16 %v3873
    %v4237 = vunpack.c.l.b16 %v3874
    %v4238 = vunpack.c.h.b16 %v3874
    %v4239 = vunpack.c.l.b16 %v3875
    %v4240 = vunpack.c.h.b16 %v3875
    %v4241 = vunpack.c.l.b16 %v3876
    %v4242 = vunpack.c.h.b16 %v3876
    %v4243 = vunpack.c.l.b16 %v3877
    %v4244 = vunpack.c.h.b16 %v3877
    %v4245 = vunpack.c.l.b16 %v3878
    %v4246 = vunpack.c.h.b16 %v3878
    %v4247 = vunpack.c.l.b16 %v3879
    %v4248 = vunpack.c.h.b16 %v3879
    %v4249 = vunpack.c.l.b16 %v3880
    %v4250 = vunpack.c.h.b16 %v3880
    %v4251 = vunpack.c.l.b16 %v3881
    %v4252 = vunpack.c.h.b16 %v3881
    %v4253 = vunpack.c.l.b16 %v3882
    %v4254 = vunpack.c.h.b16 %v3882
    %v4255 = vunpack.c.l.b16 %v3883
    %v4256 = vunpack.c.h.b16 %v3883
    %v4257 = vunpack.c.l.b16 %v3884
    %v4258 = vunpack.c.h.b16 %v3884
    %v4259 = vunpack.c.l.b16 %v3885
    %v4260 = vunpack.c.h.b16 %v3885
    %v4261 = vunpack.c.l.b16 %v3886
    %v4262 = vunpack.c.h.b16 %v3886
    %v4263 = vunpack.c.l.b16 %v3887
    %v4264 = vunpack.c.h.b16 %v3887
    %v4265 = vunpack.c.l.b16 %v3888
    %v4266 = vunpack.c.h.b16 %v3888
    %v4267 = vunpack.c.l.b16 %v3889
    %v4268 = vunpack.c.h.b16 %v3889
    %v4269 = vunpack.c.l.b16 %v3890
    %v4270 = vunpack.c.h.b16 %v3890
    %v4271 = vunpack.c.l.b16 %v3891
    %v4272 = vunpack.c.h.b16 %v3891
    %v4273 = vunpack.c.l.b16 %v3892
    %v4274 = vunpack.c.h.b16 %v3892
    %v4275 = vunpack.c.l.b16 %v3893
    %v4276 = vunpack.c.h.b16 %v3893
    %v4277 = vunpack.c.l.b16 %v3894
    %v4278 = vunpack.c.h.b16 %v3894
    %v4279 = vunpack.c.l.b16 %v3895
    %v4280 = vunpack.c.h.b16 %v3895
    %v4281 = vunpack.c.l.b16 %v3896
    %v4282 = vunpack.c.h.b16 %v3896
    %v4283 = vunpack.c.l.b16 %v3897
    %v4284 = vunpack.c.h.b16 %v3897
    %v4285 = vunpack.c.l.b16 %v3898
    %v4286 = vunpack.c.h.b16 %v3898
    %v4287 = vunpack.c.l.b16 %v3899
    %v4288 = vunpack.c.h.b16 %v3899
    %v4289 = vunpack.c.l.b16 %v3900
    %v4290 = vunpack.c.h.b16 %v3900
    %v4291 = vunpack.c.l.b16 %v3901
    %v4292 = vunpack.c.h.b16 %v3901
    %v4293 = vunpack.c.l.b16 %v3902
    %v4294 = vunpack.c.h.b16 %v3902
    %v4295 = vunpack.c.l.b16 %v3903
    %v4296 = vunpack.c.h.b16 %v3903
    %v4297 = vunpack.c.l.b16 %v3904
    %v4298 = vunpack.c.h.b16 %v3904
    %v4299 = vunpack.c.l.b16 %v3905
    %v4300 = vunpack.c.h.b16 %v3905
    %v4301 = vunpack.c.l.b16 %v3906
    %v4302 = vunpack.c.h.b16 %v3906
    %v4303 = vpack.c.b16 %v4049, %v4047
    %v4304 = vpack.c.b16 %v4050, %v4048
    %v4305 = vpack.c.b16 %v4053, %v4051
    %v4306 = vpack.c.b16 %v4054, %v4052
    %v4307 = vpack.c.b16 %v4057, %v4055
    %v4308 = vpack.c.b16 %v4058, %v4056
    %v4309 = vpack.c.b16 %v4061, %v4059
    %v4310 = vpack.c.b16 %v4062, %v4060
    %v4311 = vpack.c.b16 %v4065, %v4063
    %v4312 = vpack.c.b16 %v4066, %v4064
    %v4313 = vpack.c.b16 %v4069, %v4067
    %v4314 = vpack.c.b16 %v4070, %v4068
    %v4315 = vpack.c.b16 %v4073, %v4071
    %v4316 = vpack.c.b16 %v4074, %v4072
    %v4317 = vpack.c.b16 %v4077, %v4075
    %v4318 = vpack.c.b16 %v4078, %v4076
    %v4319 = vpack.c.b16 %v4081, %v4079
    %v4320 = vpack.c.b16 %v4082, %v4080
    %v4321 = vpack.c.b16 %v4085, %v4083
    %v4322 = vpack.c.b16 %v4086, %v4084
    %v4323 = vpack.c.b16 %v4089, %v4087
    %v4324 = vpack.c.b16 %v4090, %v4088
    %v4325 = vpack.c.b16 %v4093, %v4091
    %v4326 = vpack.c.b16 %v4094, %v4092
    %v4327 = vpack.c.b16 %v4097, %v4095
    %v4328 = vpack.c.b16 %v4098, %v4096
    %v4329 = vpack.c.b16 %v4101, %v4099
    %v4330 = vpack.c.b16 %v4102, %v4100
    %v4331 = vpack.c.b16 %v4105, %v4103
    %v4332 = vpack.c.b16 %v4106, %v4104
    %v4333 = vpack.c.b16 %v4109, %v4107
    %v4334 = vpack.c.b16 %v4110, %v4108
    %v4335 = vpack.c.b16 %v4113, %v4111
    %v4336 = vpack.c.b16 %v4114, %v4112
    %v4337 = vpack.c.b16 %v4117, %v4115
    %v4338 = vpack.c.b16 %v4118, %v4116
    %v4339 = vpack.c.b16 %v4121, %v4119
    %v4340 = vpack.c.b16 %v4122, %v4120
    %v4341 = vpack.c.b16 %v4125, %v4123
    %v4342 = vpack.c.b16 %v4126, %v4124
    %v4343 = vpack.c.b16 %v4129, %v4127
    %v4344 = vpack.c.b16 %v4130, %v4128
    %v4345 = vpack.c.b16 %v4133, %v4131
    %v4346 = vpack.c.b16 %v4134, %v4132
    %v4347 = vpack.c.b16 %v4137, %v4135
    %v4348 = vpack.c.b16 %v4138, %v4136
    %v4349 = vpack.c.b16 %v4141, %v4139
    %v4350 = vpack.c.b16 %v4142, %v4140
    %v4351 = vpack.c.b16 %v4145, %v4143
    %v4352 = vpack.c.b16 %v4146, %v4144
    %v4353 = vpack.c.b16 %v4149, %v4147
    %v4354 = vpack.c.b16 %v4150, %v4148
    %v4355 = vpack.c.b16 %v4153, %v4151
    %v4356 = vpack.c.b16 %v4154, %v4152
    %v4357 = vpack.c.b16 %v4157, %v4155
    %v4358 = vpack.c.b16 %v4158, %v4156
    %v4359 = vpack.c.b16 %v4161, %v4159
    %v4360 = vpack.c.b16 %v4162, %v4160
    %v4361 = vpack.c.b16 %v4165, %v4163
    %v4362 = vpack.c.b16 %v4166, %v4164
    %v4363 = vpack.c.b16 %v4169, %v4167
    %v4364 = vpack.c.b16 %v4170, %v4168
    %v4365 = vpack.c.b16 %v4173, %v4171
    %v4366 = vpack.c.b16 %v4174, %v4172
    %v4367 = vpack.c.b16 %v4177, %v4175
    %v4368 = vpack.c.b16 %v4178, %v4176
    %v4369 = vpack.c.b16 %v4181, %v4179
    %v4370 = vpack.c.b16 %v4182, %v4180
    %v4371 = vpack.c.b16 %v4185, %v4183
    %v4372 = vpack.c.b16 %v4186, %v4184
    %v4373 = vpack.c.b16 %v4189, %v4187
    %v4374 = vpack.c.b16 %v4190, %v4188
    %v4375 = vpack.c.b16 %v4193, %v4191
    %v4376 = vpack.c.b16 %v4194, %v4192
    %v4377 = vpack.c.b16 %v4197, %v4195
    %v4378 = vpack.c.b16 %v4198, %v4196
    %v4379 = vpack.c.b16 %v4201, %v4199
    %v4380 = vpack.c.b16 %v4202, %v4200
    %v4381 = vpack.c.b16 %v4205, %v4203
    %v4382 = vpack.c.b16 %v4206, %v4204
    %v4383 = vpack.c.b16 %v4209, %v4207
    %v4384 = vpack.c.b16 %v4210, %v4208
    %v4385 = vpack.c.b16 %v4213, %v4211
    %v4386 = vpack.c.b16 %v4214, %v4212
    %v4387 = vpack.c.b16 %v4217, %v4215
    %v4388 = vpack.c.b16 %v4218, %v4216
    %v4389 = vpack.c.b16 %v4221, %v4219
    %v4390 = vpack.c.b16 %v4222, %v4220
    %v4391 = vpack.c.b16 %v4225, %v4223
    %v4392 = vpack.c.b16 %v4226, %v4224
    %v4393 = vpack.c.b16 %v4229, %v4227
    %v4394 = vpack.c.b16 %v4230, %v4228
    %v4395 = vpack.c.b16 %v4233, %v4231
    %v4396 = vpack.c.b16 %v4234, %v4232
    %v4397 = vpack.c.b16 %v4237, %v4235
    %v4398 = vpack.c.b16 %v4238, %v4236
    %v4399 = vpack.c.b16 %v4241, %v4239
    %v4400 = vpack.c.b16 %v4242, %v4240
    %v4401 = vpack.c.b16 %v4245, %v4243
    %v4402 = vpack.c.b16 %v4246, %v4244
    %v4403 = vpack.c.b16 %v4249, %v4247
    %v4404 = vpack.c.b16 %v4250, %v4248
    %v4405 = vpack.c.b16 %v4253, %v4251
    %v4406 = vpack.c.b16 %v4254, %v4252
    %v4407 = vpack.c.b16 %v4257, %v4255
    %v4408 = vpack.c.b16 %v4258, %v4256
    %v4409 = vpack.c.b16 %v4261, %v4259
    %v4410 = vpack.c.b16 %v4262, %v4260
    %v4411 = vpack.c.b16 %v4265, %v4263
    %v4412 = vpack.c.b16 %v4266, %v4264
    %v4413 = vpack.c.b16 %v4269, %v4267
    %v4414 = vpack.c.b16 %v4270, %v4268
    %v4415 = vpack.c.b16 %v4273, %v4271
    %v4416 = vpack.c.b16 %v4274, %v4272
    %v4417 = vpack.c.b16 %v4277, %v4275
    %v4418 = vpack.c.b16 %v4278, %v4276
    %v4419 = vpack.c.b16 %v4281, %v4279
    %v4420 = vpack.c.b16 %v4282, %v4280
    %v4421 = vpack.c.b16 %v4285, %v4283
    %v4422 = vpack.c.b16 %v4286, %v4284
    %v4423 = vpack.c.b16 %v4289, %v4287
    %v4424 = vpack.c.b16 %v4290, %v4288
    %v4425 = vpack.c.b16 %v4293, %v4291
    %v4426 = vpack.c.b16 %v4294, %v4292
    %v4427 = vpack.c.b16 %v4297, %v4295
    %v4428 = vpack.c.b16 %v4298, %v4296
    %v4429 = vpack.c.b16 %v4301, %v4299
    %v4430 = vpack.c.b16 %v4302, %v4300
    %4559 = vmatprep.subr.bf16.mxu0 %v4304
    %4560 = vmatpush1.bf16.msra.mxu0 %v4303
    %4561 = vmatprep.subr.bf16.mxu0 %v4306
    %4562 = vmatpush1.bf16.msra.mxu0 %v4305
    %4563 = vmatprep.subr.bf16.mxu0 %v4308
    %4564 = vmatpush1.bf16.msra.mxu0 %v4307
    %4565 = vmatprep.subr.bf16.mxu0 %v4310
    %4566 = vmatpush1.bf16.msra.mxu0 %v4309
    %4567 = vmatprep.subr.bf16.mxu0 %v4312
    %4568 = vmatpush1.bf16.msra.mxu0 %v4311
    %4569 = vmatprep.subr.bf16.mxu0 %v4314
    %4570 = vmatpush1.bf16.msra.mxu0 %v4313
    %4571 = vmatprep.subr.bf16.mxu0 %v4316
    %4572 = vmatpush1.bf16.msra.mxu0 %v4315
    %4573 = vmatprep.subr.bf16.mxu0 %v4318
    %4574 = vmatpush1.bf16.msra.mxu0 %v4317
    %4575 = vmatprep.subr.bf16.mxu0 %v4320
    %4576 = vmatpush1.bf16.msra.mxu0 %v4319
    %4577 = vmatprep.subr.bf16.mxu0 %v4322
    %4578 = vmatpush1.bf16.msra.mxu0 %v4321
    %4579 = vmatprep.subr.bf16.mxu0 %v4324
    %4580 = vmatpush1.bf16.msra.mxu0 %v4323
    %4581 = vmatprep.subr.bf16.mxu0 %v4326
    %4582 = vmatpush1.bf16.msra.mxu0 %v4325
    %4583 = vmatprep.subr.bf16.mxu0 %v4328
    %4584 = vmatpush1.bf16.msra.mxu0 %v4327
    %4585 = vmatprep.subr.bf16.mxu0 %v4330
    %4586 = vmatpush1.bf16.msra.mxu0 %v4329
    %4587 = vmatprep.subr.bf16.mxu0 %v4332
    %4588 = vmatpush1.bf16.msra.mxu0 %v4331
    %4589 = vmatprep.subr.bf16.mxu0 %v4334
    %4590 = vmatpush1.bf16.msra.mxu0 %v4333
    %4591 = vmatprep.mubr.bf16.mxu0 %v3772
    %4592 = vmatmul.mubr.bf16.gmra.mrb[0].mxu0 %v3771
    %v4593 = vpop.f32.mrb[0].mxu0
    %v4594 = vadd.f32 %v3912, %v4593
    %v4595 = vpop.f32.mrb[0].mxu0
    %v4596 = vadd.f32 %v3916, %v4595
    %v4597 = vpop.f32.mrb[0].mxu0
    %v4598 = vadd.f32 %v3912, %v4597
    %v4599 = vpop.f32.mrb[0].mxu0
    %v4600 = vadd.f32 %v3916, %v4599
    %4601 = vdwg.mxu0
    %4602 = vmatprep.subr.bf16.mxu0 %v4336
    %4603 = vmatpush1.bf16.msra.mxu0 %v4335
    %4604 = vmatprep.subr.bf16.mxu0 %v4338
    %4605 = vmatpush1.bf16.msra.mxu0 %v4337
    %4606 = vmatprep.subr.bf16.mxu0 %v4340
    %4607 = vmatpush1.bf16.msra.mxu0 %v4339
    %4608 = vmatprep.subr.bf16.mxu0 %v4342
    %4609 = vmatpush1.bf16.msra.mxu0 %v4341
    %4610 = vmatprep.subr.bf16.mxu0 %v4344
    %4611 = vmatpush1.bf16.msra.mxu0 %v4343
    %4612 = vmatprep.subr.bf16.mxu0 %v4346
    %4613 = vmatpush1.bf16.msra.mxu0 %v4345
    %4614 = vmatprep.subr.bf16.mxu0 %v4348
    %4615 = vmatpush1.bf16.msra.mxu0 %v4347
    %4616 = vmatprep.subr.bf16.mxu0 %v4350
    %4617 = vmatpush1.bf16.msra.mxu0 %v4349
    %4618 = vmatprep.subr.bf16.mxu0 %v4352
    %4619 = vmatpush1.bf16.msra.mxu0 %v4351
    %4620 = vmatprep.subr.bf16.mxu0 %v4354
    %4621 = vmatpush1.bf16.msra.mxu0 %v4353
    %4622 = vmatprep.subr.bf16.mxu0 %v4356
    %4623 = vmatpush1.bf16.msra.mxu0 %v4355
    %4624 = vmatprep.subr.bf16.mxu0 %v4358
    %4625 = vmatpush1.bf16.msra.mxu0 %v4357
    %4626 = vmatprep.subr.bf16.mxu0 %v4360
    %4627 = vmatpush1.bf16.msra.mxu0 %v4359
    %4628 = vmatprep.subr.bf16.mxu0 %v4362
    %4629 = vmatpush1.bf16.msra.mxu0 %v4361
    %4630 = vmatprep.subr.bf16.mxu0 %v4364
    %4631 = vmatpush1.bf16.msra.mxu0 %v4363
    %4632 = vmatprep.subr.bf16.mxu0 %v4366
    %4633 = vmatpush1.bf16.msra.mxu0 %v4365
    %4634 = vmatprep.mubr.bf16.mxu0 %v3774
    %4635 = vmatmul.mubr.bf16.gmra.mrb[0].mxu0 %v3773
    %v4636 = vpop.f32.mrb[0].mxu0
    %v4637 = vadd.f32 %v4594, %v4636
    %v4638 = vpop.f32.mrb[0].mxu0
    %v4639 = vadd.f32 %v4596, %v4638
    %v4640 = vpop.f32.mrb[0].mxu0
    %v4641 = vadd.f32 %v4598, %v4640
    %v4642 = vpop.f32.mrb[0].mxu0
    %v4643 = vadd.f32 %v4600, %v4642
    %4644 = vdwg.mxu0
    %4645 = vmatprep.subr.bf16.mxu0 %v4368
    %4646 = vmatpush1.bf16.msra.mxu0 %v4367
    %4647 = vmatprep.subr.bf16.mxu0 %v4370
    %4648 = vmatpush1.bf16.msra.mxu0 %v4369
    %4649 = vmatprep.subr.bf16.mxu0 %v4372
    %4650 = vmatpush1.bf16.msra.mxu0 %v4371
    %4651 = vmatprep.subr.bf16.mxu0 %v4374
    %4652 = vmatpush1.bf16.msra.mxu0 %v4373
    %4653 = vmatprep.subr.bf16.mxu0 %v4376
    %4654 = vmatpush1.bf16.msra.mxu0 %v4375
    %4655 = vmatprep.subr.bf16.mxu0 %v4378
    %4656 = vmatpush1.bf16.msra.mxu0 %v4377
    %4657 = vmatprep.subr.bf16.mxu0 %v4380
    %4658 = vmatpush1.bf16.msra.mxu0 %v4379
    %4659 = vmatprep.subr.bf16.mxu0 %v4382
    %4660 = vmatpush1.bf16.msra.mxu0 %v4381
    %4661 = vmatprep.subr.bf16.mxu0 %v4384
    %4662 = vmatpush1.bf16.msra.mxu0 %v4383
    %4663 = vmatprep.subr.bf16.mxu0 %v4386
    %4664 = vmatpush1.bf16.msra.mxu0 %v4385
    %4665 = vmatprep.subr.bf16.mxu0 %v4388
    %4666 = vmatpush1.bf16.msra.mxu0 %v4387
    %4667 = vmatprep.subr.bf16.mxu0 %v4390
    %4668 = vmatpush1.bf16.msra.mxu0 %v4389
    %4669 = vmatprep.subr.bf16.mxu0 %v4392
    %4670 = vmatpush1.bf16.msra.mxu0 %v4391
    %4671 = vmatprep.subr.bf16.mxu0 %v4394
    %4672 = vmatpush1.bf16.msra.mxu0 %v4393
    %4673 = vmatprep.subr.bf16.mxu0 %v4396
    %4674 = vmatpush1.bf16.msra.mxu0 %v4395
    %4675 = vmatprep.subr.bf16.mxu0 %v4398
    %4676 = vmatpush1.bf16.msra.mxu0 %v4397
    %4677 = vmatprep.mubr.bf16.mxu0 %v3776
    %4678 = vmatmul.mubr.bf16.gmra.mrb[0].mxu0 %v3775
    %v4679 = vpop.f32.mrb[0].mxu0
    %v4680 = vadd.f32 %v4637, %v4679
    %v4681 = vpop.f32.mrb[0].mxu0
    %v4682 = vadd.f32 %v4639, %v4681
    %v4683 = vpop.f32.mrb[0].mxu0
    %v4684 = vadd.f32 %v4641, %v4683
    %v4685 = vpop.f32.mrb[0].mxu0
    %v4686 = vadd.f32 %v4643, %v4685
    %4687 = vdwg.mxu0
    %4688 = vmatprep.subr.bf16.mxu0 %v4400
    %4689 = vmatpush1.bf16.msra.mxu0 %v4399
    %4690 = vmatprep.subr.bf16.mxu0 %v4402
    %4691 = vmatpush1.bf16.msra.mxu0 %v4401
    %4692 = vmatprep.subr.bf16.mxu0 %v4404
    %4693 = vmatpush1.bf16.msra.mxu0 %v4403
    %4694 = vmatprep.subr.bf16.mxu0 %v4406
    %4695 = vmatpush1.bf16.msra.mxu0 %v4405
    %4696 = vmatprep.subr.bf16.mxu0 %v4408
    %4697 = vmatpush1.bf16.msra.mxu0 %v4407
    %4698 = vmatprep.subr.bf16.mxu0 %v4410
    %4699 = vmatpush1.bf16.msra.mxu0 %v4409
    %4700 = vmatprep.subr.bf16.mxu0 %v4412
    %4701 = vmatpush1.bf16.msra.mxu0 %v4411
    %4702 = vmatprep.subr.bf16.mxu0 %v4414
    %4703 = vmatpush1.bf16.msra.mxu0 %v4413
    %4704 = vmatprep.subr.bf16.mxu0 %v4416
    %4705 = vmatpush1.bf16.msra.mxu0 %v4415
    %4706 = vmatprep.subr.bf16.mxu0 %v4418
    %4707 = vmatpush1.bf16.msra.mxu0 %v4417
    %4708 = vmatprep.subr.bf16.mxu0 %v4420
    %4709 = vmatpush1.bf16.msra.mxu0 %v4419
    %4710 = vmatprep.subr.bf16.mxu0 %v4422
    %4711 = vmatpush1.bf16.msra.mxu0 %v4421
    %4712 = vmatprep.subr.bf16.mxu0 %v4424
    %4713 = vmatpush1.bf16.msra.mxu0 %v4423
    %4714 = vmatprep.subr.bf16.mxu0 %v4426
    %4715 = vmatpush1.bf16.msra.mxu0 %v4425
    %4716 = vmatprep.subr.bf16.mxu0 %v4428
    %4717 = vmatpush1.bf16.msra.mxu0 %v4427
    %4718 = vmatprep.subr.bf16.mxu0 %v4430
    %4719 = vmatpush1.bf16.msra.mxu0 %v4429
    %4720 = vmatprep.mubr.bf16.mxu0 %v3778
    %4721 = vmatmul.mubr.bf16.gmra.mrb[0].mxu0 %v3777
    %v4722 = vpop.f32.mrb[0].mxu0
    %v4723 = vadd.f32 %v4680, %v4722
    %v4724 = vpop.f32.mrb[0].mxu0
    %v4725 = vadd.f32 %v4682, %v4724
    %v4726 = vpop.f32.mrb[0].mxu0
    %v4727 = vadd.f32 %v4684, %v4726
    %v4728 = vpop.f32.mrb[0].mxu0
    %v4729 = vadd.f32 %v4686, %v4728
    %4730 = vdwg.mxu0
    %v4731 = vmul.f32 %v4723, 0.5
    %v4732 = vmul.f32 %v4725, 0.5
    %v4733 = vmul.f32 %v4727, 0.5
    %v4734 = vmul.f32 %v4729, 0.5
    %v4735 = vmul.f32 %v4723, 0.044715
    %v4736 = vmul.f32 %v4725, 0.044715
    %v4737 = vmul.f32 %v4727, 0.044715
    %v4738 = vmul.f32 %v4729, 0.044715
    %v4739 = vmul.f32 %v4735, %v4723
    %v4740 = vmul.f32 %v4736, %v4725
    %v4741 = vmul.f32 %v4737, %v4727
    %v4742 = vmul.f32 %v4738, %v4729
    %v4743 = vmul.f32 %v4739, %v4723
    %v4744 = vmul.f32 %v4740, %v4725
    %v4745 = vmul.f32 %v4741, %v4727
    %v4746 = vmul.f32 %v4742, %v4729
    %v4747 = vadd.f32 %v4723, %v4743
    %v4748 = vadd.f32 %v4725, %v4744
    %v4749 = vadd.f32 %v4727, %v4745
    %v4750 = vadd.f32 %v4729, %v4746
    %v4751 = vmul.f32 %v4747, 0.7978846
    %v4752 = vmul.f32 %v4748, 0.7978846
    %v4753 = vmul.f32 %v4749, 0.7978846
    %v4754 = vmul.f32 %v4750, 0.7978846
    %v4755 = vtanh.pop %v4751
    %v4756 = vtanh.pop %v4752
    %v4757 = vtanh.pop %v4753
    %v4758 = vtanh.pop %v4754
    %v4759 = vadd.f32 %v4755, 1.0
    %v4760 = vadd.f32 %v4756, 1.0
    %v4761 = vadd.f32 %v4757, 1.0
    %v4762 = vadd.f32 %v4758, 1.0
    %v4763 = vmul.f32 %v4731, %v4759
    %v4764 = vmul.f32 %v4732, %v4760
    %v4765 = vmul.f32 %v4733, %v4761
    %v4766 = vmul.f32 %v4734, %v4762
    %v4767 = vpack.c.bf16 %v4765, %v4763
    %v4768 = vpack.c.bf16 %v4766, %v4764
    %v4769 = vld [vmem:[#allocation9] sm:$0xf]
    %v4770 = vld [vmem:[#allocation9 + $0x4] sm:$0xf]
    %v4771 = vld [vmem:[#allocation9 + $0x8] sm:$0xf]
    %v4772 = vld [vmem:[#allocation9 + $0xc] sm:$0xf]
    %v4773 = vld [vmem:[#allocation9 + $0x10] sm:$0xf]
    %v4774 = vld [vmem:[#allocation9 + $0x14] sm:$0xf]
    %v4775 = vld [vmem:[#allocation9 + $0x18] sm:$0xf]
    %v4776 = vld [vmem:[#allocation9 + $0x1c] sm:$0xf]
    %v4777 = vld [vmem:[#allocation9 + $0x20] sm:$0xf]
    %v4778 = vld [vmem:[#allocation9 + $0x24] sm:$0xf]
    %v4779 = vld [vmem:[#allocation9 + $0x28] sm:$0xf]
    %v4780 = vld [vmem:[#allocation9 + $0x2c] sm:$0xf]
    %v4781 = vld [vmem:[#allocation9 + $0x30] sm:$0xf]
    %v4782 = vld [vmem:[#allocation9 + $0x34] sm:$0xf]
    %v4783 = vld [vmem:[#allocation9 + $0x38] sm:$0xf]
    %v4784 = vld [vmem:[#allocation9 + $0x3c] sm:$0xf]
    %v4785 = vld [vmem:[#allocation9 + $0x40] sm:$0xf]
    %v4786 = vld [vmem:[#allocation9 + $0x44] sm:$0xf]
    %v4787 = vld [vmem:[#allocation9 + $0x48] sm:$0xf]
    %v4788 = vld [vmem:[#allocation9 + $0x4c] sm:$0xf]
    %v4789 = vld [vmem:[#allocation9 + $0x50] sm:$0xf]
    %v4790 = vld [vmem:[#allocation9 + $0x54] sm:$0xf]
    %v4791 = vld [vmem:[#allocation9 + $0x58] sm:$0xf]
    %v4792 = vld [vmem:[#allocation9 + $0x5c] sm:$0xf]
    %v4793 = vld [vmem:[#allocation9 + $0x60] sm:$0xf]
    %v4794 = vld [vmem:[#allocation9 + $0x64] sm:$0xf]
    %v4795 = vld [vmem:[#allocation9 + $0x68] sm:$0xf]
    %v4796 = vld [vmem:[#allocation9 + $0x6c] sm:$0xf]
    %v4797 = vld [vmem:[#allocation9 + $0x70] sm:$0xf]
    %v4798 = vld [vmem:[#allocation9 + $0x74] sm:$0xf]
    %v4799 = vld [vmem:[#allocation9 + $0x78] sm:$0xf]
    %v4800 = vld [vmem:[#allocation9 + $0x7c] sm:$0xf]
    %v4801 = vld [vmem:[#allocation10] sm:$0x1]
    %v4803 = vlaneseq
    %v4804 = vshrl.u32 %v4803, 7
    %v4805 = vsub.s32 0, %v4804
    %v4806 = vrot.slane %v4801, %v4805
    %v4840 = vunpack.c.l.b16 %v4769
    %v4841 = vunpack.c.l.b16 %v4770
    %v4842 = vunpack.c.l.b16 %v4771
    %v4843 = vunpack.c.l.b16 %v4772
    %v4844 = vunpack.c.l.b16 %v4773
    %v4845 = vunpack.c.l.b16 %v4774
    %v4846 = vunpack.c.l.b16 %v4775
    %v4847 = vunpack.c.l.b16 %v4776
    %v4848 = vunpack.c.l.b16 %v4777
    %v4849 = vunpack.c.l.b16 %v4778
    %v4850 = vunpack.c.l.b16 %v4779
    %v4851 = vunpack.c.l.b16 %v4780
    %v4852 = vunpack.c.l.b16 %v4781
    %v4853 = vunpack.c.l.b16 %v4782
    %v4854 = vunpack.c.l.b16 %v4783
    %v4855 = vunpack.c.l.b16 %v4784
    %v4856 = vunpack.c.l.b16 %v4785
    %v4857 = vunpack.c.l.b16 %v4786
    %v4858 = vunpack.c.l.b16 %v4787
    %v4859 = vunpack.c.l.b16 %v4788
    %v4860 = vunpack.c.l.b16 %v4789
    %v4861 = vunpack.c.l.b16 %v4790
    %v4862 = vunpack.c.l.b16 %v4791
    %v4863 = vunpack.c.l.b16 %v4792
    %v4864 = vunpack.c.l.b16 %v4793
    %v4865 = vunpack.c.l.b16 %v4794
    %v4866 = vunpack.c.l.b16 %v4795
    %v4867 = vunpack.c.l.b16 %v4796
    %v4868 = vunpack.c.l.b16 %v4797
    %v4869 = vunpack.c.l.b16 %v4798
    %v4870 = vunpack.c.l.b16 %v4799
    %v4871 = vunpack.c.l.b16 %v4800
    %v4872 = vpack.c.b16 %v4841, %v4840
    %v4873 = vpack.c.b16 %v4843, %v4842
    %v4874 = vpack.c.b16 %v4845, %v4844
    %v4875 = vpack.c.b16 %v4847, %v4846
    %v4876 = vpack.c.b16 %v4849, %v4848
    %v4877 = vpack.c.b16 %v4851, %v4850
    %v4878 = vpack.c.b16 %v4853, %v4852
    %v4879 = vpack.c.b16 %v4855, %v4854
    %v4880 = vpack.c.b16 %v4857, %v4856
    %v4881 = vpack.c.b16 %v4859, %v4858
    %v4882 = vpack.c.b16 %v4861, %v4860
    %v4883 = vpack.c.b16 %v4863, %v4862
    %v4884 = vpack.c.b16 %v4865, %v4864
    %v4885 = vpack.c.b16 %v4867, %v4866
    %v4886 = vpack.c.b16 %v4869, %v4868
    %v4887 = vpack.c.b16 %v4871, %v4870
    %4904 = vmatprep.subr.bf16.mxu0 0
    %4905 = vmatpush1.bf16.msra.mxu0 %v4872
    %4906 = vmatprep.subr.bf16.mxu0 0
    %4907 = vmatpush1.bf16.msra.mxu0 %v4873
    %4908 = vmatprep.subr.bf16.mxu0 0
    %4909 = vmatpush1.bf16.msra.mxu0 %v4874
    %4910 = vmatprep.subr.bf16.mxu0 0
    %4911 = vmatpush1.bf16.msra.mxu0 %v4875
    %4912 = vmatprep.subr.bf16.mxu0 0
    %4913 = vmatpush1.bf16.msra.mxu0 %v4876
    %4914 = vmatprep.subr.bf16.mxu0 0
    %4915 = vmatpush1.bf16.msra.mxu0 %v4877
    %4916 = vmatprep.subr.bf16.mxu0 0
    %4917 = vmatpush1.bf16.msra.mxu0 %v4878
    %4918 = vmatprep.subr.bf16.mxu0 0
    %4919 = vmatpush1.bf16.msra.mxu0 %v4879
    %4920 = vmatprep.subr.bf16.mxu0 0
    %4921 = vmatpush1.bf16.msra.mxu0 %v4880
    %4922 = vmatprep.subr.bf16.mxu0 0
    %4923 = vmatpush1.bf16.msra.mxu0 %v4881
    %4924 = vmatprep.subr.bf16.mxu0 0
    %4925 = vmatpush1.bf16.msra.mxu0 %v4882
    %4926 = vmatprep.subr.bf16.mxu0 0
    %4927 = vmatpush1.bf16.msra.mxu0 %v4883
    %4928 = vmatprep.subr.bf16.mxu0 0
    %4929 = vmatpush1.bf16.msra.mxu0 %v4884
    %4930 = vmatprep.subr.bf16.mxu0 0
    %4931 = vmatpush1.bf16.msra.mxu0 %v4885
    %4932 = vmatprep.subr.bf16.mxu0 0
    %4933 = vmatpush1.bf16.msra.mxu0 %v4886
    %4934 = vmatprep.subr.bf16.mxu0 0
    %4935 = vmatpush1.bf16.msra.mxu0 %v4887
    %4936 = vmatprep.mubr.bf16.mxu0 %v4768
    %4937 = vmatmul.mubr.bf16.gmra.mrb[0].mxu0 %v4767
    %v4938 = vpop.f32.mrb[0].mxu0
    %v4939 = vadd.f32 %v4806, %v4938
    %v4940 = vpop.f32.mrb[0].mxu0
    %v4941 = vpop.f32.mrb[0].mxu0
    %v4942 = vadd.f32 %v4806, %v4941
    %v4943 = vpop.f32.mrb[0].mxu0
    %4944 = vdwg.mxu0
    %v4945 = vmul.f32 %v4939, 0.5
    %v4946 = vmul.f32 %v4942, 0.5
    %v4947 = vmul.f32 %v4939, 0.044715
    %v4948 = vmul.f32 %v4942, 0.044715
    %v4949 = vmul.f32 %v4947, %v4939
    %v4950 = vmul.f32 %v4948, %v4942
    %v4951 = vmul.f32 %v4949, %v4939
    %v4952 = vmul.f32 %v4950, %v4942
    %v4953 = vadd.f32 %v4939, %v4951
    %v4954 = vadd.f32 %v4942, %v4952
    %v4955 = vmul.f32 %v4953, 0.7978846
    %v4956 = vmul.f32 %v4954, 0.7978846
    %v4957 = vtanh.pop %v4955
    %v4958 = vtanh.pop %v4956
    %v4959 = vadd.f32 %v4957, 1.0
    %v4960 = vadd.f32 %v4958, 1.0
    %v4961 = vmul.f32 %v4945, %v4959
    %v4962 = vmul.f32 %v4946, %v4960
    %v4963 = vpack.c.bf16 %v4962, %v4961
    %v4964 = vld [vmem:[#allocation12] sm:$0xf]
    %v4965 = vld [vmem:[#allocation12 + $0x4] sm:$0xf]
    %v4966 = vld [vmem:[#allocation12 + $0x8] sm:$0xf]
    %v4967 = vld [vmem:[#allocation12 + $0xc] sm:$0xf]
    %v4968 = vld [vmem:[#allocation12 + $0x10] sm:$0xf]
    %v4969 = vld [vmem:[#allocation12 + $0x14] sm:$0xf]
    %v4970 = vld [vmem:[#allocation12 + $0x18] sm:$0xf]
    %v4971 = vld [vmem:[#allocation12 + $0x1c] sm:$0xf]
    %v4972 = vld [vmem:[#allocation12 + $0x20] sm:$0xf]
    %v4973 = vld [vmem:[#allocation12 + $0x24] sm:$0xf]
    %v4974 = vld [vmem:[#allocation12 + $0x28] sm:$0xf]
    %v4975 = vld [vmem:[#allocation12 + $0x2c] sm:$0xf]
    %v4976 = vld [vmem:[#allocation12 + $0x30] sm:$0xf]
    %v4977 = vld [vmem:[#allocation12 + $0x34] sm:$0xf]
    %v4978 = vld [vmem:[#allocation12 + $0x38] sm:$0xf]
    %v4979 = vld [vmem:[#allocation12 + $0x3c] sm:$0xf]
    %v4980 = vld [vmem:[#allocation13] sm:$0x1]
    %v4982 = vlaneseq
    %v4983 = vshrl.u32 %v4982, 7
    %v4984 = vsub.s32 0, %v4983
    %v4985 = vrot.slane %v4980, %v4984
    %v5003 = vunpack.c.l.b16 %v4964
    %v5004 = vunpack.c.l.b16 %v4965
    %v5005 = vunpack.c.l.b16 %v4966
    %v5006 = vunpack.c.l.b16 %v4967
    %v5007 = vunpack.c.l.b16 %v4968
    %v5008 = vunpack.c.l.b16 %v4969
    %v5009 = vunpack.c.l.b16 %v4970
    %v5010 = vunpack.c.l.b16 %v4971
    %v5011 = vunpack.c.l.b16 %v4972
    %v5012 = vunpack.c.l.b16 %v4973
    %v5013 = vunpack.c.l.b16 %v4974
    %v5014 = vunpack.c.l.b16 %v4975
    %v5015 = vunpack.c.l.b16 %v4976
    %v5016 = vunpack.c.l.b16 %v4977
    %v5017 = vunpack.c.l.b16 %v4978
    %v5018 = vunpack.c.l.b16 %v4979
    %v5019 = vpack.c.b16 %v5004, %v5003
    %v5020 = vpack.c.b16 %v5006, %v5005
    %v5021 = vpack.c.b16 %v5008, %v5007
    %v5022 = vpack.c.b16 %v5010, %v5009
    %v5023 = vpack.c.b16 %v5012, %v5011
    %v5024 = vpack.c.b16 %v5014, %v5013
    %v5025 = vpack.c.b16 %v5016, %v5015
    %v5026 = vpack.c.b16 %v5018, %v5017
    %5035 = vmatprep.subr.bf16.mxu0 0
    %5036 = vmatpush1.bf16.msra.mxu0 %v5019
    %5037 = vmatprep.subr.bf16.mxu0 0
    %5038 = vmatpush1.bf16.msra.mxu0 %v5020
    %5039 = vmatprep.subr.bf16.mxu0 0
    %5040 = vmatpush1.bf16.msra.mxu0 %v5021
    %5041 = vmatprep.subr.bf16.mxu0 0
    %5042 = vmatpush1.bf16.msra.mxu0 %v5022
    %5043 = vmatprep.subr.bf16.mxu0 0
    %5044 = vmatpush1.bf16.msra.mxu0 %v5023
    %5045 = vmatprep.subr.bf16.mxu0 0
    %5046 = vmatpush1.bf16.msra.mxu0 %v5024
    %5047 = vmatprep.subr.bf16.mxu0 0
    %5048 = vmatpush1.bf16.msra.mxu0 %v5025
    %5049 = vmatprep.subr.bf16.mxu0 0
    %5050 = vmatpush1.bf16.msra.mxu0 %v5026
    %5051 = vmatprep.subr.bf16.mxu0 0
    %5052 = vmatpush1.bf16.msra.mxu0 0
    %5053 = vmatprep.subr.bf16.mxu0 0
    %5054 = vmatpush1.bf16.msra.mxu0 0
    %5055 = vmatprep.subr.bf16.mxu0 0
    %5056 = vmatpush1.bf16.msra.mxu0 0
    %5057 = vmatprep.subr.bf16.mxu0 0
    %5058 = vmatpush1.bf16.msra.mxu0 0
    %5059 = vmatprep.subr.bf16.mxu0 0
    %5060 = vmatpush1.bf16.msra.mxu0 0
    %5061 = vmatprep.subr.bf16.mxu0 0
    %5062 = vmatpush1.bf16.msra.mxu0 0
    %5063 = vmatprep.subr.bf16.mxu0 0
    %5064 = vmatpush1.bf16.msra.mxu0 0
    %5065 = vmatprep.subr.bf16.mxu0 0
    %5066 = vmatpush1.bf16.msra.mxu0 0
    %5067 = vmatprep.mubr.bf16.mxu0 0
    %5068 = vmatmul.mubr.bf16.gmra.mrb[0].mxu0 %v4963
    %v5069 = vpop.f32.mrb[0].mxu0
    %v5070 = vadd.f32 %v4985, %v5069
    %v5071 = vpop.f32.mrb[0].mxu0
    %v5072 = vpop.f32.mrb[0].mxu0
    %v5073 = vadd.f32 %v4985, %v5072
    %v5074 = vpop.f32.mrb[0].mxu0
    %5075 = vdwg.mxu0
    %v5076 = vmul.f32 %v5070, 0.5
    %v5077 = vmul.f32 %v5073, 0.5
    %v5078 = vmul.f32 %v5070, 0.044715
    %v5079 = vmul.f32 %v5073, 0.044715
    %v5080 = vmul.f32 %v5078, %v5070
    %v5081 = vmul.f32 %v5079, %v5073
    %v5082 = vmul.f32 %v5080, %v5070
    %v5083 = vmul.f32 %v5081, %v5073
    %v5084 = vadd.f32 %v5070, %v5082
    %v5085 = vadd.f32 %v5073, %v5083
    %v5086 = vmul.f32 %v5084, 0.7978846
    %v5087 = vmul.f32 %v5085, 0.7978846
    %v5088 = vtanh.pop %v5086
    %v5089 = vtanh.pop %v5087
    %v5090 = vadd.f32 %v5088, 1.0
    %v5091 = vadd.f32 %v5089, 1.0
    %v5092 = vmul.f32 %v5076, %v5090
    %v5093 = vmul.f32 %v5077, %v5091
    %v5094 = vpack.c.bf16 %v5093, %v5092
    %v5095 = vld [vmem:[#allocation15] sm:$0xf]
    %v5096 = vld [vmem:[#allocation15 + $0x4] sm:$0xf]
    %v5097 = vld [vmem:[#allocation15 + $0x8] sm:$0xf]
    %v5098 = vld [vmem:[#allocation15 + $0xc] sm:$0xf]
    %v5099 = vld [vmem:[#allocation15 + $0x10] sm:$0xf]
    %v5100 = vld [vmem:[#allocation15 + $0x14] sm:$0xf]
    %v5101 = vld [vmem:[#allocation15 + $0x18] sm:$0xf]
    %v5102 = vld [vmem:[#allocation15 + $0x1c] sm:$0xf]
    %v5103 = vld [vmem:[#allocation15 + $0x20] sm:$0xf]
    %v5104 = vld [vmem:[#allocation15 + $0x24] sm:$0xf]
    %v5105 = vld [vmem:[#allocation15 + $0x28] sm:$0xf]
    %v5106 = vld [vmem:[#allocation15 + $0x2c] sm:$0xf]
    %v5107 = vld [vmem:[#allocation15 + $0x30] sm:$0xf]
    %v5108 = vld [vmem:[#allocation15 + $0x34] sm:$0xf]
    %v5109 = vld [vmem:[#allocation15 + $0x38] sm:$0xf]
    %v5110 = vld [vmem:[#allocation15 + $0x3c] sm:$0xf]
    %v5111 = vld [vmem:[#allocation16] sm:$0x1]
    %v5113 = vlaneseq
    %v5114 = vshrl.u32 %v5113, 7
    %v5115 = vsub.s32 0, %v5114
    %v5116 = vrot.slane %v5111, %v5115
    %v5134 = vunpack.c.l.b16 %v5095
    %v5135 = vunpack.c.l.b16 %v5096
    %v5136 = vunpack.c.l.b16 %v5097
    %v5137 = vunpack.c.l.b16 %v5098
    %v5138 = vunpack.c.l.b16 %v5099
    %v5139 = vunpack.c.l.b16 %v5100
    %v5140 = vunpack.c.l.b16 %v5101
    %v5141 = vunpack.c.l.b16 %v5102
    %v5142 = vunpack.c.l.b16 %v5103
    %v5143 = vunpack.c.l.b16 %v5104
    %v5144 = vunpack.c.l.b16 %v5105
    %v5145 = vunpack.c.l.b16 %v5106
    %v5146 = vunpack.c.l.b16 %v5107
    %v5147 = vunpack.c.l.b16 %v5108
    %v5148 = vunpack.c.l.b16 %v5109
    %v5149 = vunpack.c.l.b16 %v5110
    %v5150 = vpack.c.b16 %v5135, %v5134
    %v5151 = vpack.c.b16 %v5137, %v5136
    %v5152 = vpack.c.b16 %v5139, %v5138
    %v5153 = vpack.c.b16 %v5141, %v5140
    %v5154 = vpack.c.b16 %v5143, %v5142
    %v5155 = vpack.c.b16 %v5145, %v5144
    %v5156 = vpack.c.b16 %v5147, %v5146
    %v5157 = vpack.c.b16 %v5149, %v5148
    %5166 = vmatprep.subr.bf16.mxu0 0
    %5167 = vmatpush1.bf16.msra.mxu0 %v5150
    %5168 = vmatprep.subr.bf16.mxu0 0
    %5169 = vmatpush1.bf16.msra.mxu0 %v5151
    %5170 = vmatprep.subr.bf16.mxu0 0
    %5171 = vmatpush1.bf16.msra.mxu0 %v5152
    %5172 = vmatprep.subr.bf16.mxu0 0
    %5173 = vmatpush1.bf16.msra.mxu0 %v5153
    %5174 = vmatprep.subr.bf16.mxu0 0
    %5175 = vmatpush1.bf16.msra.mxu0 %v5154
    %5176 = vmatprep.subr.bf16.mxu0 0
    %5177 = vmatpush1.bf16.msra.mxu0 %v5155
    %5178 = vmatprep.subr.bf16.mxu0 0
    %5179 = vmatpush1.bf16.msra.mxu0 %v5156
    %5180 = vmatprep.subr.bf16.mxu0 0
    %5181 = vmatpush1.bf16.msra.mxu0 %v5157
    %5182 = vmatprep.subr.bf16.mxu0 0
    %5183 = vmatpush1.bf16.msra.mxu0 0
    %5184 = vmatprep.subr.bf16.mxu0 0
    %5185 = vmatpush1.bf16.msra.mxu0 0
    %5186 = vmatprep.subr.bf16.mxu0 0
    %5187 = vmatpush1.bf16.msra.mxu0 0
    %5188 = vmatprep.subr.bf16.mxu0 0
    %5189 = vmatpush1.bf16.msra.mxu0 0
    %5190 = vmatprep.subr.bf16.mxu0 0
    %5191 = vmatpush1.bf16.msra.mxu0 0
    %5192 = vmatprep.subr.bf16.mxu0 0
    %5193 = vmatpush1.bf16.msra.mxu0 0
    %5194 = vmatprep.subr.bf16.mxu0 0
    %5195 = vmatpush1.bf16.msra.mxu0 0
    %5196 = vmatprep.subr.bf16.mxu0 0
    %5197 = vmatpush1.bf16.msra.mxu0 0
    %5198 = vmatprep.mubr.bf16.mxu0 0
    %5199 = vmatmul.mubr.bf16.gmra.mrb[0].mxu0 %v5094
    %v5200 = vpop.f32.mrb[0].mxu0
    %v5201 = vadd.f32 %v5116, %v5200
    %v5202 = vpop.f32.mrb[0].mxu0
    %v5203 = vpop.f32.mrb[0].mxu0
    %v5204 = vadd.f32 %v5116, %v5203
    %v5205 = vpop.f32.mrb[0].mxu0
    %5206 = vdwg.mxu0
    %5207 = vmax.xlane.f32.xlu0 %v5201
    %v5208 = vpop.xlane.xlu0 %5207
    %5209 = vmax.xlane.f32.xlu0 %v5204
    %v5210 = vpop.xlane.xlu0 %5209
    %v5211 = vsub.f32 %v5201, %v5208
    %v5212 = vsub.f32 %v5204, %v5210
    %v5213 = vmul.f32 %v5211, 1.442695
    %v5214 = vpow.pop %v5213
    %v5215 = vmul.f32 %v5212, 1.442695
    %v5216 = vpow.pop %v5215
    %5217 = vadd.xlane.f32.xlu0 %v5214
    %v5218 = vpop.xlane.xlu0 %5217
    %5219 = vadd.xlane.f32.xlu0 %v5216
    %v5220 = vpop.xlane.xlu0 %5219
    %v5221 = vrcp.pop %v5218
    %v5222 = vrcp.pop %v5220
    %v5223 = vmul.f32 %v5214, %v5221
    %v5224 = vmul.f32 %v5216, %v5222
    %5225 = vst [vmem:[%s11] sm:$0xff] %v5223
    %5226 = vst [vmem:[%s11 + $0x8] sm:$0xff] %v5224
    // Predicated region
    $region86: #{naive_linear_forward.1} parent=1 // pred_check
      _
    $region87: #{naive_linear_forward.1} parent=1 // pred_check_branch
      %5228 = sbr.rel (0) target = $region89
    $region88: #{naive_linear_forward.1} parent=1 // pred_region
      _
    $region89: #{naive_linear_forward.1} parent=1 // pred_fallthru
      _
    // Predicated region
    $region90: #{naive_linear_forward.1} parent=1 // pred_check
      _
    $region91: #{naive_linear_forward.1} parent=1 // pred_check_branch
      %5230 = sbr.rel (0) target = $region93
    $region92: #{naive_linear_forward.1} parent=1 // pred_region
      _
    $region93: #{naive_linear_forward.1} parent=1 // pred_fallthru
      _
    %5231 = vsyncpa [#allocation3], 1
    %5232 = vsyncpa [#allocation5], 1
    %5233 = vsyncpa [#allocation8], 1
    %5234 = vsyncpa [#allocation11], 1
    %5235 = vsyncpa [#allocation14], 1
    %5236 = vsyncpa [#allocation17], 1

</llo_original>
